<compile_context>
chip_gen: v6e
topology: v6e:2x2x1
jax: 0.10.0
libtpu: 0.0.40
codegen_flags: <defaults>
</compile_context>

<pallas_src>
import functools

import numpy as np
import jax
import jax.numpy as jnp
from jax import lax
from jax.experimental import pallas as pl
from jax.experimental.pallas import tpu as pltpu


# ---------------------------------------------------------------------------
# VMEM accounting helpers
# ---------------------------------------------------------------------------
def _padded_bytes(shape, dtype):
    """Bytes of a VMEM-resident array with (sublane, lane) tile padding."""
    item = jnp.dtype(dtype).itemsize
    dims = list(shape)
    if len(dims) >= 1:
        dims[-1] = -(-dims[-1] // 128) * 128
    if len(dims) >= 2:
        sub = {4: 8, 2: 16, 1: 32}.get(item, 8)
        dims[-2] = -(-dims[-2] // sub) * sub
    n = 1
    for v in dims:
        n *= int(v)
    return n * item


def _vmem_budget_bytes():
    """Generation-aware scoped-VMEM target (v7x: 64 MiB phys, v5e/v6e: 128 MiB)."""
    phys = 64 * 1024 * 1024          # conservative default == v7x per-TC VMEM
    try:
        info = pltpu.get_tpu_info()
        cap = getattr(info, "vmem_capacity_bytes", None)
        if cap:
            phys = int(cap)
    except Exception:
        pass
    return max(16 * 1024 * 1024, min(int(phys * 0.70), 100 * 1024 * 1024))


# ---------------------------------------------------------------------------
# Fused kernel: lepe conv + head-major attention + per-head projection
# ---------------------------------------------------------------------------
def _fused_attn_kernel(scale_ref, q_ref, k_ref, v_ref, *refs, ww, use_mask):
    # q_ref/k_ref : (Bt, heads, N, d) bf16   head-major window blocks
    # v_ref       : (Bt, heads, N, d) f32    (f32 kept for the exact lepe conv)
    # grow/gcol   : (N, 1) / (1, N) f32      per-window group labels (masked layers)
    # tw_ref      : (9, heads, N, d) f32     merged (tap validity x depthwise weight)
    # wpt_ref     : (heads, d, C)  bf16      proj weight^T split by input-channel head
    # beff_ref    : (1, C) f32               proj bias + projected conv bias
    # o_ref       : (Bt, N, C)
    if use_mask:
        grow_ref, gcol_ref, tw_ref, wpt_ref, beff_ref, o_ref = refs
    else:
        tw_ref, wpt_ref, beff_ref, o_ref = refs

    Bt, heads, N, d = q_ref.shape
    C = heads * d
    scale = scale_ref[0, 0]

    # ---- attention: softmax in f32, MXU inputs bf16, f32 accumulation ------
    q3 = q_ref[...].reshape(Bt * heads, N, d)
    k3 = k_ref[...].reshape(Bt * heads, N, d)
    v4 = v_ref[...]                                            # (Bt, heads, N, d) f32
    v3 = v4.astype(jnp.bfloat16).reshape(Bt * heads, N, d)

    s = jnp.einsum('bnd,bmd->bnm', q3, k3,
                   preferred_element_type=jnp.float32)          # (Bt*heads, N, N)
    s = s * scale
    if use_mask:
        # Rebuild the (N, N) shifted-window mask from O(N) group labels.
        mask = jnp.where(grow_ref[...] != gcol_ref[...],
                         jnp.float32(-100.0), jnp.float32(0.0))
        s = s + mask
    s = s - jnp.max(s, axis=-1, keepdims=True)
    p = jnp.exp(s)
    denom = jnp.sum(p, axis=-1, keepdims=True)
    attn = p * pl.reciprocal(denom, approx=True)
    out4 = jnp.einsum('bnm,bmd->bnd', attn.astype(jnp.bfloat16), v3,
                      preferred_element_type=jnp.float32).reshape(Bt, heads, N, d)

    # ---- lepe: depthwise 3x3 conv as 8 XLU sublane rolls + merged-tap FMAs -
    tw = tw_ref[...]                                           # (9, heads, N, d)
    lepe = v4 * tw[4]                                          # center tap (dh=0, dw=0)
    for dh in (-1, 0, 1):
        for dw in (-1, 0, 1):
            if dh == 0 and dw == 0:
                continue
            kidx = (dh + 1) * 3 + (dw + 1)
            off = dh * ww + dw                                 # out[n] needs v[n + off]
            # pltpu.roll(x, s)[n] = x[(n - s) % N]  ->  s = (-off) % N gives v[n + off];
            # wrap-around taps carry zero weight in tw, so the rotate is exact.
            shifted = pltpu.roll(v4, (-off) % N, axis=2)
            lepe = lepe + shifted * tw[kidx]

    # ---- projection: per-head accumulate  y += x_h @ W^T[h*d:(h+1)*d, :] ---
    # TODO(synk): profile vs a single concat + (Bt*N, C) @ (C, C) matmul when
    # head_dim is a multiple of 128 (no lane relayout in that regime).
    x4 = out4 + lepe
    wpt = wpt_ref[...]                                         # (heads, d, C) bf16
    y = jnp.zeros((Bt * N, C), jnp.float32)
    for h in range(heads):
        xh = x4[:, h].reshape(Bt * N, d).astype(jnp.bfloat16)
        y = y + jnp.dot(xh, wpt[h], preferred_element_type=jnp.float32)
    y = y + beff_ref[...]
    o_ref[...] = y.reshape(Bt, N, C).astype(o_ref.dtype)


# ---------------------------------------------------------------------------
# Module wrapper
# ---------------------------------------------------------------------------
class AttentionPallas:
    def __init__(self, dim, resolution, stripeWidth, attention_mode, num_heads,
                 currentDepth, key, attn_drop_rate=0.0, proj_drop_rate=0.0):
        assert dim % num_heads == 0
        self.dim = dim
        self.resolution = resolution
        self.stripeWidth = stripeWidth
        self.attention_mode = attention_mode
        self.num_heads = num_heads
        self.head_dim = dim // num_heads
        self.currentDepth = currentDepth
        window_sizes = {-1: (resolution, resolution),
                        0: (resolution, stripeWidth),
                        1: (stripeWidth, resolution)}
        self.winH, self.winW = window_sizes[attention_mode]

        k1, k2, k3, k4 = jax.random.split(key, 4)
        # learnable scalar scale, initialized to head_dim ** -0.5
        self.scale = jnp.full((1, 1), self.head_dim ** (-0.5), dtype=jnp.float32)
        # proj = nn.Linear(dim, dim)
        bound = 1.0 / np.sqrt(dim)
        self.proj_w = jax.random.uniform(k1, (dim, dim), jnp.float32, -bound, bound)
        self.proj_b = jax.random.uniform(k2, (1, dim), jnp.float32, -bound, bound)
        # get_v = nn.Conv2d(dim, dim, 3, padding=1, groups=dim); torch weight (dim,1,3,3)
        # stored here as HWC taps (3, 3, dim); conv_w[kh,kw,c] == torch_w[c,0,kh,kw]
        cbound = 1.0 / np.sqrt(1 * 3 * 3)
        self.conv_w = jax.random.uniform(k3, (3, 3, dim), jnp.float32, -cbound, cbound)
        self.conv_b = jax.random.uniform(k4, (1, dim), jnp.float32, -cbound, cbound)

        # ---- kernel-side constants / reformatted parameters (built once) ----
        N = self.winH * self.winW
        tap = self._build_tap_mask()                            # np (N, 9)
        w9 = np.asarray(self.conv_w).reshape(9, dim)            # (9, C)
        # merged taps: tw[k, h, n, :] = tap_validity[n, k] * depthwise_weight[k, head h]
        tw = tap.T[:, :, None] * w9[:, None, :]                 # (9, N, C)
        tw = tw.reshape(9, N, num_heads, self.head_dim).transpose(0, 2, 1, 3)
        self.tap_weights = jnp.asarray(tw, dtype=jnp.float32)   # (9, heads, N, d)
        # proj weight^T split by input-channel head -> leading-index slices in kernel
        self.proj_wT_heads = jnp.asarray(self.proj_w.T).reshape(
            num_heads, self.head_dim, dim).astype(jnp.bfloat16)  # (heads, d, C)
        # conv bias passes linearly through the projection -> fold it in once
        self.bias_eff = (self.conv_b @ self.proj_w.T + self.proj_b).astype(jnp.float32)

        self.use_mask = (currentDepth % 2 == 1) and (attention_mode in (0, 1))
        if self.use_mask:
            groups = self._build_window_groups()                # np (nW, N)
            self.window_groups = jnp.asarray(groups, jnp.float32)
            self.group_row = jnp.asarray(groups[:, :, None], jnp.float32)  # (nW, N, 1)
            self.group_col = jnp.asarray(groups[:, None, :], jnp.float32)  # (nW, 1, N)
        else:
            self.window_groups = None
            self.group_row = None
            self.group_col = None

        self._vmem_limit_bytes = _vmem_budget_bytes()
        # TODO(synk): attn_drop / proj_drop are identity (inference semantics).
        # TODO(synk): attention_mode=-1 with large resolution needs a KV-blocked
        # (flash-style) online-softmax inner loop to fit v7x's 64 MiB VMEM.

    # ---- static helpers ----------------------------------------------------
    def _build_tap_mask(self):
        wh, ww = self.winH, self.winW
        N = wh * ww
        tm = np.zeros((N, 9), np.float32)
        for dh in (-1, 0, 1):
            for dw in (-1, 0, 1):
                kidx = (dh + 1) * 3 + (dw + 1)
                for i in range(wh):
                    for j in range(ww):
                        if 0 <= i + dh < wh and 0 <= j + dw < ww:
                            tm[i * ww + j, kidx] = 1.0
        return tm

    def _build_window_groups(self):
        # Per-window group labels (0/1/2); mask[n,m] = -100 where labels differ.
        res, sw = self.resolution, self.stripeWidth
        wh, ww = self.winH, self.winW
        shift = sw // 2
        img = np.zeros((res, res), np.float32)
        slices = (slice(0, res - sw), slice(res - sw, res - shift),
                  slice(res - shift, res))
        cnt = 0
        for sl in slices:
            if self.attention_mode == 0:
                img[:, sl] = cnt            # vertical stripes mask columns
            else:
                img[sl, :] = cnt            # horizontal stripes mask rows
            cnt += 1
        groups = (img.reshape(res // wh, wh, res // ww, ww)
                     .transpose(0, 2, 1, 3)
                     .reshape(-1, wh * ww))
        return groups                        # (nW, N)

    # ---- VMEM budgeting ----------------------------------------------------
    def _estimate_vmem_bytes(self, bt):
        N = self.winH * self.winW
        C, H, d = self.dim, self.num_heads, self.head_dim
        f32, bf16 = jnp.float32, jnp.bfloat16
        blocks = 2 * (                                        # double-buffered blocks
            2 * _padded_bytes((bt, H, N, d), bf16)            # q, k
            + _padded_bytes((bt, H, N, d), f32)               # v
            + _padded_bytes((bt, N, C), f32)                  # out
            + _padded_bytes((9, H, N, d), f32)                # merged lepe taps
            + _padded_bytes((H, d, C), bf16)                  # proj weight
            + _padded_bytes((1, C), f32)                      # fused bias
            + ((_padded_bytes((N, 1), f32) + _padded_bytes((1, N), f32))
               if self.use_mask else 0))
        temps = (3 * _padded_bytes((bt * H, N, N), f32)       # scores / exp / probs
                 + 6 * _padded_bytes((bt * H, N, d), f32)     # out, lepe, rolls, bf16 casts
                 + 2 * _padded_bytes((bt * N, C), f32)        # proj accumulator + store cast
                 + _padded_bytes((N, N), f32))                # in-kernel mask
        return int(1.25 * (blocks + temps))

    def _pick_batch_tile(self, B, nW, budget):
        cap = B
        if nW < 2 and B >= 2:
            cap = B // 2       # keep >=2 steps on a parallel grid axis (v7x dual-TC)
        bt = max(1, cap)
        while bt > 1 and (B % bt != 0 or self._estimate_vmem_bytes(bt) > budget):
            bt -= 1
        return bt

    # ---- layout helpers ----------------------------------------------------
    def _window_partition_heads(self, x):
        # (B, L, C) -> (B, nW, heads, N, d); windows (wi, wj), tokens row-major,
        # channels split head-major (matches torch seq2CSwin).
        B, L, C = x.shape
        res, wh, ww = self.resolution, self.winH, self.winW
        h, d = self.num_heads, self.head_dim
        x = x.reshape(B, res // wh, wh, res // ww, ww, h, d)
        x = x.transpose(0, 1, 3, 5, 2, 4, 6)
        return x.reshape(B, (res // wh) * (res // ww), h, wh * ww, d)

    # used only by the pure-JAX reference
    def _seq2cswin(self, x):
        B, L, C = x.shape
        res, wh, ww = self.resolution, self.winH, self.winW
        heads, d = self.num_heads, self.head_dim
        x = x.reshape(B, res, res, C)
        x = x.reshape(B, res // wh, wh, res // ww, ww, C)
        x = x.transpose(0, 1, 3, 2, 4, 5).reshape(-1, wh * ww, C)
        x = x.reshape(-1, wh * ww, heads, d).transpose(0, 2, 1, 3)
        return x

    # ---- forward -----------------------------------------------------------
    def __call__(self, qkv):
        q, k, v = qkv[0], qkv[1], qkv[2]
        B, L, C = q.shape
        res, wh, ww = self.resolution, self.winH, self.winW
        assert L == res * res, 'flatten img_tokens has wrong size'
        heads, d = self.num_heads, self.head_dim
        N = wh * ww
        nW = (res // wh) * (res // ww)

        # q/k only ever feed the MXU -> cast bf16 here (halves their DMA + VMEM);
        # v stays f32 for the exact lepe conv.
        qw = self._window_partition_heads(q).astype(jnp.bfloat16)
        kw = self._window_partition_heads(k).astype(jnp.bfloat16)
        vw = self._window_partition_heads(v)                      # f32

        budget = self._vmem_limit_bytes
        Bt = self._pick_batch_tile(B, nW, budget)
        Bb = B // Bt
        # Window index on the slow grid axis: per-window constants keep the same
        # block index across the inner batch sweep and are not re-fetched.
        grid = (nW, Bb)

        kernel = functools.partial(_fused_attn_kernel, ww=ww,
                                   use_mask=self.use_mask)

        qkv_spec = pl.BlockSpec((Bt, pl.Squeezed(), heads, N, d),
                                lambda w, b: (b, w, 0, 0, 0))
        out_spec = pl.BlockSpec((Bt, pl.Squeezed(), N, C),
                                lambda w, b: (b, w, 0, 0))

        in_specs = [
            pl.BlockSpec(memory_space=pltpu.MemorySpace.SMEM),    # scale (SMEM scalar)
            qkv_spec, qkv_spec, qkv_spec,                         # q, k, v
        ]
        operands = [self.scale, qw, kw, vw]
        if self.use_mask:
            in_specs += [pl.BlockSpec((pl.Squeezed(), N, 1), lambda w, b: (w, 0, 0)),
                         pl.BlockSpec((pl.Squeezed(), 1, N), lambda w, b: (w, 0, 0))]
            operands += [self.group_row, self.group_col]
        in_specs += [pl.BlockSpec((9, heads, N, d), lambda w, b: (0, 0, 0, 0)),
                     pl.BlockSpec((heads, d, C), lambda w, b: (0, 0, 0)),
                     pl.BlockSpec((1, C), lambda w, b: (0, 0))]
        operands += [self.tap_weights, self.proj_wT_heads, self.bias_eff]

        out_win = pl.pallas_call(
            kernel,
            out_shape=jax.ShapeDtypeStruct((B, nW, N, C), jnp.float32),
            grid=grid,
            in_specs=in_specs,
            out_specs=out_spec,
            compiler_params=pltpu.CompilerParams(
                dimension_semantics=("parallel", "parallel"),
                vmem_limit_bytes=int(budget)),
        )(*operands)

        # windows -> (B, res, res, C) -> (B, L, C)
        x = (out_win.reshape(B, res // wh, res // ww, wh, ww, C)
                    .transpose(0, 1, 3, 2, 4, 5)
                    .reshape(B, L, C))
        return x


# ---------------------------------------------------------------------------
# Pure-JAX reference (numeric check only, f32 throughout)
# ---------------------------------------------------------------------------
def reference_forward(mod, qkv):
    q, k, v = qkv[0], qkv[1], qkv[2]
    B, L, C = q.shape
    res, wh, ww = mod.resolution, mod.winH, mod.winW
    heads, d = mod.num_heads, mod.head_dim
    N = wh * ww
    nW = (res // wh) * (res // ww)
    BW = B * nW

    qw = mod._seq2cswin(q)
    kw = mod._seq2cswin(k)
    v_img = (v.reshape(B, res, res, C)
              .reshape(B, res // wh, wh, res // ww, ww, C)
              .transpose(0, 1, 3, 2, 4, 5)
              .reshape(BW, wh, ww, C))
    lepe_img = lax.conv_general_dilated(
        v_img, mod.conv_w.reshape(3, 3, 1, C),
        window_strides=(1, 1), padding="SAME",
        dimension_numbers=("NHWC", "HWIO", "NHWC"),
        feature_group_count=C) + mod.conv_b.reshape(1, 1, 1, C)
    vw = v_img.reshape(BW, N, heads, d).transpose(0, 2, 1, 3)
    lepe = lepe_img.reshape(BW, N, heads, d).transpose(0, 2, 1, 3)

    attn = jnp.einsum("whnd,whmd->whnm", qw * mod.scale[0, 0], kw)
    if mod.use_mask:
        g = mod.window_groups                                   # (nW, N)
        mask = jnp.where((g[:, None, :] - g[:, :, None]) != 0, -100.0, 0.0)
        mask = jnp.tile(mask, (B, 1, 1))[:, None, :, :]
        attn = attn + mask
    attn = jax.nn.softmax(attn, axis=-1)
    x = jnp.einsum("whnm,whmd->whnd", attn, vw) + lepe
    x = x.transpose(0, 2, 1, 3).reshape(BW, N, C)
    x = x @ mod.proj_w.T + mod.proj_b
    x = (x.reshape(B, res // wh, res // ww, wh, ww, C)
          .transpose(0, 1, 3, 2, 4, 5)
          .reshape(B, L, C))
    return x


if __name__ == "__main__":
    B = 2
    dim = 16
    num_heads = 4
    resolution = 8
    stripeWidth = 4
    L = resolution * resolution

    key = jax.random.PRNGKey(0)
    kparams, kx = jax.random.split(key)
    qkv = jax.random.normal(kx, (3, B, L, dim), dtype=jnp.float32)

    # (attention_mode, currentDepth): masked vertical stripes + unmasked horizontal
    configs = [(0, 1), (1, 2)]
    for mode, depth in configs:
        mod = AttentionPallas(dim, resolution, stripeWidth, mode,
                              num_heads, depth, kparams)
        out = jax.block_until_ready(mod(qkv))
        ref = jax.block_until_ready(reference_forward(mod, qkv))
        assert out.shape == (B, L, dim), out.shape
        # bf16 MXU inputs (f32 accumulation) + approx reciprocal -> small drift
        if not np.allclose(np.asarray(out), np.asarray(ref), rtol=3e-2, atol=3e-2):
            err = float(np.max(np.abs(np.asarray(out) - np.asarray(ref))))
            raise AssertionError(
                f"Pallas output mismatch (mode={mode}, depth={depth}, max_err={err})")
    print("KERNEL_OK")
</pallas_src>

<mosaic_0001>
module attributes {stable_mosaic.version = 11 : i64} {
  func.func @_fused_attn_kernel(%arg0: i32, %arg1: i32, %arg2: memref<1x1xf32, #tpu.memory_space<smem>>, %arg3: memref<2x1x4x32x4xbf16, #tpu.memory_space<vmem>>, %arg4: memref<2x1x4x32x4xbf16, #tpu.memory_space<vmem>>, %arg5: memref<2x1x4x32x4xf32, #tpu.memory_space<vmem>>, %arg6: memref<1x32x1xf32, #tpu.memory_space<vmem>>, %arg7: memref<1x1x32xf32, #tpu.memory_space<vmem>>, %arg8: memref<9x4x32x4xf32, #tpu.memory_space<vmem>>, %arg9: memref<4x4x16xbf16, #tpu.memory_space<vmem>>, %arg10: memref<1x16xf32, #tpu.memory_space<vmem>>, %arg11: memref<2x1x32x16xf32, #tpu.memory_space<vmem>>) attributes {dimension_semantics = [#tpu.dimension_semantics<parallel>, #tpu.dimension_semantics<parallel>], iteration_bounds = array<i64: 2, 1>, scalar_prefetch = 0 : i64, scratch_operands = 0 : i64, tpu.core_type = #tpu.core_type<tc>, window_params = [{transform_indices = @transform_0, window_bounds = array<i64: 1, 1>}, {transform_indices = @transform_1, window_bounds = array<i64: 2, 1, 4, 32, 4>}, {transform_indices = @transform_2, window_bounds = array<i64: 2, 1, 4, 32, 4>}, {transform_indices = @transform_3, window_bounds = array<i64: 2, 1, 4, 32, 4>}, {transform_indices = @transform_4, window_bounds = array<i64: 1, 32, 1>}, {transform_indices = @transform_5, window_bounds = array<i64: 1, 1, 32>}, {pipeline_mode = #tpu.pipeline_mode<synchronous>, transform_indices = @transform_6, window_bounds = array<i64: 9, 4, 32, 4>}, {pipeline_mode = #tpu.pipeline_mode<synchronous>, transform_indices = @transform_7, window_bounds = array<i64: 4, 4, 16>}, {pipeline_mode = #tpu.pipeline_mode<synchronous>, transform_indices = @transform_8, window_bounds = array<i64: 1, 16>}, {transform_indices = @transform_9, window_bounds = array<i64: 2, 1, 32, 16>}]} {
    %c0 = arith.constant 0 : index
    %c0_0 = arith.constant 0 : index
    %0 = memref.load %arg2[%c0, %c0_0] : memref<1x1xf32, #tpu.memory_space<smem>>
    %c0_1 = arith.constant 0 : index
    %c0_2 = arith.constant 0 : index
    %c0_3 = arith.constant 0 : index
    %c0_4 = arith.constant 0 : index
    %c0_5 = arith.constant 0 : index
    %1 = vector.load %arg3[%c0_1, %c0_2, %c0_3, %c0_4, %c0_5] : memref<2x1x4x32x4xbf16, #tpu.memory_space<vmem>>, vector<2x1x4x32x4xbf16>
    %2 = vector.shape_cast %1 : vector<2x1x4x32x4xbf16> to vector<2x4x32x4xbf16>
    %3 = vector.shape_cast %2 : vector<2x4x32x4xbf16> to vector<8x32x4xbf16>
    %c0_6 = arith.constant 0 : index
    %c0_7 = arith.constant 0 : index
    %c0_8 = arith.constant 0 : index
    %c0_9 = arith.constant 0 : index
    %c0_10 = arith.constant 0 : index
    %4 = vector.load %arg4[%c0_6, %c0_7, %c0_8, %c0_9, %c0_10] : memref<2x1x4x32x4xbf16, #tpu.memory_space<vmem>>, vector<2x1x4x32x4xbf16>
    %5 = vector.shape_cast %4 : vector<2x1x4x32x4xbf16> to vector<2x4x32x4xbf16>
    %6 = vector.shape_cast %5 : vector<2x4x32x4xbf16> to vector<8x32x4xbf16>
    %c0_11 = arith.constant 0 : index
    %c0_12 = arith.constant 0 : index
    %c0_13 = arith.constant 0 : index
    %c0_14 = arith.constant 0 : index
    %c0_15 = arith.constant 0 : index
    %7 = vector.load %arg5[%c0_11, %c0_12, %c0_13, %c0_14, %c0_15] : memref<2x1x4x32x4xf32, #tpu.memory_space<vmem>>, vector<2x1x4x32x4xf32>
    %8 = vector.shape_cast %7 : vector<2x1x4x32x4xf32> to vector<2x4x32x4xf32>
    %9 = arith.truncf %8 : vector<2x4x32x4xf32> to vector<2x4x32x4xbf16>
    %10 = vector.shape_cast %9 : vector<2x4x32x4xbf16> to vector<8x32x4xbf16>
    "tpu.trace_start"() <{level = 10 : i32, message = "bnd,bmd->bnm"}> : () -> ()
    %cst = arith.constant dense<0.000000e+00> : vector<8x32x32xf32>
    %11 = tpu.matmul %3, %6, %cst {dimension_numbers = #tpu.dot_dimension_numbers<[2], [2], [1], [1], [0, 0, 0, 1, 1, 1], [0], [0]>} : vector<8x32x4xbf16>, vector<8x32x4xbf16>, vector<8x32x32xf32> -> vector<8x32x32xf32>
    "tpu.trace_stop"() : () -> ()
    %12 = vector.broadcast %0 : f32 to vector<8x32x32xf32>
    %13 = arith.mulf %11, %12 : vector<8x32x32xf32>
    %c0_16 = arith.constant 0 : index
    %c0_17 = arith.constant 0 : index
    %c0_18 = arith.constant 0 : index
    %14 = vector.load %arg6[%c0_16, %c0_17, %c0_18] : memref<1x32x1xf32, #tpu.memory_space<vmem>>, vector<1x32x1xf32>
    %15 = vector.shape_cast %14 : vector<1x32x1xf32> to vector<32x1xf32>
    %c0_19 = arith.constant 0 : index
    %c0_20 = arith.constant 0 : index
    %c0_21 = arith.constant 0 : index
    %16 = vector.load %arg7[%c0_19, %c0_20, %c0_21] : memref<1x1x32xf32, #tpu.memory_space<vmem>>, vector<1x1x32xf32>
    %17 = vector.shape_cast %16 : vector<1x1x32xf32> to vector<1x32xf32>
    %18 = vector.broadcast %15 : vector<32x1xf32> to vector<32x32xf32>
    %19 = vector.broadcast %17 : vector<1x32xf32> to vector<32x32xf32>
    %20 = arith.cmpf one, %18, %19 : vector<32x32xf32>
    %cst_22 = arith.constant -1.000000e+02 : f32
    %cst_23 = arith.constant 0.000000e+00 : f32
    %21 = vector.broadcast %cst_22 : f32 to vector<32x32xf32>
    %22 = vector.broadcast %cst_23 : f32 to vector<32x32xf32>
    %23 = arith.select %20, %21, %22 : vector<32x32xi1>, vector<32x32xf32>
    %24 = vector.shape_cast %23 : vector<32x32xf32> to vector<1x32x32xf32>
    %25 = vector.broadcast %24 : vector<1x32x32xf32> to vector<8x32x32xf32>
    %26 = arith.addf %13, %25 : vector<8x32x32xf32>
    %cst_24 = arith.constant dense<0xFF800000> : vector<8x32xf32>
    %27 = vector.multi_reduction <maximumf>, %26, %cst_24 [2] : vector<8x32x32xf32> to vector<8x32xf32>
    %28 = vector.shape_cast %27 : vector<8x32xf32> to vector<8x32x1xf32>
    %29 = vector.broadcast %28 : vector<8x32x1xf32> to vector<8x32x32xf32>
    %30 = arith.subf %26, %29 : vector<8x32x32xf32>
    %31 = math.exp %30 : vector<8x32x32xf32>
    %cst_25 = arith.constant dense<0.000000e+00> : vector<8x32xf32>
    %32 = vector.multi_reduction <add>, %31, %cst_25 [2] : vector<8x32x32xf32> to vector<8x32xf32>
    %33 = vector.shape_cast %32 : vector<8x32xf32> to vector<8x32x1xf32>
    %34 = tpu.reciprocal %33 {approx = true} : vector<8x32x1xf32> -> vector<8x32x1xf32>
    %35 = vector.broadcast %34 : vector<8x32x1xf32> to vector<8x32x32xf32>
    %36 = arith.mulf %31, %35 : vector<8x32x32xf32>
    %37 = arith.truncf %36 : vector<8x32x32xf32> to vector<8x32x32xbf16>
    "tpu.trace_start"() <{level = 10 : i32, message = "bnm,bmd->bnd"}> : () -> ()
    %cst_26 = arith.constant dense<0.000000e+00> : vector<8x32x4xf32>
    %38 = tpu.matmul %37, %10, %cst_26 {dimension_numbers = #tpu.dot_dimension_numbers<[2], [1], [1], [2], [0, 0, 0, 1, 1, 2], [0], [0]>} : vector<8x32x32xbf16>, vector<8x32x4xbf16>, vector<8x32x4xf32> -> vector<8x32x4xf32>
    "tpu.trace_stop"() : () -> ()
    %39 = vector.shape_cast %38 : vector<8x32x4xf32> to vector<2x4x32x4xf32>
    %c0_27 = arith.constant 0 : index
    %c0_28 = arith.constant 0 : index
    %c0_29 = arith.constant 0 : index
    %c0_30 = arith.constant 0 : index
    %40 = vector.load %arg8[%c0_27, %c0_28, %c0_29, %c0_30] : memref<9x4x32x4xf32, #tpu.memory_space<vmem>>, vector<9x4x32x4xf32>
    %41 = vector.extract_strided_slice %40 {offsets = [4, 0, 0, 0], sizes = [1, 4, 32, 4], strides = [1, 1, 1, 1]} : vector<9x4x32x4xf32> to vector<1x4x32x4xf32>
    %42 = vector.shape_cast %41 : vector<1x4x32x4xf32> to vector<4x32x4xf32>
    %43 = vector.shape_cast %42 : vector<4x32x4xf32> to vector<1x4x32x4xf32>
    %44 = vector.broadcast %43 : vector<1x4x32x4xf32> to vector<2x4x32x4xf32>
    %45 = arith.mulf %8, %44 : vector<2x4x32x4xf32>
    %c5_i32 = arith.constant 5 : i32
    %46 = tpu.dynamic_rotate %8 by %c5_i32 dim 2 : vector<2x4x32x4xf32>, i32 -> vector<2x4x32x4xf32>
    %47 = vector.extract_strided_slice %40 {offsets = [0, 0, 0, 0], sizes = [1, 4, 32, 4], strides = [1, 1, 1, 1]} : vector<9x4x32x4xf32> to vector<1x4x32x4xf32>
    %48 = vector.shape_cast %47 : vector<1x4x32x4xf32> to vector<4x32x4xf32>
    %49 = vector.shape_cast %48 : vector<4x32x4xf32> to vector<1x4x32x4xf32>
    %50 = vector.broadcast %49 : vector<1x4x32x4xf32> to vector<2x4x32x4xf32>
    %51 = arith.mulf %46, %50 : vector<2x4x32x4xf32>
    %52 = arith.addf %45, %51 : vector<2x4x32x4xf32>
    %c4_i32 = arith.constant 4 : i32
    %53 = tpu.dynamic_rotate %8 by %c4_i32 dim 2 : vector<2x4x32x4xf32>, i32 -> vector<2x4x32x4xf32>
    %54 = vector.extract_strided_slice %40 {offsets = [1, 0, 0, 0], sizes = [1, 4, 32, 4], strides = [1, 1, 1, 1]} : vector<9x4x32x4xf32> to vector<1x4x32x4xf32>
    %55 = vector.shape_cast %54 : vector<1x4x32x4xf32> to vector<4x32x4xf32>
    %56 = vector.shape_cast %55 : vector<4x32x4xf32> to vector<1x4x32x4xf32>
    %57 = vector.broadcast %56 : vector<1x4x32x4xf32> to vector<2x4x32x4xf32>
    %58 = arith.mulf %53, %57 : vector<2x4x32x4xf32>
    %59 = arith.addf %52, %58 : vector<2x4x32x4xf32>
    %c3_i32 = arith.constant 3 : i32
    %60 = tpu.dynamic_rotate %8 by %c3_i32 dim 2 : vector<2x4x32x4xf32>, i32 -> vector<2x4x32x4xf32>
    %61 = vector.extract_strided_slice %40 {offsets = [2, 0, 0, 0], sizes = [1, 4, 32, 4], strides = [1, 1, 1, 1]} : vector<9x4x32x4xf32> to vector<1x4x32x4xf32>
    %62 = vector.shape_cast %61 : vector<1x4x32x4xf32> to vector<4x32x4xf32>
    %63 = vector.shape_cast %62 : vector<4x32x4xf32> to vector<1x4x32x4xf32>
    %64 = vector.broadcast %63 : vector<1x4x32x4xf32> to vector<2x4x32x4xf32>
    %65 = arith.mulf %60, %64 : vector<2x4x32x4xf32>
    %66 = arith.addf %59, %65 : vector<2x4x32x4xf32>
    %c1_i32 = arith.constant 1 : i32
    %67 = tpu.dynamic_rotate %8 by %c1_i32 dim 2 : vector<2x4x32x4xf32>, i32 -> vector<2x4x32x4xf32>
    %68 = vector.extract_strided_slice %40 {offsets = [3, 0, 0, 0], sizes = [1, 4, 32, 4], strides = [1, 1, 1, 1]} : vector<9x4x32x4xf32> to vector<1x4x32x4xf32>
    %69 = vector.shape_cast %68 : vector<1x4x32x4xf32> to vector<4x32x4xf32>
    %70 = vector.shape_cast %69 : vector<4x32x4xf32> to vector<1x4x32x4xf32>
    %71 = vector.broadcast %70 : vector<1x4x32x4xf32> to vector<2x4x32x4xf32>
    %72 = arith.mulf %67, %71 : vector<2x4x32x4xf32>
    %73 = arith.addf %66, %72 : vector<2x4x32x4xf32>
    %c31_i32 = arith.constant 31 : i32
    %74 = tpu.dynamic_rotate %8 by %c31_i32 dim 2 : vector<2x4x32x4xf32>, i32 -> vector<2x4x32x4xf32>
    %75 = vector.extract_strided_slice %40 {offsets = [5, 0, 0, 0], sizes = [1, 4, 32, 4], strides = [1, 1, 1, 1]} : vector<9x4x32x4xf32> to vector<1x4x32x4xf32>
    %76 = vector.shape_cast %75 : vector<1x4x32x4xf32> to vector<4x32x4xf32>
    %77 = vector.shape_cast %76 : vector<4x32x4xf32> to vector<1x4x32x4xf32>
    %78 = vector.broadcast %77 : vector<1x4x32x4xf32> to vector<2x4x32x4xf32>
    %79 = arith.mulf %74, %78 : vector<2x4x32x4xf32>
    %80 = arith.addf %73, %79 : vector<2x4x32x4xf32>
    %c29_i32 = arith.constant 29 : i32
    %81 = tpu.dynamic_rotate %8 by %c29_i32 dim 2 : vector<2x4x32x4xf32>, i32 -> vector<2x4x32x4xf32>
    %82 = vector.extract_strided_slice %40 {offsets = [6, 0, 0, 0], sizes = [1, 4, 32, 4], strides = [1, 1, 1, 1]} : vector<9x4x32x4xf32> to vector<1x4x32x4xf32>
    %83 = vector.shape_cast %82 : vector<1x4x32x4xf32> to vector<4x32x4xf32>
    %84 = vector.shape_cast %83 : vector<4x32x4xf32> to vector<1x4x32x4xf32>
    %85 = vector.broadcast %84 : vector<1x4x32x4xf32> to vector<2x4x32x4xf32>
    %86 = arith.mulf %81, %85 : vector<2x4x32x4xf32>
    %87 = arith.addf %80, %86 : vector<2x4x32x4xf32>
    %c28_i32 = arith.constant 28 : i32
    %88 = tpu.dynamic_rotate %8 by %c28_i32 dim 2 : vector<2x4x32x4xf32>, i32 -> vector<2x4x32x4xf32>
    %89 = vector.extract_strided_slice %40 {offsets = [7, 0, 0, 0], sizes = [1, 4, 32, 4], strides = [1, 1, 1, 1]} : vector<9x4x32x4xf32> to vector<1x4x32x4xf32>
    %90 = vector.shape_cast %89 : vector<1x4x32x4xf32> to vector<4x32x4xf32>
    %91 = vector.shape_cast %90 : vector<4x32x4xf32> to vector<1x4x32x4xf32>
    %92 = vector.broadcast %91 : vector<1x4x32x4xf32> to vector<2x4x32x4xf32>
    %93 = arith.mulf %88, %92 : vector<2x4x32x4xf32>
    %94 = arith.addf %87, %93 : vector<2x4x32x4xf32>
    %c27_i32 = arith.constant 27 : i32
    %95 = tpu.dynamic_rotate %8 by %c27_i32 dim 2 : vector<2x4x32x4xf32>, i32 -> vector<2x4x32x4xf32>
    %96 = vector.extract_strided_slice %40 {offsets = [8, 0, 0, 0], sizes = [1, 4, 32, 4], strides = [1, 1, 1, 1]} : vector<9x4x32x4xf32> to vector<1x4x32x4xf32>
    %97 = vector.shape_cast %96 : vector<1x4x32x4xf32> to vector<4x32x4xf32>
    %98 = vector.shape_cast %97 : vector<4x32x4xf32> to vector<1x4x32x4xf32>
    %99 = vector.broadcast %98 : vector<1x4x32x4xf32> to vector<2x4x32x4xf32>
    %100 = arith.mulf %95, %99 : vector<2x4x32x4xf32>
    %101 = arith.addf %94, %100 : vector<2x4x32x4xf32>
    %102 = arith.addf %39, %101 : vector<2x4x32x4xf32>
    %c0_31 = arith.constant 0 : index
    %c0_32 = arith.constant 0 : index
    %c0_33 = arith.constant 0 : index
    %103 = vector.load %arg9[%c0_31, %c0_32, %c0_33] : memref<4x4x16xbf16, #tpu.memory_space<vmem>>, vector<4x4x16xbf16>
    %cst_34 = arith.constant 0.000000e+00 : f32
    %104 = vector.broadcast %cst_34 : f32 to vector<64x16xf32>
    %105 = vector.extract_strided_slice %102 {offsets = [0, 0, 0, 0], sizes = [2, 1, 32, 4], strides = [1, 1, 1, 1]} : vector<2x4x32x4xf32> to vector<2x1x32x4xf32>
    %106 = vector.shape_cast %105 : vector<2x1x32x4xf32> to vector<2x32x4xf32>
    %107 = vector.shape_cast %106 : vector<2x32x4xf32> to vector<64x4xf32>
    %108 = arith.truncf %107 : vector<64x4xf32> to vector<64x4xbf16>
    %109 = vector.extract_strided_slice %103 {offsets = [0, 0, 0], sizes = [1, 4, 16], strides = [1, 1, 1]} : vector<4x4x16xbf16> to vector<1x4x16xbf16>
    %110 = vector.shape_cast %109 : vector<1x4x16xbf16> to vector<4x16xbf16>
    %cst_35 = arith.constant dense<0.000000e+00> : vector<64x16xf32>
    %111 = tpu.matmul %108, %110, %cst_35 {dimension_numbers = #tpu.dot_dimension_numbers<[1], [0], [0], [1], [0, 0, 1, 1], [], []>} : vector<64x4xbf16>, vector<4x16xbf16>, vector<64x16xf32> -> vector<64x16xf32>
    %112 = arith.addf %104, %111 : vector<64x16xf32>
    %113 = vector.extract_strided_slice %102 {offsets = [0, 1, 0, 0], sizes = [2, 1, 32, 4], strides = [1, 1, 1, 1]} : vector<2x4x32x4xf32> to vector<2x1x32x4xf32>
    %114 = vector.shape_cast %113 : vector<2x1x32x4xf32> to vector<2x32x4xf32>
    %115 = vector.shape_cast %114 : vector<2x32x4xf32> to vector<64x4xf32>
    %116 = arith.truncf %115 : vector<64x4xf32> to vector<64x4xbf16>
    %117 = vector.extract_strided_slice %103 {offsets = [1, 0, 0], sizes = [1, 4, 16], strides = [1, 1, 1]} : vector<4x4x16xbf16> to vector<1x4x16xbf16>
    %118 = vector.shape_cast %117 : vector<1x4x16xbf16> to vector<4x16xbf16>
    %cst_36 = arith.constant dense<0.000000e+00> : vector<64x16xf32>
    %119 = tpu.matmul %116, %118, %cst_36 {dimension_numbers = #tpu.dot_dimension_numbers<[1], [0], [0], [1], [0, 0, 1, 1], [], []>} : vector<64x4xbf16>, vector<4x16xbf16>, vector<64x16xf32> -> vector<64x16xf32>
    %120 = arith.addf %112, %119 : vector<64x16xf32>
    %121 = vector.extract_strided_slice %102 {offsets = [0, 2, 0, 0], sizes = [2, 1, 32, 4], strides = [1, 1, 1, 1]} : vector<2x4x32x4xf32> to vector<2x1x32x4xf32>
    %122 = vector.shape_cast %121 : vector<2x1x32x4xf32> to vector<2x32x4xf32>
    %123 = vector.shape_cast %122 : vector<2x32x4xf32> to vector<64x4xf32>
    %124 = arith.truncf %123 : vector<64x4xf32> to vector<64x4xbf16>
    %125 = vector.extract_strided_slice %103 {offsets = [2, 0, 0], sizes = [1, 4, 16], strides = [1, 1, 1]} : vector<4x4x16xbf16> to vector<1x4x16xbf16>
    %126 = vector.shape_cast %125 : vector<1x4x16xbf16> to vector<4x16xbf16>
    %cst_37 = arith.constant dense<0.000000e+00> : vector<64x16xf32>
    %127 = tpu.matmul %124, %126, %cst_37 {dimension_numbers = #tpu.dot_dimension_numbers<[1], [0], [0], [1], [0, 0, 1, 1], [], []>} : vector<64x4xbf16>, vector<4x16xbf16>, vector<64x16xf32> -> vector<64x16xf32>
    %128 = arith.addf %120, %127 : vector<64x16xf32>
    %129 = vector.extract_strided_slice %102 {offsets = [0, 3, 0, 0], sizes = [2, 1, 32, 4], strides = [1, 1, 1, 1]} : vector<2x4x32x4xf32> to vector<2x1x32x4xf32>
    %130 = vector.shape_cast %129 : vector<2x1x32x4xf32> to vector<2x32x4xf32>
    %131 = vector.shape_cast %130 : vector<2x32x4xf32> to vector<64x4xf32>
    %132 = arith.truncf %131 : vector<64x4xf32> to vector<64x4xbf16>
    %133 = vector.extract_strided_slice %103 {offsets = [3, 0, 0], sizes = [1, 4, 16], strides = [1, 1, 1]} : vector<4x4x16xbf16> to vector<1x4x16xbf16>
    %134 = vector.shape_cast %133 : vector<1x4x16xbf16> to vector<4x16xbf16>
    %cst_38 = arith.constant dense<0.000000e+00> : vector<64x16xf32>
    %135 = tpu.matmul %132, %134, %cst_38 {dimension_numbers = #tpu.dot_dimension_numbers<[1], [0], [0], [1], [0, 0, 1, 1], [], []>} : vector<64x4xbf16>, vector<4x16xbf16>, vector<64x16xf32> -> vector<64x16xf32>
    %136 = arith.addf %128, %135 : vector<64x16xf32>
    %c0_39 = arith.constant 0 : index
    %c0_40 = arith.constant 0 : index
    %137 = vector.load %arg10[%c0_39, %c0_40] : memref<1x16xf32, #tpu.memory_space<vmem>>, vector<1x16xf32>
    %138 = vector.broadcast %137 : vector<1x16xf32> to vector<64x16xf32>
    %139 = arith.addf %136, %138 : vector<64x16xf32>
    %140 = vector.shape_cast %139 : vector<64x16xf32> to vector<2x32x16xf32>
    %c0_41 = arith.constant 0 : index
    %c0_42 = arith.constant 0 : index
    %c0_43 = arith.constant 0 : index
    %c0_44 = arith.constant 0 : index
    %141 = vector.load %arg11[%c0_41, %c0_42, %c0_43, %c0_44] : memref<2x1x32x16xf32, #tpu.memory_space<vmem>>, vector<2x1x32x16xf32>
    %142 = vector.shape_cast %141 : vector<2x1x32x16xf32> to vector<2x32x16xf32>
    %143 = vector.shape_cast %140 : vector<2x32x16xf32> to vector<2x1x32x16xf32>
    tpu.vector_store %arg11[%c0_41, %c0_42, %c0_43, %c0_44], %143 {strides = array<i32>} : memref<2x1x32x16xf32, #tpu.memory_space<vmem>>, vector<2x1x32x16xf32>,
    return
  }
  func.func @transform_0(%arg0: i32, %arg1: i32) -> (i32, i32) {
    %c0_i32 = arith.constant 0 : i32
    %c0_i32_0 = arith.constant 0 : i32
    %c0_i32_1 = arith.constant 0 : i32
    return %c0_i32, %c0_i32_0 : i32, i32
  }
  func.func @transform_1(%arg0: i32, %arg1: i32) -> (i32, i32, i32, i32, i32) {
    %c0_i32 = arith.constant 0 : i32
    %c0_i32_0 = arith.constant 0 : i32
    %c0_i32_1 = arith.constant 0 : i32
    %c0_i32_2 = arith.constant 0 : i32
    return %arg1, %arg0, %c0_i32, %c0_i32_0, %c0_i32_1 : i32, i32, i32, i32, i32
  }
  func.func @transform_2(%arg0: i32, %arg1: i32) -> (i32, i32, i32, i32, i32) {
    %c0_i32 = arith.constant 0 : i32
    %c0_i32_0 = arith.constant 0 : i32
    %c0_i32_1 = arith.constant 0 : i32
    %c0_i32_2 = arith.constant 0 : i32
    return %arg1, %arg0, %c0_i32, %c0_i32_0, %c0_i32_1 : i32, i32, i32, i32, i32
  }
  func.func @transform_3(%arg0: i32, %arg1: i32) -> (i32, i32, i32, i32, i32) {
    %c0_i32 = arith.constant 0 : i32
    %c0_i32_0 = arith.constant 0 : i32
    %c0_i32_1 = arith.constant 0 : i32
    %c0_i32_2 = arith.constant 0 : i32
    return %arg1, %arg0, %c0_i32, %c0_i32_0, %c0_i32_1 : i32, i32, i32, i32, i32
  }
  func.func @transform_4(%arg0: i32, %arg1: i32) -> (i32, i32, i32) {
    %c0_i32 = arith.constant 0 : i32
    %c0_i32_0 = arith.constant 0 : i32
    %c0_i32_1 = arith.constant 0 : i32
    return %arg0, %c0_i32, %c0_i32_0 : i32, i32, i32
  }
  func.func @transform_5(%arg0: i32, %arg1: i32) -> (i32, i32, i32) {
    %c0_i32 = arith.constant 0 : i32
    %c0_i32_0 = arith.constant 0 : i32
    %c0_i32_1 = arith.constant 0 : i32
    return %arg0, %c0_i32, %c0_i32_0 : i32, i32, i32
  }
  func.func @transform_6(%arg0: i32, %arg1: i32) -> (i32, i32, i32, i32) {
    %c0_i32 = arith.constant 0 : i32
    %c0_i32_0 = arith.constant 0 : i32
    %c0_i32_1 = arith.constant 0 : i32
    %c0_i32_2 = arith.constant 0 : i32
    %c0_i32_3 = arith.constant 0 : i32
    return %c0_i32, %c0_i32_0, %c0_i32_1, %c0_i32_2 : i32, i32, i32, i32
  }
  func.func @transform_7(%arg0: i32, %arg1: i32) -> (i32, i32, i32) {
    %c0_i32 = arith.constant 0 : i32
    %c0_i32_0 = arith.constant 0 : i32
    %c0_i32_1 = arith.constant 0 : i32
    %c0_i32_2 = arith.constant 0 : i32
    return %c0_i32, %c0_i32_0, %c0_i32_1 : i32, i32, i32
  }
  func.func @transform_8(%arg0: i32, %arg1: i32) -> (i32, i32) {
    %c0_i32 = arith.constant 0 : i32
    %c0_i32_0 = arith.constant 0 : i32
    %c0_i32_1 = arith.constant 0 : i32
    return %c0_i32, %c0_i32_0 : i32, i32
  }
  func.func @transform_9(%arg0: i32, %arg1: i32) -> (i32, i32, i32, i32) {
    %c0_i32 = arith.constant 0 : i32
    %c0_i32_0 = arith.constant 0 : i32
    %c0_i32_1 = arith.constant 0 : i32
    return %arg1, %arg0, %c0_i32, %c0_i32_0 : i32, i32, i32, i32
  }
}

</mosaic_0001>

<llo_original>
// kernel: tpu_custom_call.1
$region0: #{tpu_custom_call.1}
  #allocation0 [shape = 'u32[]', space=smem, size = 0x4, offset = 0x4, fixed_abs, tag = 'smem constant byte address 0x4 - core index']
  #allocation1 [shape = 'u32[144,128]{1,0:T(1,128)}', space=vmem, size = 0x12000, scoped, tag = 'internal scratch']
  #allocation2 [shape = 'f32[1,1]{1,0:T(1,128)S(6)}', space=smem, size = 0x200, scoped, tag = 'scoped memory for tpu_custom_call.1']
  %s0 = inlined_call_operand.<no memory space> [shape: f32[1,1], index: 0, kind: input, shape index: {}]
  %s1 = inlined_call_operand.vmem [shape: bf16[2,2,4,32,4], index: 1, kind: input, shape index: {}]
  %s2 = inlined_call_operand.vmem [shape: bf16[2,2,4,32,4], index: 2, kind: input, shape index: {}]
  %s3 = inlined_call_operand.vmem [shape: f32[2,2,4,32,4], index: 3, kind: input, shape index: {}]
  %s4 = inlined_call_operand.vmem [shape: f32[2,32,1], index: 4, kind: input, shape index: {}]
  %s5 = inlined_call_operand.vmem [shape: f32[2,1,32], index: 5, kind: input, shape index: {}]
  %s6 = inlined_call_operand.vmem [shape: f32[9,4,32,4], index: 6, kind: input, shape index: {}]
  %s7 = inlined_call_operand.vmem [shape: bf16[4,4,16], index: 7, kind: input, shape index: {}]
  %s8 = inlined_call_operand.vmem [shape: f32[1,16], index: 8, kind: input, shape index: {}]
  %s9 = inlined_call_operand.vmem [shape: f32[2,2,32,16], index: 9, kind: output, shape index: {}]
  %s10 = sld [smem:[#allocation0]]
  $region223: #{tpu_custom_call.1} parent=0
    _
  %s12 = ssub.s32 1, %s10
  %s13 = scalar_select 0, %s12, %s10
  %14 = sst [smem:[#allocation2]] %s0
  $region1: #{tpu_custom_call.1} parent=0
    #allocation3 [shape = 'u8[131072]{0}', space=vmem, size = 0x20000, scoped, tag = 'input window, operand 1']
    #allocation4 [shape = 'u8[131072]{0}', space=vmem, size = 0x20000, scoped, tag = 'input window, operand 2']
    #allocation5 [shape = 'u8[262144]{0}', space=vmem, size = 0x40000, scoped, tag = 'input window, operand 3']
    #allocation6 [shape = 'u8[65536]{0}', space=vmem, size = 0x10000, scoped, tag = 'output window, operand 0']
    loop: start=0, step=1, limit=4
    $region2: #{tpu_custom_call.1} parent=1 // loop_pre_header
      _
    $region3: #{tpu_custom_call.1} parent=1 // loop_header
      %s16 = sphi 0, %s20
      %p17 = scmp.ge.s32.totalorder %s16, 4
      %s23 = sphi 0, %s35
      %s24 = sphi 0, %s31
      %s25 = sphi 0, %s23
      %s26 = sphi 0, %s24
      %s27 = sphi 0, %s25
      %s28 = sphi 0, %s26
      %s36 = sphi 0, %s36
      %s38 = sphi 0, %s36
      %s39 = sphi 0, %s38
      %s53 = sphi 0, %s39
      %s61 = sphi 0, %s63
      %s64 = sphi 0, %s61
      %s65 = sphi 0, %s64
      %s81 = sphi 0, %s65
      %s89 = sphi 0, %s91
      %s92 = sphi 0, %s89
      %s93 = sphi 0, %s92
      %s109 = sphi 0, %s93
      %s117 = sphi 0, %s119
      %s120 = sphi 0, %s117
      %s121 = sphi 0, %s120
      %s137 = sphi 0, %s121
      %s143 = sphi 0, %s145
      %s146 = sphi 0, %s143
      %s147 = sphi 0, %s146
      %s163 = sphi 0, %s147
      %s169 = sphi 0, %s171
      %s172 = sphi 0, %s169
      %s173 = sphi 0, %s172
      %s189 = sphi 0, %s173
      %s193 = sphi 0, %s193
      %s195 = sphi 0, %s193
      %s196 = sphi 0, %s195
      %s210 = sphi 0, %s196
      %s214 = sphi 0, %s214
      %s216 = sphi 0, %s214
      %s217 = sphi 0, %s216
      %s231 = sphi 0, %s217
      %s235 = sphi 0, %s235
      %s237 = sphi 0, %s235
      %s238 = sphi 0, %s237
      %s252 = sphi 0, %s238
      %s260 = sphi 0, %s262
      %s263 = sphi 0, %s260
      %s264 = sphi 0, %s263
      %s280 = sphi 0, %s264
    $region4: #{tpu_custom_call.1} parent=1 // loop_header_branch
      %19 = sbr.rel (%p17) target = $region8
    $region5: #{tpu_custom_call.1} parent=1 // loop_body
      %s21 = ssub.s32 %s16, 1
      %s22 = ssub.s32 %s16, 2
      %s29 = sadd.s32 1, %s24
      %p30 = scmp.ge.s32.totalorder %s29, 1
      %s31 = scalar_select %p30, 0, %s29
      %s32 = sadd.s32 1, %s23
      %s33 = scalar_select %p30, %s32, %s23
      %p34 = scmp.ge.s32.totalorder %s33, 2
      %s35 = scalar_select %p34, 0, %s33
      %s37 = sadd.s32 %s36, 1
      %p40 = scmp.eq.s32.totalorder %s16, 1
      %p41 = scmp.ne.s32.totalorder %s36, %s38
      %p42 = scmp.eq.s32.totalorder %s16, 0
      %p43 = por %p41, %p42
      %p44 = scmp.ne.s32.totalorder %s36, %s38
      %p45 = scmp.eq.s32.totalorder %s21, 1
      %p46 = por %p44, %p45
      %p47 = scmp.ne.s32.totalorder %s38, %s39
      %p48 = scmp.eq.s32.totalorder %s21, 0
      %p49 = por %p47, %p48
      %p50 = scmp.ne.s32.totalorder %s38, %s39
      %p51 = scmp.eq.s32.totalorder %s22, 1
      %p52 = por %p50, %p51
      %p54 = scmp.ne.s32.totalorder %s39, %s53
      %p55 = scmp.eq.s32.totalorder %s22, 0
      %p56 = por %p54, %p55
      %s57 = ssub.s32 %s24, %s31
      %s58 = ssub.s32 %s23, %s35
      %s59 = sor.u32 %s57, %s58
      %p60 = scmp.eq.s32.totalorder %s59, 0
      %s62 = sadd.s32 %s61, 1
      %s63 = scalar_select %p60, %s61, %s62
      %p66 = pneg %p60
      %p67 = scmp.eq.s32.totalorder %s16, 1
      %p68 = por %p66, %p67
      %p69 = scmp.ne.s32.totalorder %s61, %s64
      %p70 = scmp.eq.s32.totalorder %s16, 0
      %p71 = por %p69, %p70
      %p72 = scmp.ne.s32.totalorder %s61, %s64
      %p73 = scmp.eq.s32.totalorder %s21, 1
      %p74 = por %p72, %p73
      %p75 = scmp.ne.s32.totalorder %s64, %s65
      %p76 = scmp.eq.s32.totalorder %s21, 0
      %p77 = por %p75, %p76
      %p78 = scmp.ne.s32.totalorder %s64, %s65
      %p79 = scmp.eq.s32.totalorder %s22, 1
      %p80 = por %p78, %p79
      %p82 = scmp.ne.s32.totalorder %s65, %s81
      %p83 = scmp.eq.s32.totalorder %s22, 0
      %p84 = por %p82, %p83
      %s85 = ssub.s32 %s24, %s31
      %s86 = ssub.s32 %s23, %s35
      %s87 = sor.u32 %s85, %s86
      %p88 = scmp.eq.s32.totalorder %s87, 0
      %s90 = sadd.s32 %s89, 1
      %s91 = scalar_select %p88, %s89, %s90
      %p94 = pneg %p88
      %p95 = scmp.eq.s32.totalorder %s16, 1
      %p96 = por %p94, %p95
      %p97 = scmp.ne.s32.totalorder %s89, %s92
      %p98 = scmp.eq.s32.totalorder %s16, 0
      %p99 = por %p97, %p98
      %p100 = scmp.ne.s32.totalorder %s89, %s92
      %p101 = scmp.eq.s32.totalorder %s21, 1
      %p102 = por %p100, %p101
      %p103 = scmp.ne.s32.totalorder %s92, %s93
      %p104 = scmp.eq.s32.totalorder %s21, 0
      %p105 = por %p103, %p104
      %p106 = scmp.ne.s32.totalorder %s92, %s93
      %p107 = scmp.eq.s32.totalorder %s22, 1
      %p108 = por %p106, %p107
      %p110 = scmp.ne.s32.totalorder %s93, %s109
      %p111 = scmp.eq.s32.totalorder %s22, 0
      %p112 = por %p110, %p111
      %s113 = ssub.s32 %s24, %s31
      %s114 = ssub.s32 %s23, %s35
      %s115 = sor.u32 %s113, %s114
      %p116 = scmp.eq.s32.totalorder %s115, 0
      %s118 = sadd.s32 %s117, 1
      %s119 = scalar_select %p116, %s117, %s118
      %p122 = pneg %p116
      %p123 = scmp.eq.s32.totalorder %s16, 1
      %p124 = por %p122, %p123
      %p125 = scmp.ne.s32.totalorder %s117, %s120
      %p126 = scmp.eq.s32.totalorder %s16, 0
      %p127 = por %p125, %p126
      %p128 = scmp.ne.s32.totalorder %s117, %s120
      %p129 = scmp.eq.s32.totalorder %s21, 1
      %p130 = por %p128, %p129
      %p131 = scmp.ne.s32.totalorder %s120, %s121
      %p132 = scmp.eq.s32.totalorder %s21, 0
      %p133 = por %p131, %p132
      %p134 = scmp.ne.s32.totalorder %s120, %s121
      %p135 = scmp.eq.s32.totalorder %s22, 1
      %p136 = por %p134, %p135
      %p138 = scmp.ne.s32.totalorder %s121, %s137
      %p139 = scmp.eq.s32.totalorder %s22, 0
      %p140 = por %p138, %p139
      %s141 = ssub.s32 %s23, %s35
      %p142 = scmp.eq.s32.totalorder %s141, 0
      %s144 = sadd.s32 %s143, 1
      %s145 = scalar_select %p142, %s143, %s144
      %p148 = pneg %p142
      %p149 = scmp.eq.s32.totalorder %s16, 1
      %p150 = por %p148, %p149
      %p151 = scmp.ne.s32.totalorder %s143, %s146
      %p152 = scmp.eq.s32.totalorder %s16, 0
      %p153 = por %p151, %p152
      %p154 = scmp.ne.s32.totalorder %s143, %s146
      %p155 = scmp.eq.s32.totalorder %s21, 1
      %p156 = por %p154, %p155
      %p157 = scmp.ne.s32.totalorder %s146, %s147
      %p158 = scmp.eq.s32.totalorder %s21, 0
      %p159 = por %p157, %p158
      %p160 = scmp.ne.s32.totalorder %s146, %s147
      %p161 = scmp.eq.s32.totalorder %s22, 1
      %p162 = por %p160, %p161
      %p164 = scmp.ne.s32.totalorder %s147, %s163
      %p165 = scmp.eq.s32.totalorder %s22, 0
      %p166 = por %p164, %p165
      %s167 = ssub.s32 %s23, %s35
      %p168 = scmp.eq.s32.totalorder %s167, 0
      %s170 = sadd.s32 %s169, 1
      %s171 = scalar_select %p168, %s169, %s170
      %p174 = pneg %p168
      %p175 = scmp.eq.s32.totalorder %s16, 1
      %p176 = por %p174, %p175
      %p177 = scmp.ne.s32.totalorder %s169, %s172
      %p178 = scmp.eq.s32.totalorder %s16, 0
      %p179 = por %p177, %p178
      %p180 = scmp.ne.s32.totalorder %s169, %s172
      %p181 = scmp.eq.s32.totalorder %s21, 1
      %p182 = por %p180, %p181
      %p183 = scmp.ne.s32.totalorder %s172, %s173
      %p184 = scmp.eq.s32.totalorder %s21, 0
      %p185 = por %p183, %p184
      %p186 = scmp.ne.s32.totalorder %s172, %s173
      %p187 = scmp.eq.s32.totalorder %s22, 1
      %p188 = por %p186, %p187
      %p190 = scmp.ne.s32.totalorder %s173, %s189
      %p191 = scmp.eq.s32.totalorder %s22, 0
      %p192 = por %p190, %p191
      %s194 = sadd.s32 %s193, 1
      %p197 = scmp.eq.s32.totalorder %s16, 1
      %p198 = scmp.ne.s32.totalorder %s193, %s195
      %p199 = scmp.eq.s32.totalorder %s16, 0
      %p200 = por %p198, %p199
      %p201 = scmp.ne.s32.totalorder %s193, %s195
      %p202 = scmp.eq.s32.totalorder %s21, 1
      %p203 = por %p201, %p202
      %p204 = scmp.ne.s32.totalorder %s195, %s196
      %p205 = scmp.eq.s32.totalorder %s21, 0
      %p206 = por %p204, %p205
      %p207 = scmp.ne.s32.totalorder %s195, %s196
      %p208 = scmp.eq.s32.totalorder %s22, 1
      %p209 = por %p207, %p208
      %p211 = scmp.ne.s32.totalorder %s196, %s210
      %p212 = scmp.eq.s32.totalorder %s22, 0
      %p213 = por %p211, %p212
      %s215 = sadd.s32 %s214, 1
      %p218 = scmp.eq.s32.totalorder %s16, 1
      %p219 = scmp.ne.s32.totalorder %s214, %s216
      %p220 = scmp.eq.s32.totalorder %s16, 0
      %p221 = por %p219, %p220
      %p222 = scmp.ne.s32.totalorder %s214, %s216
      %p223 = scmp.eq.s32.totalorder %s21, 1
      %p224 = por %p222, %p223
      %p225 = scmp.ne.s32.totalorder %s216, %s217
      %p226 = scmp.eq.s32.totalorder %s21, 0
      %p227 = por %p225, %p226
      %p228 = scmp.ne.s32.totalorder %s216, %s217
      %p229 = scmp.eq.s32.totalorder %s22, 1
      %p230 = por %p228, %p229
      %p232 = scmp.ne.s32.totalorder %s217, %s231
      %p233 = scmp.eq.s32.totalorder %s22, 0
      %p234 = por %p232, %p233
      %s236 = sadd.s32 %s235, 1
      %p239 = scmp.eq.s32.totalorder %s16, 1
      %p240 = scmp.ne.s32.totalorder %s235, %s237
      %p241 = scmp.eq.s32.totalorder %s16, 0
      %p242 = por %p240, %p241
      %p243 = scmp.ne.s32.totalorder %s235, %s237
      %p244 = scmp.eq.s32.totalorder %s21, 1
      %p245 = por %p243, %p244
      %p246 = scmp.ne.s32.totalorder %s237, %s238
      %p247 = scmp.eq.s32.totalorder %s21, 0
      %p248 = por %p246, %p247
      %p249 = scmp.ne.s32.totalorder %s237, %s238
      %p250 = scmp.eq.s32.totalorder %s22, 1
      %p251 = por %p249, %p250
      %p253 = scmp.ne.s32.totalorder %s238, %s252
      %p254 = scmp.eq.s32.totalorder %s22, 0
      %p255 = por %p253, %p254
      %s256 = ssub.s32 %s24, %s31
      %s257 = ssub.s32 %s23, %s35
      %s258 = sor.u32 %s256, %s257
      %p259 = scmp.eq.s32.totalorder %s258, 0
      %s261 = sadd.s32 %s260, 1
      %s262 = scalar_select %p259, %s260, %s261
      %p265 = pneg %p259
      %p266 = scmp.eq.s32.totalorder %s16, 1
      %p267 = por %p265, %p266
      %p268 = scmp.ne.s32.totalorder %s260, %s263
      %p269 = scmp.eq.s32.totalorder %s16, 0
      %p270 = por %p268, %p269
      %p271 = scmp.ne.s32.totalorder %s260, %s263
      %p272 = scmp.eq.s32.totalorder %s21, 1
      %p273 = por %p271, %p272
      %p274 = scmp.ne.s32.totalorder %s263, %s264
      %p275 = scmp.eq.s32.totalorder %s21, 0
      %p276 = por %p274, %p275
      %p277 = scmp.ne.s32.totalorder %s263, %s264
      %p278 = scmp.eq.s32.totalorder %s22, 1
      %p279 = por %p277, %p278
      %p281 = scmp.ne.s32.totalorder %s264, %s280
      %p282 = scmp.eq.s32.totalorder %s22, 0
      %p283 = por %p281, %p282
      %p284 = scmp.le.s32.totalorder 1, %s16
      %p285 = scmp.lt.s32.totalorder %s16, 3
      %p286 = pnand %p284, %p285
      %p287 = pneg %p286
      // Predicated region
      $region9: #{tpu_custom_call.1} parent=5 // pred_check
        _
      $region10: #{tpu_custom_call.1} parent=5 // pred_check_branch
        %289 = sbr.rel (%p286) target = $region12
      $region11: #{tpu_custom_call.1} parent=5 // pred_region
        %s290 = ssub.s32 %s16, 1
        // Predicated region
        $region13: #{tpu_custom_call.1} parent=11 // pred_check
          %p291 = pneg %p49
        $region14: #{tpu_custom_call.1} parent=11 // pred_check_branch
          %293 = sbr.rel (%p291) target = $region16
        $region15: #{tpu_custom_call.1} parent=11 // pred_region
          _
        $region16: #{tpu_custom_call.1} parent=11 // pred_fallthru
          _
        // Predicated region
        $region17: #{tpu_custom_call.1} parent=11 // pred_check
          %p294 = pneg %p206
        $region18: #{tpu_custom_call.1} parent=11 // pred_check_branch
          %296 = sbr.rel (%p294) target = $region20
        $region19: #{tpu_custom_call.1} parent=11 // pred_region
          _
        $region20: #{tpu_custom_call.1} parent=11 // pred_fallthru
          _
        // Predicated region
        $region21: #{tpu_custom_call.1} parent=11 // pred_check
          %p297 = pneg %p227
        $region22: #{tpu_custom_call.1} parent=11 // pred_check_branch
          %299 = sbr.rel (%p297) target = $region24
        $region23: #{tpu_custom_call.1} parent=11 // pred_region
          _
        $region24: #{tpu_custom_call.1} parent=11 // pred_fallthru
          _
        // Predicated region
        $region25: #{tpu_custom_call.1} parent=11 // pred_check
          %p300 = pneg %p248
        $region26: #{tpu_custom_call.1} parent=11 // pred_check_branch
          %302 = sbr.rel (%p300) target = $region28
        $region27: #{tpu_custom_call.1} parent=11 // pred_region
          _
        $region28: #{tpu_custom_call.1} parent=11 // pred_fallthru
          _
      $region12: #{tpu_custom_call.1} parent=5 // pred_fallthru
        _
      %p303 = scmp.lt.s32.totalorder %s16, 2
      // Predicated region
      $region29: #{tpu_custom_call.1} parent=5 // pred_check
        %p304 = pneg %p303
      $region30: #{tpu_custom_call.1} parent=5 // pred_check_branch
        %306 = sbr.rel (%p304) target = $region32
      $region31: #{tpu_custom_call.1} parent=5 // pred_region
        // Predicated region
        $region33: #{tpu_custom_call.1} parent=31 // pred_check
          %p307 = pneg %p71
        $region34: #{tpu_custom_call.1} parent=31 // pred_check_branch
          %309 = sbr.rel (%p307) target = $region36
        $region35: #{tpu_custom_call.1} parent=31 // pred_region
          %s310 = sand.u32 %s61, 1
          %s311 = sand.u32 %s61, 1
          %s312 = smul.addr %s311, 128
          %s313 = scalar_lea.vmem [#allocation3], %s312
          %s314 = smul.u32 2, %s24
          %s315 = smul.addr %s23, 16
          %s316 = smul.addr %s314, 32
          %s317 = sadd.s32 %s315, %s316
          %s318 = smul.addr %s317, 4
          %s319 = scalar_lea.vmem %s1, %s318
          // Predicated region
          $region37: #{tpu_custom_call.1} parent=35 // pred_check
            _
          $region38: #{tpu_custom_call.1} parent=35 // pred_check_branch
            %321 = sbr.rel (0) target = $region40
          $region39: #{tpu_custom_call.1} parent=35 // pred_region
            // Predicated region
            $region41: #{tpu_custom_call.1} parent=39 // pred_check
              _
            $region42: #{tpu_custom_call.1} parent=39 // pred_check_branch
              %323 = sbr.rel target = $region44
            $region43: #{tpu_custom_call.1} parent=39 // pred_region
              // Predicated region
              $region56: #{tpu_custom_call.1} parent=43 // pred_check
                _
              $region57: #{tpu_custom_call.1} parent=43 // pred_check_branch
                %401 = sbr.rel (0) target = $region59
              $region58: #{tpu_custom_call.1} parent=43 // pred_region
                loop: start=0, step=1, limit=1
                $region60: #{tpu_custom_call.1} parent=58 // loop_pre_header
                  _
                $region61: #{tpu_custom_call.1} parent=58 // loop_header
                  %s403 = sphi 0, %s407
                  %p404 = scmp.ge.s32.totalorder %s403, 1
                  %s408 = sphi %s319, %s319
                  %s409 = sphi %s313, %s313
                $region62: #{tpu_custom_call.1} parent=58 // loop_header_branch
                  %406 = sbr.rel (%p404) target = $region66
                $region63: #{tpu_custom_call.1} parent=58 // loop_body
                  _
                $region64: #{tpu_custom_call.1} parent=58 // loop_footer
                  %s407 = sadd.s32 1, %s403
                $region65: #{tpu_custom_call.1} parent=58 // loop_footer_branch
                  %402 = sbr.rel target = $region61
                $region66: #{tpu_custom_call.1} parent=58 // loop_exit
                  _
                %s411 = ssub.s32 16, 1
                loop: start=0, step=1, limit=1
                $region67: #{tpu_custom_call.1} parent=58 // loop_pre_header
                  _
                $region68: #{tpu_custom_call.1} parent=58 // loop_header
                  %s413 = sphi 0, %s417
                  %p414 = scmp.ge.s32.totalorder %s413, 1
                  %s418 = sphi %s319, %s319
                  %s419 = sphi %s313, %s313
                $region69: #{tpu_custom_call.1} parent=58 // loop_header_branch
                  %416 = sbr.rel (%p414) target = $region73
                $region70: #{tpu_custom_call.1} parent=58 // loop_body
                  %v420 = vld [vmem:[%s418] sm:%s411]
                  %421 = vst [vmem:[%s419] sm:%s411] %v420
                  %v422 = vld [vmem:[%s418 + $0x4] sm:%s411]
                  %423 = vst [vmem:[%s419 + $0x4] sm:%s411] %v422
                  %v424 = vld [vmem:[%s418 + $0x8] sm:%s411]
                  %425 = vst [vmem:[%s419 + $0x8] sm:%s411] %v424
                  %v426 = vld [vmem:[%s418 + $0xc] sm:%s411]
                  %427 = vst [vmem:[%s419 + $0xc] sm:%s411] %v426
                  %v428 = vld [vmem:[%s418 + $0x10] sm:%s411]
                  %429 = vst [vmem:[%s419 + $0x10] sm:%s411] %v428
                  %v430 = vld [vmem:[%s418 + $0x14] sm:%s411]
                  %431 = vst [vmem:[%s419 + $0x14] sm:%s411] %v430
                  %v432 = vld [vmem:[%s418 + $0x18] sm:%s411]
                  %433 = vst [vmem:[%s419 + $0x18] sm:%s411] %v432
                  %v434 = vld [vmem:[%s418 + $0x1c] sm:%s411]
                  %435 = vst [vmem:[%s419 + $0x1c] sm:%s411] %v434
                  %v436 = vld [vmem:[%s418 + $0x20] sm:%s411]
                  %437 = vst [vmem:[%s419 + $0x20] sm:%s411] %v436
                  %v438 = vld [vmem:[%s418 + $0x24] sm:%s411]
                  %439 = vst [vmem:[%s419 + $0x24] sm:%s411] %v438
                  %v440 = vld [vmem:[%s418 + $0x28] sm:%s411]
                  %441 = vst [vmem:[%s419 + $0x28] sm:%s411] %v440
                  %v442 = vld [vmem:[%s418 + $0x2c] sm:%s411]
                  %443 = vst [vmem:[%s419 + $0x2c] sm:%s411] %v442
                  %v444 = vld [vmem:[%s418 + $0x30] sm:%s411]
                  %445 = vst [vmem:[%s419 + $0x30] sm:%s411] %v444
                  %v446 = vld [vmem:[%s418 + $0x34] sm:%s411]
                  %447 = vst [vmem:[%s419 + $0x34] sm:%s411] %v446
                  %v448 = vld [vmem:[%s418 + $0x38] sm:%s411]
                  %449 = vst [vmem:[%s419 + $0x38] sm:%s411] %v448
                  %v450 = vld [vmem:[%s418 + $0x3c] sm:%s411]
                  %451 = vst [vmem:[%s419 + $0x3c] sm:%s411] %v450
                  %v452 = vld [vmem:[%s418 + $0x80] sm:%s411]
                  %453 = vst [vmem:[%s419 + $0x40] sm:%s411] %v452
                  %v454 = vld [vmem:[%s418 + $0x84] sm:%s411]
                  %455 = vst [vmem:[%s419 + $0x44] sm:%s411] %v454
                  %v456 = vld [vmem:[%s418 + $0x88] sm:%s411]
                  %457 = vst [vmem:[%s419 + $0x48] sm:%s411] %v456
                  %v458 = vld [vmem:[%s418 + $0x8c] sm:%s411]
                  %459 = vst [vmem:[%s419 + $0x4c] sm:%s411] %v458
                  %v460 = vld [vmem:[%s418 + $0x90] sm:%s411]
                  %461 = vst [vmem:[%s419 + $0x50] sm:%s411] %v460
                  %v462 = vld [vmem:[%s418 + $0x94] sm:%s411]
                  %463 = vst [vmem:[%s419 + $0x54] sm:%s411] %v462
                  %v464 = vld [vmem:[%s418 + $0x98] sm:%s411]
                  %465 = vst [vmem:[%s419 + $0x58] sm:%s411] %v464
                  %v466 = vld [vmem:[%s418 + $0x9c] sm:%s411]
                  %467 = vst [vmem:[%s419 + $0x5c] sm:%s411] %v466
                  %v468 = vld [vmem:[%s418 + $0xa0] sm:%s411]
                  %469 = vst [vmem:[%s419 + $0x60] sm:%s411] %v468
                  %v470 = vld [vmem:[%s418 + $0xa4] sm:%s411]
                  %471 = vst [vmem:[%s419 + $0x64] sm:%s411] %v470
                  %v472 = vld [vmem:[%s418 + $0xa8] sm:%s411]
                  %473 = vst [vmem:[%s419 + $0x68] sm:%s411] %v472
                  %v474 = vld [vmem:[%s418 + $0xac] sm:%s411]
                  %475 = vst [vmem:[%s419 + $0x6c] sm:%s411] %v474
                  %v476 = vld [vmem:[%s418 + $0xb0] sm:%s411]
                  %477 = vst [vmem:[%s419 + $0x70] sm:%s411] %v476
                  %v478 = vld [vmem:[%s418 + $0xb4] sm:%s411]
                  %479 = vst [vmem:[%s419 + $0x74] sm:%s411] %v478
                  %v480 = vld [vmem:[%s418 + $0xb8] sm:%s411]
                  %481 = vst [vmem:[%s419 + $0x78] sm:%s411] %v480
                  %v482 = vld [vmem:[%s418 + $0xbc] sm:%s411]
                  %483 = vst [vmem:[%s419 + $0x7c] sm:%s411] %v482
                $region71: #{tpu_custom_call.1} parent=58 // loop_footer
                  %s417 = sadd.s32 1, %s413
                $region72: #{tpu_custom_call.1} parent=58 // loop_footer_branch
                  %412 = sbr.rel target = $region68
                $region73: #{tpu_custom_call.1} parent=58 // loop_exit
                  _
              $region59: #{tpu_custom_call.1} parent=43 // pred_fallthru
                _
            $region44: #{tpu_custom_call.1} parent=39 // pred_fallthru
              _
            // Predicated region
            $region45: #{tpu_custom_call.1} parent=39 // pred_check
              _
            $region46: #{tpu_custom_call.1} parent=39 // pred_check_branch
              %325 = sbr.rel (0) target = $region48
            $region47: #{tpu_custom_call.1} parent=39 // pred_region
              %s327 = ssub.s32 16, 1
              loop: start=0, step=1, limit=1
              $region49: #{tpu_custom_call.1} parent=47 // loop_pre_header
                _
              $region50: #{tpu_custom_call.1} parent=47 // loop_header
                %s329 = sphi 0, %s333
                %p330 = scmp.ge.s32.totalorder %s329, 1
                %s334 = sphi %s319, %s319
                %s335 = sphi %s313, %s313
              $region51: #{tpu_custom_call.1} parent=47 // loop_header_branch
                %332 = sbr.rel (%p330) target = $region55
              $region52: #{tpu_custom_call.1} parent=47 // loop_body
                %v336 = vld [vmem:[%s334] sm:%s327]
                %337 = vst [vmem:[%s335] sm:%s327] %v336
                %v338 = vld [vmem:[%s334 + $0x4] sm:%s327]
                %339 = vst [vmem:[%s335 + $0x4] sm:%s327] %v338
                %v340 = vld [vmem:[%s334 + $0x8] sm:%s327]
                %341 = vst [vmem:[%s335 + $0x8] sm:%s327] %v340
                %v342 = vld [vmem:[%s334 + $0xc] sm:%s327]
                %343 = vst [vmem:[%s335 + $0xc] sm:%s327] %v342
                %v344 = vld [vmem:[%s334 + $0x10] sm:%s327]
                %345 = vst [vmem:[%s335 + $0x10] sm:%s327] %v344
                %v346 = vld [vmem:[%s334 + $0x14] sm:%s327]
                %347 = vst [vmem:[%s335 + $0x14] sm:%s327] %v346
                %v348 = vld [vmem:[%s334 + $0x18] sm:%s327]
                %349 = vst [vmem:[%s335 + $0x18] sm:%s327] %v348
                %v350 = vld [vmem:[%s334 + $0x1c] sm:%s327]
                %351 = vst [vmem:[%s335 + $0x1c] sm:%s327] %v350
                %v352 = vld [vmem:[%s334 + $0x20] sm:%s327]
                %353 = vst [vmem:[%s335 + $0x20] sm:%s327] %v352
                %v354 = vld [vmem:[%s334 + $0x24] sm:%s327]
                %355 = vst [vmem:[%s335 + $0x24] sm:%s327] %v354
                %v356 = vld [vmem:[%s334 + $0x28] sm:%s327]
                %357 = vst [vmem:[%s335 + $0x28] sm:%s327] %v356
                %v358 = vld [vmem:[%s334 + $0x2c] sm:%s327]
                %359 = vst [vmem:[%s335 + $0x2c] sm:%s327] %v358
                %v360 = vld [vmem:[%s334 + $0x30] sm:%s327]
                %361 = vst [vmem:[%s335 + $0x30] sm:%s327] %v360
                %v362 = vld [vmem:[%s334 + $0x34] sm:%s327]
                %363 = vst [vmem:[%s335 + $0x34] sm:%s327] %v362
                %v364 = vld [vmem:[%s334 + $0x38] sm:%s327]
                %365 = vst [vmem:[%s335 + $0x38] sm:%s327] %v364
                %v366 = vld [vmem:[%s334 + $0x3c] sm:%s327]
                %367 = vst [vmem:[%s335 + $0x3c] sm:%s327] %v366
                %v368 = vld [vmem:[%s334 + $0x80] sm:%s327]
                %369 = vst [vmem:[%s335 + $0x40] sm:%s327] %v368
                %v370 = vld [vmem:[%s334 + $0x84] sm:%s327]
                %371 = vst [vmem:[%s335 + $0x44] sm:%s327] %v370
                %v372 = vld [vmem:[%s334 + $0x88] sm:%s327]
                %373 = vst [vmem:[%s335 + $0x48] sm:%s327] %v372
                %v374 = vld [vmem:[%s334 + $0x8c] sm:%s327]
                %375 = vst [vmem:[%s335 + $0x4c] sm:%s327] %v374
                %v376 = vld [vmem:[%s334 + $0x90] sm:%s327]
                %377 = vst [vmem:[%s335 + $0x50] sm:%s327] %v376
                %v378 = vld [vmem:[%s334 + $0x94] sm:%s327]
                %379 = vst [vmem:[%s335 + $0x54] sm:%s327] %v378
                %v380 = vld [vmem:[%s334 + $0x98] sm:%s327]
                %381 = vst [vmem:[%s335 + $0x58] sm:%s327] %v380
                %v382 = vld [vmem:[%s334 + $0x9c] sm:%s327]
                %383 = vst [vmem:[%s335 + $0x5c] sm:%s327] %v382
                %v384 = vld [vmem:[%s334 + $0xa0] sm:%s327]
                %385 = vst [vmem:[%s335 + $0x60] sm:%s327] %v384
                %v386 = vld [vmem:[%s334 + $0xa4] sm:%s327]
                %387 = vst [vmem:[%s335 + $0x64] sm:%s327] %v386
                %v388 = vld [vmem:[%s334 + $0xa8] sm:%s327]
                %389 = vst [vmem:[%s335 + $0x68] sm:%s327] %v388
                %v390 = vld [vmem:[%s334 + $0xac] sm:%s327]
                %391 = vst [vmem:[%s335 + $0x6c] sm:%s327] %v390
                %v392 = vld [vmem:[%s334 + $0xb0] sm:%s327]
                %393 = vst [vmem:[%s335 + $0x70] sm:%s327] %v392
                %v394 = vld [vmem:[%s334 + $0xb4] sm:%s327]
                %395 = vst [vmem:[%s335 + $0x74] sm:%s327] %v394
                %v396 = vld [vmem:[%s334 + $0xb8] sm:%s327]
                %397 = vst [vmem:[%s335 + $0x78] sm:%s327] %v396
                %v398 = vld [vmem:[%s334 + $0xbc] sm:%s327]
                %399 = vst [vmem:[%s335 + $0x7c] sm:%s327] %v398
              $region53: #{tpu_custom_call.1} parent=47 // loop_footer
                %s333 = sadd.s32 1, %s329
              $region54: #{tpu_custom_call.1} parent=47 // loop_footer_branch
                %328 = sbr.rel target = $region50
              $region55: #{tpu_custom_call.1} parent=47 // loop_exit
                _
            $region48: #{tpu_custom_call.1} parent=39 // pred_fallthru
              _
          $region40: #{tpu_custom_call.1} parent=35 // pred_fallthru
            _
          %484 = vnop
        $region36: #{tpu_custom_call.1} parent=31 // pred_fallthru
          _
        // Predicated region
        $region74: #{tpu_custom_call.1} parent=31 // pred_check
          %p485 = pneg %p99
        $region75: #{tpu_custom_call.1} parent=31 // pred_check_branch
          %487 = sbr.rel (%p485) target = $region77
        $region76: #{tpu_custom_call.1} parent=31 // pred_region
          %s488 = sand.u32 %s89, 1
          %s489 = sand.u32 %s89, 1
          %s490 = smul.addr %s489, 128
          %s491 = scalar_lea.vmem [#allocation4], %s490
          %s492 = smul.u32 2, %s24
          %s493 = smul.addr %s23, 16
          %s494 = smul.addr %s492, 32
          %s495 = sadd.s32 %s493, %s494
          %s496 = smul.addr %s495, 4
          %s497 = scalar_lea.vmem %s2, %s496
          // Predicated region
          $region78: #{tpu_custom_call.1} parent=76 // pred_check
            _
          $region79: #{tpu_custom_call.1} parent=76 // pred_check_branch
            %499 = sbr.rel (0) target = $region81
          $region80: #{tpu_custom_call.1} parent=76 // pred_region
            // Predicated region
            $region82: #{tpu_custom_call.1} parent=80 // pred_check
              _
            $region83: #{tpu_custom_call.1} parent=80 // pred_check_branch
              %501 = sbr.rel target = $region85
            $region84: #{tpu_custom_call.1} parent=80 // pred_region
              // Predicated region
              $region97: #{tpu_custom_call.1} parent=84 // pred_check
                _
              $region98: #{tpu_custom_call.1} parent=84 // pred_check_branch
                %579 = sbr.rel (0) target = $region100
              $region99: #{tpu_custom_call.1} parent=84 // pred_region
                loop: start=0, step=1, limit=1
                $region101: #{tpu_custom_call.1} parent=99 // loop_pre_header
                  _
                $region102: #{tpu_custom_call.1} parent=99 // loop_header
                  %s581 = sphi 0, %s585
                  %p582 = scmp.ge.s32.totalorder %s581, 1
                  %s586 = sphi %s497, %s497
                  %s587 = sphi %s491, %s491
                $region103: #{tpu_custom_call.1} parent=99 // loop_header_branch
                  %584 = sbr.rel (%p582) target = $region107
                $region104: #{tpu_custom_call.1} parent=99 // loop_body
                  _
                $region105: #{tpu_custom_call.1} parent=99 // loop_footer
                  %s585 = sadd.s32 1, %s581
                $region106: #{tpu_custom_call.1} parent=99 // loop_footer_branch
                  %580 = sbr.rel target = $region102
                $region107: #{tpu_custom_call.1} parent=99 // loop_exit
                  _
                %s589 = ssub.s32 16, 1
                loop: start=0, step=1, limit=1
                $region108: #{tpu_custom_call.1} parent=99 // loop_pre_header
                  _
                $region109: #{tpu_custom_call.1} parent=99 // loop_header
                  %s591 = sphi 0, %s595
                  %p592 = scmp.ge.s32.totalorder %s591, 1
                  %s596 = sphi %s497, %s497
                  %s597 = sphi %s491, %s491
                $region110: #{tpu_custom_call.1} parent=99 // loop_header_branch
                  %594 = sbr.rel (%p592) target = $region114
                $region111: #{tpu_custom_call.1} parent=99 // loop_body
                  %v598 = vld [vmem:[%s596] sm:%s589]
                  %599 = vst [vmem:[%s597] sm:%s589] %v598
                  %v600 = vld [vmem:[%s596 + $0x4] sm:%s589]
                  %601 = vst [vmem:[%s597 + $0x4] sm:%s589] %v600
                  %v602 = vld [vmem:[%s596 + $0x8] sm:%s589]
                  %603 = vst [vmem:[%s597 + $0x8] sm:%s589] %v602
                  %v604 = vld [vmem:[%s596 + $0xc] sm:%s589]
                  %605 = vst [vmem:[%s597 + $0xc] sm:%s589] %v604
                  %v606 = vld [vmem:[%s596 + $0x10] sm:%s589]
                  %607 = vst [vmem:[%s597 + $0x10] sm:%s589] %v606
                  %v608 = vld [vmem:[%s596 + $0x14] sm:%s589]
                  %609 = vst [vmem:[%s597 + $0x14] sm:%s589] %v608
                  %v610 = vld [vmem:[%s596 + $0x18] sm:%s589]
                  %611 = vst [vmem:[%s597 + $0x18] sm:%s589] %v610
                  %v612 = vld [vmem:[%s596 + $0x1c] sm:%s589]
                  %613 = vst [vmem:[%s597 + $0x1c] sm:%s589] %v612
                  %v614 = vld [vmem:[%s596 + $0x20] sm:%s589]
                  %615 = vst [vmem:[%s597 + $0x20] sm:%s589] %v614
                  %v616 = vld [vmem:[%s596 + $0x24] sm:%s589]
                  %617 = vst [vmem:[%s597 + $0x24] sm:%s589] %v616
                  %v618 = vld [vmem:[%s596 + $0x28] sm:%s589]
                  %619 = vst [vmem:[%s597 + $0x28] sm:%s589] %v618
                  %v620 = vld [vmem:[%s596 + $0x2c] sm:%s589]
                  %621 = vst [vmem:[%s597 + $0x2c] sm:%s589] %v620
                  %v622 = vld [vmem:[%s596 + $0x30] sm:%s589]
                  %623 = vst [vmem:[%s597 + $0x30] sm:%s589] %v622
                  %v624 = vld [vmem:[%s596 + $0x34] sm:%s589]
                  %625 = vst [vmem:[%s597 + $0x34] sm:%s589] %v624
                  %v626 = vld [vmem:[%s596 + $0x38] sm:%s589]
                  %627 = vst [vmem:[%s597 + $0x38] sm:%s589] %v626
                  %v628 = vld [vmem:[%s596 + $0x3c] sm:%s589]
                  %629 = vst [vmem:[%s597 + $0x3c] sm:%s589] %v628
                  %v630 = vld [vmem:[%s596 + $0x80] sm:%s589]
                  %631 = vst [vmem:[%s597 + $0x40] sm:%s589] %v630
                  %v632 = vld [vmem:[%s596 + $0x84] sm:%s589]
                  %633 = vst [vmem:[%s597 + $0x44] sm:%s589] %v632
                  %v634 = vld [vmem:[%s596 + $0x88] sm:%s589]
                  %635 = vst [vmem:[%s597 + $0x48] sm:%s589] %v634
                  %v636 = vld [vmem:[%s596 + $0x8c] sm:%s589]
                  %637 = vst [vmem:[%s597 + $0x4c] sm:%s589] %v636
                  %v638 = vld [vmem:[%s596 + $0x90] sm:%s589]
                  %639 = vst [vmem:[%s597 + $0x50] sm:%s589] %v638
                  %v640 = vld [vmem:[%s596 + $0x94] sm:%s589]
                  %641 = vst [vmem:[%s597 + $0x54] sm:%s589] %v640
                  %v642 = vld [vmem:[%s596 + $0x98] sm:%s589]
                  %643 = vst [vmem:[%s597 + $0x58] sm:%s589] %v642
                  %v644 = vld [vmem:[%s596 + $0x9c] sm:%s589]
                  %645 = vst [vmem:[%s597 + $0x5c] sm:%s589] %v644
                  %v646 = vld [vmem:[%s596 + $0xa0] sm:%s589]
                  %647 = vst [vmem:[%s597 + $0x60] sm:%s589] %v646
                  %v648 = vld [vmem:[%s596 + $0xa4] sm:%s589]
                  %649 = vst [vmem:[%s597 + $0x64] sm:%s589] %v648
                  %v650 = vld [vmem:[%s596 + $0xa8] sm:%s589]
                  %651 = vst [vmem:[%s597 + $0x68] sm:%s589] %v650
                  %v652 = vld [vmem:[%s596 + $0xac] sm:%s589]
                  %653 = vst [vmem:[%s597 + $0x6c] sm:%s589] %v652
                  %v654 = vld [vmem:[%s596 + $0xb0] sm:%s589]
                  %655 = vst [vmem:[%s597 + $0x70] sm:%s589] %v654
                  %v656 = vld [vmem:[%s596 + $0xb4] sm:%s589]
                  %657 = vst [vmem:[%s597 + $0x74] sm:%s589] %v656
                  %v658 = vld [vmem:[%s596 + $0xb8] sm:%s589]
                  %659 = vst [vmem:[%s597 + $0x78] sm:%s589] %v658
                  %v660 = vld [vmem:[%s596 + $0xbc] sm:%s589]
                  %661 = vst [vmem:[%s597 + $0x7c] sm:%s589] %v660
                $region112: #{tpu_custom_call.1} parent=99 // loop_footer
                  %s595 = sadd.s32 1, %s591
                $region113: #{tpu_custom_call.1} parent=99 // loop_footer_branch
                  %590 = sbr.rel target = $region109
                $region114: #{tpu_custom_call.1} parent=99 // loop_exit
                  _
              $region100: #{tpu_custom_call.1} parent=84 // pred_fallthru
                _
            $region85: #{tpu_custom_call.1} parent=80 // pred_fallthru
              _
            // Predicated region
            $region86: #{tpu_custom_call.1} parent=80 // pred_check
              _
            $region87: #{tpu_custom_call.1} parent=80 // pred_check_branch
              %503 = sbr.rel (0) target = $region89
            $region88: #{tpu_custom_call.1} parent=80 // pred_region
              %s505 = ssub.s32 16, 1
              loop: start=0, step=1, limit=1
              $region90: #{tpu_custom_call.1} parent=88 // loop_pre_header
                _
              $region91: #{tpu_custom_call.1} parent=88 // loop_header
                %s507 = sphi 0, %s511
                %p508 = scmp.ge.s32.totalorder %s507, 1
                %s512 = sphi %s497, %s497
                %s513 = sphi %s491, %s491
              $region92: #{tpu_custom_call.1} parent=88 // loop_header_branch
                %510 = sbr.rel (%p508) target = $region96
              $region93: #{tpu_custom_call.1} parent=88 // loop_body
                %v514 = vld [vmem:[%s512] sm:%s505]
                %515 = vst [vmem:[%s513] sm:%s505] %v514
                %v516 = vld [vmem:[%s512 + $0x4] sm:%s505]
                %517 = vst [vmem:[%s513 + $0x4] sm:%s505] %v516
                %v518 = vld [vmem:[%s512 + $0x8] sm:%s505]
                %519 = vst [vmem:[%s513 + $0x8] sm:%s505] %v518
                %v520 = vld [vmem:[%s512 + $0xc] sm:%s505]
                %521 = vst [vmem:[%s513 + $0xc] sm:%s505] %v520
                %v522 = vld [vmem:[%s512 + $0x10] sm:%s505]
                %523 = vst [vmem:[%s513 + $0x10] sm:%s505] %v522
                %v524 = vld [vmem:[%s512 + $0x14] sm:%s505]
                %525 = vst [vmem:[%s513 + $0x14] sm:%s505] %v524
                %v526 = vld [vmem:[%s512 + $0x18] sm:%s505]
                %527 = vst [vmem:[%s513 + $0x18] sm:%s505] %v526
                %v528 = vld [vmem:[%s512 + $0x1c] sm:%s505]
                %529 = vst [vmem:[%s513 + $0x1c] sm:%s505] %v528
                %v530 = vld [vmem:[%s512 + $0x20] sm:%s505]
                %531 = vst [vmem:[%s513 + $0x20] sm:%s505] %v530
                %v532 = vld [vmem:[%s512 + $0x24] sm:%s505]
                %533 = vst [vmem:[%s513 + $0x24] sm:%s505] %v532
                %v534 = vld [vmem:[%s512 + $0x28] sm:%s505]
                %535 = vst [vmem:[%s513 + $0x28] sm:%s505] %v534
                %v536 = vld [vmem:[%s512 + $0x2c] sm:%s505]
                %537 = vst [vmem:[%s513 + $0x2c] sm:%s505] %v536
                %v538 = vld [vmem:[%s512 + $0x30] sm:%s505]
                %539 = vst [vmem:[%s513 + $0x30] sm:%s505] %v538
                %v540 = vld [vmem:[%s512 + $0x34] sm:%s505]
                %541 = vst [vmem:[%s513 + $0x34] sm:%s505] %v540
                %v542 = vld [vmem:[%s512 + $0x38] sm:%s505]
                %543 = vst [vmem:[%s513 + $0x38] sm:%s505] %v542
                %v544 = vld [vmem:[%s512 + $0x3c] sm:%s505]
                %545 = vst [vmem:[%s513 + $0x3c] sm:%s505] %v544
                %v546 = vld [vmem:[%s512 + $0x80] sm:%s505]
                %547 = vst [vmem:[%s513 + $0x40] sm:%s505] %v546
                %v548 = vld [vmem:[%s512 + $0x84] sm:%s505]
                %549 = vst [vmem:[%s513 + $0x44] sm:%s505] %v548
                %v550 = vld [vmem:[%s512 + $0x88] sm:%s505]
                %551 = vst [vmem:[%s513 + $0x48] sm:%s505] %v550
                %v552 = vld [vmem:[%s512 + $0x8c] sm:%s505]
                %553 = vst [vmem:[%s513 + $0x4c] sm:%s505] %v552
                %v554 = vld [vmem:[%s512 + $0x90] sm:%s505]
                %555 = vst [vmem:[%s513 + $0x50] sm:%s505] %v554
                %v556 = vld [vmem:[%s512 + $0x94] sm:%s505]
                %557 = vst [vmem:[%s513 + $0x54] sm:%s505] %v556
                %v558 = vld [vmem:[%s512 + $0x98] sm:%s505]
                %559 = vst [vmem:[%s513 + $0x58] sm:%s505] %v558
                %v560 = vld [vmem:[%s512 + $0x9c] sm:%s505]
                %561 = vst [vmem:[%s513 + $0x5c] sm:%s505] %v560
                %v562 = vld [vmem:[%s512 + $0xa0] sm:%s505]
                %563 = vst [vmem:[%s513 + $0x60] sm:%s505] %v562
                %v564 = vld [vmem:[%s512 + $0xa4] sm:%s505]
                %565 = vst [vmem:[%s513 + $0x64] sm:%s505] %v564
                %v566 = vld [vmem:[%s512 + $0xa8] sm:%s505]
                %567 = vst [vmem:[%s513 + $0x68] sm:%s505] %v566
                %v568 = vld [vmem:[%s512 + $0xac] sm:%s505]
                %569 = vst [vmem:[%s513 + $0x6c] sm:%s505] %v568
                %v570 = vld [vmem:[%s512 + $0xb0] sm:%s505]
                %571 = vst [vmem:[%s513 + $0x70] sm:%s505] %v570
                %v572 = vld [vmem:[%s512 + $0xb4] sm:%s505]
                %573 = vst [vmem:[%s513 + $0x74] sm:%s505] %v572
                %v574 = vld [vmem:[%s512 + $0xb8] sm:%s505]
                %575 = vst [vmem:[%s513 + $0x78] sm:%s505] %v574
                %v576 = vld [vmem:[%s512 + $0xbc] sm:%s505]
                %577 = vst [vmem:[%s513 + $0x7c] sm:%s505] %v576
              $region94: #{tpu_custom_call.1} parent=88 // loop_footer
                %s511 = sadd.s32 1, %s507
              $region95: #{tpu_custom_call.1} parent=88 // loop_footer_branch
                %506 = sbr.rel target = $region91
              $region96: #{tpu_custom_call.1} parent=88 // loop_exit
                _
            $region89: #{tpu_custom_call.1} parent=80 // pred_fallthru
              _
          $region81: #{tpu_custom_call.1} parent=76 // pred_fallthru
            _
          %662 = vnop
        $region77: #{tpu_custom_call.1} parent=31 // pred_fallthru
          _
        // Predicated region
        $region115: #{tpu_custom_call.1} parent=31 // pred_check
          %p663 = pneg %p127
        $region116: #{tpu_custom_call.1} parent=31 // pred_check_branch
          %665 = sbr.rel (%p663) target = $region118
        $region117: #{tpu_custom_call.1} parent=31 // pred_region
          %s666 = sand.u32 %s117, 1
          %s667 = sand.u32 %s117, 1
          %s668 = smul.addr %s667, 256
          %s669 = scalar_lea.vmem [#allocation5], %s668
          %s670 = smul.u32 2, %s24
          %s671 = smul.addr %s23, 16
          %s672 = smul.addr %s670, 32
          %s673 = sadd.s32 %s671, %s672
          %s674 = smul.addr %s673, 8
          %s675 = scalar_lea.vmem %s3, %s674
          // Predicated region
          $region119: #{tpu_custom_call.1} parent=117 // pred_check
            _
          $region120: #{tpu_custom_call.1} parent=117 // pred_check_branch
            %677 = sbr.rel (0) target = $region122
          $region121: #{tpu_custom_call.1} parent=117 // pred_region
            // Predicated region
            $region123: #{tpu_custom_call.1} parent=121 // pred_check
              _
            $region124: #{tpu_custom_call.1} parent=121 // pred_check_branch
              %679 = sbr.rel (0) target = $region126
            $region125: #{tpu_custom_call.1} parent=121 // pred_region
              // Predicated region
              $region138: #{tpu_custom_call.1} parent=125 // pred_check
                _
              $region139: #{tpu_custom_call.1} parent=125 // pred_check_branch
                %757 = sbr.rel (0) target = $region141
              $region140: #{tpu_custom_call.1} parent=125 // pred_region
                loop: start=0, step=1, limit=1
                $region142: #{tpu_custom_call.1} parent=140 // loop_pre_header
                  _
                $region143: #{tpu_custom_call.1} parent=140 // loop_header
                  %s759 = sphi 0, %s763
                  %p760 = scmp.ge.s32.totalorder %s759, 1
                  %s764 = sphi %s675, %s675
                  %s765 = sphi %s669, %s669
                $region144: #{tpu_custom_call.1} parent=140 // loop_header_branch
                  %762 = sbr.rel (%p760) target = $region148
                $region145: #{tpu_custom_call.1} parent=140 // loop_body
                  %v766 = vld [vmem:[%s764] sm:$0xff]
                  %767 = vst [vmem:[%s765] sm:$0xff] %v766
                  %v768 = vld [vmem:[%s764 + $0x8] sm:$0xff]
                  %769 = vst [vmem:[%s765 + $0x8] sm:$0xff] %v768
                  %v770 = vld [vmem:[%s764 + $0x10] sm:$0xff]
                  %771 = vst [vmem:[%s765 + $0x10] sm:$0xff] %v770
                  %v772 = vld [vmem:[%s764 + $0x18] sm:$0xff]
                  %773 = vst [vmem:[%s765 + $0x18] sm:$0xff] %v772
                  %v774 = vld [vmem:[%s764 + $0x20] sm:$0xff]
                  %775 = vst [vmem:[%s765 + $0x20] sm:$0xff] %v774
                  %v776 = vld [vmem:[%s764 + $0x28] sm:$0xff]
                  %777 = vst [vmem:[%s765 + $0x28] sm:$0xff] %v776
                  %v778 = vld [vmem:[%s764 + $0x30] sm:$0xff]
                  %779 = vst [vmem:[%s765 + $0x30] sm:$0xff] %v778
                  %v780 = vld [vmem:[%s764 + $0x38] sm:$0xff]
                  %781 = vst [vmem:[%s765 + $0x38] sm:$0xff] %v780
                  %v782 = vld [vmem:[%s764 + $0x40] sm:$0xff]
                  %783 = vst [vmem:[%s765 + $0x40] sm:$0xff] %v782
                  %v784 = vld [vmem:[%s764 + $0x48] sm:$0xff]
                  %785 = vst [vmem:[%s765 + $0x48] sm:$0xff] %v784
                  %v786 = vld [vmem:[%s764 + $0x50] sm:$0xff]
                  %787 = vst [vmem:[%s765 + $0x50] sm:$0xff] %v786
                  %v788 = vld [vmem:[%s764 + $0x58] sm:$0xff]
                  %789 = vst [vmem:[%s765 + $0x58] sm:$0xff] %v788
                  %v790 = vld [vmem:[%s764 + $0x60] sm:$0xff]
                  %791 = vst [vmem:[%s765 + $0x60] sm:$0xff] %v790
                  %v792 = vld [vmem:[%s764 + $0x68] sm:$0xff]
                  %793 = vst [vmem:[%s765 + $0x68] sm:$0xff] %v792
                  %v794 = vld [vmem:[%s764 + $0x70] sm:$0xff]
                  %795 = vst [vmem:[%s765 + $0x70] sm:$0xff] %v794
                  %v796 = vld [vmem:[%s764 + $0x78] sm:$0xff]
                  %797 = vst [vmem:[%s765 + $0x78] sm:$0xff] %v796
                  %v798 = vld [vmem:[%s764 + $0x100] sm:$0xff]
                  %799 = vst [vmem:[%s765 + $0x80] sm:$0xff] %v798
                  %v800 = vld [vmem:[%s764 + $0x108] sm:$0xff]
                  %801 = vst [vmem:[%s765 + $0x88] sm:$0xff] %v800
                  %v802 = vld [vmem:[%s764 + $0x110] sm:$0xff]
                  %803 = vst [vmem:[%s765 + $0x90] sm:$0xff] %v802
                  %v804 = vld [vmem:[%s764 + $0x118] sm:$0xff]
                  %805 = vst [vmem:[%s765 + $0x98] sm:$0xff] %v804
                  %v806 = vld [vmem:[%s764 + $0x120] sm:$0xff]
                  %807 = vst [vmem:[%s765 + $0xa0] sm:$0xff] %v806
                  %v808 = vld [vmem:[%s764 + $0x128] sm:$0xff]
                  %809 = vst [vmem:[%s765 + $0xa8] sm:$0xff] %v808
                  %v810 = vld [vmem:[%s764 + $0x130] sm:$0xff]
                  %811 = vst [vmem:[%s765 + $0xb0] sm:$0xff] %v810
                  %v812 = vld [vmem:[%s764 + $0x138] sm:$0xff]
                  %813 = vst [vmem:[%s765 + $0xb8] sm:$0xff] %v812
                  %v814 = vld [vmem:[%s764 + $0x140] sm:$0xff]
                  %815 = vst [vmem:[%s765 + $0xc0] sm:$0xff] %v814
                  %v816 = vld [vmem:[%s764 + $0x148] sm:$0xff]
                  %817 = vst [vmem:[%s765 + $0xc8] sm:$0xff] %v816
                  %v818 = vld [vmem:[%s764 + $0x150] sm:$0xff]
                  %819 = vst [vmem:[%s765 + $0xd0] sm:$0xff] %v818
                  %v820 = vld [vmem:[%s764 + $0x158] sm:$0xff]
                  %821 = vst [vmem:[%s765 + $0xd8] sm:$0xff] %v820
                  %v822 = vld [vmem:[%s764 + $0x160] sm:$0xff]
                  %823 = vst [vmem:[%s765 + $0xe0] sm:$0xff] %v822
                  %v824 = vld [vmem:[%s764 + $0x168] sm:$0xff]
                  %825 = vst [vmem:[%s765 + $0xe8] sm:$0xff] %v824
                  %v826 = vld [vmem:[%s764 + $0x170] sm:$0xff]
                  %827 = vst [vmem:[%s765 + $0xf0] sm:$0xff] %v826
                  %v828 = vld [vmem:[%s764 + $0x178] sm:$0xff]
                  %829 = vst [vmem:[%s765 + $0xf8] sm:$0xff] %v828
                $region146: #{tpu_custom_call.1} parent=140 // loop_footer
                  %s763 = sadd.s32 1, %s759
                $region147: #{tpu_custom_call.1} parent=140 // loop_footer_branch
                  %758 = sbr.rel target = $region143
                $region148: #{tpu_custom_call.1} parent=140 // loop_exit
                  _
              $region141: #{tpu_custom_call.1} parent=125 // pred_fallthru
                _
              // Predicated region
              $region149: #{tpu_custom_call.1} parent=125 // pred_check
                _
              $region150: #{tpu_custom_call.1} parent=125 // pred_check_branch
                %831 = sbr.rel target = $region152
              $region151: #{tpu_custom_call.1} parent=125 // pred_region
                _
              $region152: #{tpu_custom_call.1} parent=125 // pred_fallthru
                _
            $region126: #{tpu_custom_call.1} parent=121 // pred_fallthru
              _
            // Predicated region
            $region127: #{tpu_custom_call.1} parent=121 // pred_check
              _
            $region128: #{tpu_custom_call.1} parent=121 // pred_check_branch
              %681 = sbr.rel target = $region130
            $region129: #{tpu_custom_call.1} parent=121 // pred_region
              %s683 = ssub.s32 256, 1
              loop: start=0, step=1, limit=1
              $region131: #{tpu_custom_call.1} parent=129 // loop_pre_header
                _
              $region132: #{tpu_custom_call.1} parent=129 // loop_header
                %s685 = sphi 0, %s689
                %p686 = scmp.ge.s32.totalorder %s685, 1
                %s690 = sphi %s675, %s675
                %s691 = sphi %s669, %s669
              $region133: #{tpu_custom_call.1} parent=129 // loop_header_branch
                %688 = sbr.rel (%p686) target = $region137
              $region134: #{tpu_custom_call.1} parent=129 // loop_body
                %v692 = vld [vmem:[%s690] sm:%s683]
                %693 = vst [vmem:[%s691] sm:%s683] %v692
                %v694 = vld [vmem:[%s690 + $0x8] sm:%s683]
                %695 = vst [vmem:[%s691 + $0x8] sm:%s683] %v694
                %v696 = vld [vmem:[%s690 + $0x10] sm:%s683]
                %697 = vst [vmem:[%s691 + $0x10] sm:%s683] %v696
                %v698 = vld [vmem:[%s690 + $0x18] sm:%s683]
                %699 = vst [vmem:[%s691 + $0x18] sm:%s683] %v698
                %v700 = vld [vmem:[%s690 + $0x20] sm:%s683]
                %701 = vst [vmem:[%s691 + $0x20] sm:%s683] %v700
                %v702 = vld [vmem:[%s690 + $0x28] sm:%s683]
                %703 = vst [vmem:[%s691 + $0x28] sm:%s683] %v702
                %v704 = vld [vmem:[%s690 + $0x30] sm:%s683]
                %705 = vst [vmem:[%s691 + $0x30] sm:%s683] %v704
                %v706 = vld [vmem:[%s690 + $0x38] sm:%s683]
                %707 = vst [vmem:[%s691 + $0x38] sm:%s683] %v706
                %v708 = vld [vmem:[%s690 + $0x40] sm:%s683]
                %709 = vst [vmem:[%s691 + $0x40] sm:%s683] %v708
                %v710 = vld [vmem:[%s690 + $0x48] sm:%s683]
                %711 = vst [vmem:[%s691 + $0x48] sm:%s683] %v710
                %v712 = vld [vmem:[%s690 + $0x50] sm:%s683]
                %713 = vst [vmem:[%s691 + $0x50] sm:%s683] %v712
                %v714 = vld [vmem:[%s690 + $0x58] sm:%s683]
                %715 = vst [vmem:[%s691 + $0x58] sm:%s683] %v714
                %v716 = vld [vmem:[%s690 + $0x60] sm:%s683]
                %717 = vst [vmem:[%s691 + $0x60] sm:%s683] %v716
                %v718 = vld [vmem:[%s690 + $0x68] sm:%s683]
                %719 = vst [vmem:[%s691 + $0x68] sm:%s683] %v718
                %v720 = vld [vmem:[%s690 + $0x70] sm:%s683]
                %721 = vst [vmem:[%s691 + $0x70] sm:%s683] %v720
                %v722 = vld [vmem:[%s690 + $0x78] sm:%s683]
                %723 = vst [vmem:[%s691 + $0x78] sm:%s683] %v722
                %v724 = vld [vmem:[%s690 + $0x100] sm:%s683]
                %725 = vst [vmem:[%s691 + $0x80] sm:%s683] %v724
                %v726 = vld [vmem:[%s690 + $0x108] sm:%s683]
                %727 = vst [vmem:[%s691 + $0x88] sm:%s683] %v726
                %v728 = vld [vmem:[%s690 + $0x110] sm:%s683]
                %729 = vst [vmem:[%s691 + $0x90] sm:%s683] %v728
                %v730 = vld [vmem:[%s690 + $0x118] sm:%s683]
                %731 = vst [vmem:[%s691 + $0x98] sm:%s683] %v730
                %v732 = vld [vmem:[%s690 + $0x120] sm:%s683]
                %733 = vst [vmem:[%s691 + $0xa0] sm:%s683] %v732
                %v734 = vld [vmem:[%s690 + $0x128] sm:%s683]
                %735 = vst [vmem:[%s691 + $0xa8] sm:%s683] %v734
                %v736 = vld [vmem:[%s690 + $0x130] sm:%s683]
                %737 = vst [vmem:[%s691 + $0xb0] sm:%s683] %v736
                %v738 = vld [vmem:[%s690 + $0x138] sm:%s683]
                %739 = vst [vmem:[%s691 + $0xb8] sm:%s683] %v738
                %v740 = vld [vmem:[%s690 + $0x140] sm:%s683]
                %741 = vst [vmem:[%s691 + $0xc0] sm:%s683] %v740
                %v742 = vld [vmem:[%s690 + $0x148] sm:%s683]
                %743 = vst [vmem:[%s691 + $0xc8] sm:%s683] %v742
                %v744 = vld [vmem:[%s690 + $0x150] sm:%s683]
                %745 = vst [vmem:[%s691 + $0xd0] sm:%s683] %v744
                %v746 = vld [vmem:[%s690 + $0x158] sm:%s683]
                %747 = vst [vmem:[%s691 + $0xd8] sm:%s683] %v746
                %v748 = vld [vmem:[%s690 + $0x160] sm:%s683]
                %749 = vst [vmem:[%s691 + $0xe0] sm:%s683] %v748
                %v750 = vld [vmem:[%s690 + $0x168] sm:%s683]
                %751 = vst [vmem:[%s691 + $0xe8] sm:%s683] %v750
                %v752 = vld [vmem:[%s690 + $0x170] sm:%s683]
                %753 = vst [vmem:[%s691 + $0xf0] sm:%s683] %v752
                %v754 = vld [vmem:[%s690 + $0x178] sm:%s683]
                %755 = vst [vmem:[%s691 + $0xf8] sm:%s683] %v754
              $region135: #{tpu_custom_call.1} parent=129 // loop_footer
                %s689 = sadd.s32 1, %s685
              $region136: #{tpu_custom_call.1} parent=129 // loop_footer_branch
                %684 = sbr.rel target = $region132
              $region137: #{tpu_custom_call.1} parent=129 // loop_exit
                _
            $region130: #{tpu_custom_call.1} parent=121 // pred_fallthru
              _
          $region122: #{tpu_custom_call.1} parent=117 // pred_fallthru
            _
          %832 = vnop
        $region118: #{tpu_custom_call.1} parent=31 // pred_fallthru
          _
        // Predicated region
        $region153: #{tpu_custom_call.1} parent=31 // pred_check
          %p833 = pneg %p153
        $region154: #{tpu_custom_call.1} parent=31 // pred_check_branch
          %835 = sbr.rel (%p833) target = $region156
        $region155: #{tpu_custom_call.1} parent=31 // pred_region
          %p836 = scmp.lt.s32.totalorder %s23, 1
          %s837 = scalar_select %p836, %s23, 1
          %s838 = smul.addr %s837, 4
          %s839 = smul.addr %s838, 8
          %s840 = scalar_lea.vmem %s4, %s839
        $region156: #{tpu_custom_call.1} parent=31 // pred_fallthru
          _
        // Predicated region
        $region157: #{tpu_custom_call.1} parent=31 // pred_check
          %p841 = pneg %p179
        $region158: #{tpu_custom_call.1} parent=31 // pred_check_branch
          %843 = sbr.rel (%p841) target = $region160
        $region159: #{tpu_custom_call.1} parent=31 // pred_region
          %p844 = scmp.lt.s32.totalorder %s23, 1
          %s845 = scalar_select %p844, %s23, 1
          %s846 = scalar_lea.vmem %s5, %s845
        $region160: #{tpu_custom_call.1} parent=31 // pred_fallthru
          _
      $region32: #{tpu_custom_call.1} parent=5 // pred_fallthru
        _
      %p847 = scmp.le.s32.totalorder 1, %s16
      %p848 = scmp.lt.s32.totalorder %s16, 3
      %p849 = pnand %p847, %p848
      %p850 = pneg %p849
      // Predicated region
      $region161: #{tpu_custom_call.1} parent=5 // pred_check
        _
      $region162: #{tpu_custom_call.1} parent=5 // pred_check_branch
        %852 = sbr.rel (%p849) target = $region164
      $region163: #{tpu_custom_call.1} parent=5 // pred_region
        %s853 = ssub.s32 %s16, 1
        %s854 = sand.u32 %s64, 1
        %s855 = sand.u32 %s64, 1
        %s856 = smul.addr %s855, 128
        %s857 = scalar_lea.vmem [#allocation3], %s856
        // Predicated region
        $region165: #{tpu_custom_call.1} parent=163 // pred_check
          %p858 = pneg %p77
        $region166: #{tpu_custom_call.1} parent=163 // pred_check_branch
          %860 = sbr.rel (%p858) target = $region168
        $region167: #{tpu_custom_call.1} parent=163 // pred_region
          _
        $region168: #{tpu_custom_call.1} parent=163 // pred_fallthru
          _
        %s861 = sand.u32 %s92, 1
        %s862 = sand.u32 %s92, 1
        %s863 = smul.addr %s862, 128
        %s864 = scalar_lea.vmem [#allocation4], %s863
        // Predicated region
        $region169: #{tpu_custom_call.1} parent=163 // pred_check
          %p865 = pneg %p105
        $region170: #{tpu_custom_call.1} parent=163 // pred_check_branch
          %867 = sbr.rel (%p865) target = $region172
        $region171: #{tpu_custom_call.1} parent=163 // pred_region
          _
        $region172: #{tpu_custom_call.1} parent=163 // pred_fallthru
          _
        %s868 = sand.u32 %s120, 1
        %s869 = sand.u32 %s120, 1
        %s870 = smul.addr %s869, 256
        %s871 = scalar_lea.vmem [#allocation5], %s870
        // Predicated region
        $region173: #{tpu_custom_call.1} parent=163 // pred_check
          %p872 = pneg %p133
        $region174: #{tpu_custom_call.1} parent=163 // pred_check_branch
          %874 = sbr.rel (%p872) target = $region176
        $region175: #{tpu_custom_call.1} parent=163 // pred_region
          _
        $region176: #{tpu_custom_call.1} parent=163 // pred_fallthru
          _
        %p875 = pneg %p49
        %p876 = pneg %p46
        %s877 = sand.u32 %s64, 1
        %s878 = sand.u32 %s64, 1
        %s879 = smul.addr %s878, 128
        %s880 = scalar_lea.vmem [#allocation3], %s879
        %p881 = pneg %p77
        %p882 = pneg %p74
        %s883 = sand.u32 %s92, 1
        %s884 = sand.u32 %s92, 1
        %s885 = smul.addr %s884, 128
        %s886 = scalar_lea.vmem [#allocation4], %s885
        %p887 = pneg %p105
        %p888 = pneg %p102
        %s889 = sand.u32 %s120, 1
        %s890 = sand.u32 %s120, 1
        %s891 = smul.addr %s890, 256
        %s892 = scalar_lea.vmem [#allocation5], %s891
        %p893 = pneg %p133
        %p894 = pneg %p130
        %p895 = scmp.lt.s32.totalorder %s25, 1
        %s896 = scalar_select %p895, %s25, 1
        %s897 = smul.addr %s896, 4
        %s898 = smul.addr %s897, 8
        %s899 = scalar_lea.vmem %s4, %s898
        %p900 = pneg %p159
        %p901 = pneg %p156
        %p902 = scmp.lt.s32.totalorder %s25, 1
        %s903 = scalar_select %p902, %s25, 1
        %s904 = scalar_lea.vmem %s5, %s903
        %p905 = pneg %p185
        %p906 = pneg %p182
        %p907 = pneg %p206
        %p908 = pneg %p203
        %p909 = pneg %p227
        %p910 = pneg %p224
        %p911 = pneg %p248
        %p912 = pneg %p245
        %p913 = pneg %p276
        %p914 = pneg %p273
        %s915 = sand.u32 %s263, 1
        %s916 = sand.u32 %s263, 1
        %s917 = smul.addr %s916, 64
        %s918 = scalar_lea.vmem [#allocation6], %s917
        %s919 = smul.u32 2, %s26
        %s920 = smul.u32 2, %s26
        %s921 = smul.u32 2, %s26
        %p922 = scmp.lt.s32.totalorder %s25, 1
        %s923 = scalar_select %p922, %s25, 1
        %s924 = smul.addr %s923, 4
        %s925 = smul.addr %s924, 8
        %s926 = scalar_lea.vmem %s4, %s925
        %p927 = scmp.lt.s32.totalorder %s25, 1
        %s928 = scalar_select %p927, %s25, 1
        %s929 = scalar_lea.vmem %s5, %s928
        %s930 = smul.u32 2, %s26
        %s932 = sld [smem:[#allocation2]]
        %v933 = vld [vmem:[%s857] sm:$0xf]
        %v934 = vld [vmem:[%s857 + $0x4] sm:$0xf]
        %v935 = vld [vmem:[%s857 + $0x8] sm:$0xf]
        %v936 = vld [vmem:[%s857 + $0xc] sm:$0xf]
        %v937 = vld [vmem:[%s857 + $0x10] sm:$0xf]
        %v938 = vld [vmem:[%s857 + $0x14] sm:$0xf]
        %v939 = vld [vmem:[%s857 + $0x18] sm:$0xf]
        %v940 = vld [vmem:[%s857 + $0x1c] sm:$0xf]
        %v941 = vld [vmem:[%s857 + $0x20] sm:$0xf]
        %v942 = vld [vmem:[%s857 + $0x24] sm:$0xf]
        %v943 = vld [vmem:[%s857 + $0x28] sm:$0xf]
        %v944 = vld [vmem:[%s857 + $0x2c] sm:$0xf]
        %v945 = vld [vmem:[%s857 + $0x30] sm:$0xf]
        %v946 = vld [vmem:[%s857 + $0x34] sm:$0xf]
        %v947 = vld [vmem:[%s857 + $0x38] sm:$0xf]
        %v948 = vld [vmem:[%s857 + $0x3c] sm:$0xf]
        %v949 = vld [vmem:[%s857 + $0x40] sm:$0xf]
        %v950 = vld [vmem:[%s857 + $0x44] sm:$0xf]
        %v951 = vld [vmem:[%s857 + $0x48] sm:$0xf]
        %v952 = vld [vmem:[%s857 + $0x4c] sm:$0xf]
        %v953 = vld [vmem:[%s857 + $0x50] sm:$0xf]
        %v954 = vld [vmem:[%s857 + $0x54] sm:$0xf]
        %v955 = vld [vmem:[%s857 + $0x58] sm:$0xf]
        %v956 = vld [vmem:[%s857 + $0x5c] sm:$0xf]
        %v957 = vld [vmem:[%s857 + $0x60] sm:$0xf]
        %v958 = vld [vmem:[%s857 + $0x64] sm:$0xf]
        %v959 = vld [vmem:[%s857 + $0x68] sm:$0xf]
        %v960 = vld [vmem:[%s857 + $0x6c] sm:$0xf]
        %v961 = vld [vmem:[%s857 + $0x70] sm:$0xf]
        %v962 = vld [vmem:[%s857 + $0x74] sm:$0xf]
        %v963 = vld [vmem:[%s857 + $0x78] sm:$0xf]
        %v964 = vld [vmem:[%s857 + $0x7c] sm:$0xf]
        %v965 = vld [vmem:[%s864] sm:$0xf]
        %v966 = vld [vmem:[%s864 + $0x4] sm:$0xf]
        %v967 = vld [vmem:[%s864 + $0x8] sm:$0xf]
        %v968 = vld [vmem:[%s864 + $0xc] sm:$0xf]
        %v969 = vld [vmem:[%s864 + $0x10] sm:$0xf]
        %v970 = vld [vmem:[%s864 + $0x14] sm:$0xf]
        %v971 = vld [vmem:[%s864 + $0x18] sm:$0xf]
        %v972 = vld [vmem:[%s864 + $0x1c] sm:$0xf]
        %v973 = vld [vmem:[%s864 + $0x20] sm:$0xf]
        %v974 = vld [vmem:[%s864 + $0x24] sm:$0xf]
        %v975 = vld [vmem:[%s864 + $0x28] sm:$0xf]
        %v976 = vld [vmem:[%s864 + $0x2c] sm:$0xf]
        %v977 = vld [vmem:[%s864 + $0x30] sm:$0xf]
        %v978 = vld [vmem:[%s864 + $0x34] sm:$0xf]
        %v979 = vld [vmem:[%s864 + $0x38] sm:$0xf]
        %v980 = vld [vmem:[%s864 + $0x3c] sm:$0xf]
        %v981 = vld [vmem:[%s864 + $0x40] sm:$0xf]
        %v982 = vld [vmem:[%s864 + $0x44] sm:$0xf]
        %v983 = vld [vmem:[%s864 + $0x48] sm:$0xf]
        %v984 = vld [vmem:[%s864 + $0x4c] sm:$0xf]
        %v985 = vld [vmem:[%s864 + $0x50] sm:$0xf]
        %v986 = vld [vmem:[%s864 + $0x54] sm:$0xf]
        %v987 = vld [vmem:[%s864 + $0x58] sm:$0xf]
        %v988 = vld [vmem:[%s864 + $0x5c] sm:$0xf]
        %v989 = vld [vmem:[%s864 + $0x60] sm:$0xf]
        %v990 = vld [vmem:[%s864 + $0x64] sm:$0xf]
        %v991 = vld [vmem:[%s864 + $0x68] sm:$0xf]
        %v992 = vld [vmem:[%s864 + $0x6c] sm:$0xf]
        %v993 = vld [vmem:[%s864 + $0x70] sm:$0xf]
        %v994 = vld [vmem:[%s864 + $0x74] sm:$0xf]
        %v995 = vld [vmem:[%s864 + $0x78] sm:$0xf]
        %v996 = vld [vmem:[%s864 + $0x7c] sm:$0xf]
        %v997 = vld [vmem:[%s871] sm:$0xff]
        %v998 = vld [vmem:[%s871 + $0x8] sm:$0xff]
        %v999 = vld [vmem:[%s871 + $0x10] sm:$0xff]
        %v1000 = vld [vmem:[%s871 + $0x18] sm:$0xff]
        %v1001 = vld [vmem:[%s871 + $0x20] sm:$0xff]
        %v1002 = vld [vmem:[%s871 + $0x28] sm:$0xff]
        %v1003 = vld [vmem:[%s871 + $0x30] sm:$0xff]
        %v1004 = vld [vmem:[%s871 + $0x38] sm:$0xff]
        %v1005 = vld [vmem:[%s871 + $0x40] sm:$0xff]
        %v1006 = vld [vmem:[%s871 + $0x48] sm:$0xff]
        %v1007 = vld [vmem:[%s871 + $0x50] sm:$0xff]
        %v1008 = vld [vmem:[%s871 + $0x58] sm:$0xff]
        %v1009 = vld [vmem:[%s871 + $0x60] sm:$0xff]
        %v1010 = vld [vmem:[%s871 + $0x68] sm:$0xff]
        %v1011 = vld [vmem:[%s871 + $0x70] sm:$0xff]
        %v1012 = vld [vmem:[%s871 + $0x78] sm:$0xff]
        %v1013 = vld [vmem:[%s871 + $0x80] sm:$0xff]
        %v1014 = vld [vmem:[%s871 + $0x88] sm:$0xff]
        %v1015 = vld [vmem:[%s871 + $0x90] sm:$0xff]
        %v1016 = vld [vmem:[%s871 + $0x98] sm:$0xff]
        %v1017 = vld [vmem:[%s871 + $0xa0] sm:$0xff]
        %v1018 = vld [vmem:[%s871 + $0xa8] sm:$0xff]
        %v1019 = vld [vmem:[%s871 + $0xb0] sm:$0xff]
        %v1020 = vld [vmem:[%s871 + $0xb8] sm:$0xff]
        %v1021 = vld [vmem:[%s871 + $0xc0] sm:$0xff]
        %v1022 = vld [vmem:[%s871 + $0xc8] sm:$0xff]
        %v1023 = vld [vmem:[%s871 + $0xd0] sm:$0xff]
        %v1024 = vld [vmem:[%s871 + $0xd8] sm:$0xff]
        %v1025 = vld [vmem:[%s871 + $0xe0] sm:$0xff]
        %v1026 = vld [vmem:[%s871 + $0xe8] sm:$0xff]
        %v1027 = vld [vmem:[%s871 + $0xf0] sm:$0xff]
        %v1028 = vld [vmem:[%s871 + $0xf8] sm:$0xff]
        %v1029 = vpack.c.bf16 %v998, %v997
        %v1030 = vpack.c.bf16 %v1000, %v999
        %v1031 = vpack.c.bf16 %v1002, %v1001
        %v1032 = vpack.c.bf16 %v1004, %v1003
        %v1033 = vpack.c.bf16 %v1006, %v1005
        %v1034 = vpack.c.bf16 %v1008, %v1007
        %v1035 = vpack.c.bf16 %v1010, %v1009
        %v1036 = vpack.c.bf16 %v1012, %v1011
        %v1037 = vpack.c.bf16 %v1014, %v1013
        %v1038 = vpack.c.bf16 %v1016, %v1015
        %v1039 = vpack.c.bf16 %v1018, %v1017
        %v1040 = vpack.c.bf16 %v1020, %v1019
        %v1041 = vpack.c.bf16 %v1022, %v1021
        %v1042 = vpack.c.bf16 %v1024, %v1023
        %v1043 = vpack.c.bf16 %v1026, %v1025
        %v1044 = vpack.c.bf16 %v1028, %v1027
        %v1049 = vunpack.c.l.b16 %v933
        %v1050 = vunpack.c.l.b16 %v934
        %v1051 = vunpack.c.l.b16 %v935
        %v1052 = vunpack.c.l.b16 %v936
        %v1053 = vpack.c.b16 %v1050, %v1049
        %v1054 = vpack.c.b16 %v1052, %v1051
        %v1059 = vunpack.c.l.b16 %v965
        %v1060 = vunpack.c.l.b16 %v966
        %v1061 = vunpack.c.l.b16 %v967
        %v1062 = vunpack.c.l.b16 %v968
        %v1063 = vpack.c.b16 %v1060, %v1059
        %v1064 = vpack.c.b16 %v1062, %v1061
        %vm1065 = vcmask 31744
        %v1067 = vsel %vm1065, %v1053, 0
        %v1070 = vsel %vm1065, %v1054, 0
        %v1073 = vsel %vm1065, %v1063, 0
        %v1076 = vsel %vm1065, %v1064, 0
        %1078 = vmatprep.subr.bf16.mxu0 0
        %1079 = vmatpush1.bf16.xpose.msra.mxu0 0
        %1080 = vmatprep.subr.bf16.mxu0 0
        %1081 = vmatpush1.bf16.xpose.msra.mxu0 0
        %1082 = vmatprep.subr.bf16.mxu0 0
        %1083 = vmatpush1.bf16.xpose.msra.mxu0 0
        %1084 = vmatprep.subr.bf16.mxu0 0
        %1085 = vmatpush1.bf16.xpose.msra.mxu0 0
        %1086 = vmatprep.subr.bf16.mxu0 0
        %1087 = vmatpush1.bf16.xpose.msra.mxu0 0
        %1088 = vmatprep.subr.bf16.mxu0 0
        %1089 = vmatpush1.bf16.xpose.msra.mxu0 0
        %1090 = vmatprep.subr.bf16.mxu0 0
        %1091 = vmatpush1.bf16.xpose.msra.mxu0 %v1076
        %1092 = vmatprep.subr.bf16.mxu0 0
        %1093 = vmatpush1.bf16.xpose.msra.mxu0 %v1073
        %1094 = vmatprep.subr.bf16.mxu0 0
        %1095 = vmatpush2.bf16.xpose.msra.mxu0 0
        %1096 = vmatprep.subr.bf16.mxu0 0
        %1097 = vmatpush2.bf16.xpose.msra.mxu0 0
        %1098 = vmatprep.subr.bf16.mxu0 0
        %1099 = vmatpush2.bf16.xpose.msra.mxu0 0
        %1100 = vmatprep.subr.bf16.mxu0 0
        %1101 = vmatpush2.bf16.xpose.msra.mxu0 0
        %1102 = vmatprep.subr.bf16.mxu0 0
        %1103 = vmatpush2.bf16.xpose.msra.mxu0 0
        %1104 = vmatprep.subr.bf16.mxu0 0
        %1105 = vmatpush2.bf16.xpose.msra.mxu0 0
        %1106 = vmatprep.subr.bf16.mxu0 0
        %1107 = vmatpush2.bf16.xpose.msra.mxu0 0
        %1108 = vmatprep.subr.bf16.mxu0 0
        %1109 = vmatpush2.bf16.xpose.msra.mxu0 0
        %1110 = vmatprep.mubr.bf16.mxu0 0
        %1111 = vmatmul.mubr.bf16.gmra.mxu0 %v1067
        %v1112 = vpop.f32.mrf.mxu0
        %v1113 = vadd.f32 0.0, %v1112
        %v1114 = vpop.f32.mrf.mxu0
        %v1115 = vpop.f32.mrf.mxu0
        %v1116 = vadd.f32 0.0, %v1115
        %v1117 = vpop.f32.mrf.mxu0
        %1118 = vmatprep.mubr.bf16.mxu0 0
        %1119 = vmatmul.mubr.bf16.gmra.mxu0 %v1070
        %v1120 = vpop.f32.mrf.mxu0
        %v1121 = vadd.f32 0.0, %v1120
        %v1122 = vpop.f32.mrf.mxu0
        %v1123 = vpop.f32.mrf.mxu0
        %v1124 = vadd.f32 0.0, %v1123
        %v1125 = vpop.f32.mrf.mxu0
        %1126 = vdwg.mxu0
        %v1131 = vunpack.c.l.b16 %v937
        %v1132 = vunpack.c.l.b16 %v938
        %v1133 = vunpack.c.l.b16 %v939
        %v1134 = vunpack.c.l.b16 %v940
        %v1135 = vpack.c.b16 %v1132, %v1131
        %v1136 = vpack.c.b16 %v1134, %v1133
        %v1141 = vunpack.c.l.b16 %v969
        %v1142 = vunpack.c.l.b16 %v970
        %v1143 = vunpack.c.l.b16 %v971
        %v1144 = vunpack.c.l.b16 %v972
        %v1145 = vpack.c.b16 %v1142, %v1141
        %v1146 = vpack.c.b16 %v1144, %v1143
        %v1148 = vsel %vm1065, %v1135, 0
        %v1151 = vsel %vm1065, %v1136, 0
        %v1154 = vsel %vm1065, %v1145, 0
        %v1157 = vsel %vm1065, %v1146, 0
        %1159 = vmatprep.subr.bf16.mxu0 0
        %1160 = vmatpush1.bf16.xpose.msra.mxu0 0
        %1161 = vmatprep.subr.bf16.mxu0 0
        %1162 = vmatpush1.bf16.xpose.msra.mxu0 0
        %1163 = vmatprep.subr.bf16.mxu0 0
        %1164 = vmatpush1.bf16.xpose.msra.mxu0 0
        %1165 = vmatprep.subr.bf16.mxu0 0
        %1166 = vmatpush1.bf16.xpose.msra.mxu0 0
        %1167 = vmatprep.subr.bf16.mxu0 0
        %1168 = vmatpush1.bf16.xpose.msra.mxu0 0
        %1169 = vmatprep.subr.bf16.mxu0 0
        %1170 = vmatpush1.bf16.xpose.msra.mxu0 0
        %1171 = vmatprep.subr.bf16.mxu0 0
        %1172 = vmatpush1.bf16.xpose.msra.mxu0 %v1157
        %1173 = vmatprep.subr.bf16.mxu0 0
        %1174 = vmatpush1.bf16.xpose.msra.mxu0 %v1154
        %1175 = vmatprep.subr.bf16.mxu0 0
        %1176 = vmatpush2.bf16.xpose.msra.mxu0 0
        %1177 = vmatprep.subr.bf16.mxu0 0
        %1178 = vmatpush2.bf16.xpose.msra.mxu0 0
        %1179 = vmatprep.subr.bf16.mxu0 0
        %1180 = vmatpush2.bf16.xpose.msra.mxu0 0
        %1181 = vmatprep.subr.bf16.mxu0 0
        %1182 = vmatpush2.bf16.xpose.msra.mxu0 0
        %1183 = vmatprep.subr.bf16.mxu0 0
        %1184 = vmatpush2.bf16.xpose.msra.mxu0 0
        %1185 = vmatprep.subr.bf16.mxu0 0
        %1186 = vmatpush2.bf16.xpose.msra.mxu0 0
        %1187 = vmatprep.subr.bf16.mxu0 0
        %1188 = vmatpush2.bf16.xpose.msra.mxu0 0
        %1189 = vmatprep.subr.bf16.mxu0 0
        %1190 = vmatpush2.bf16.xpose.msra.mxu0 0
        %1191 = vmatprep.mubr.bf16.mxu0 0
        %1192 = vmatmul.mubr.bf16.gmra.mxu0 %v1148
        %v1193 = vpop.f32.mrf.mxu0
        %v1194 = vadd.f32 0.0, %v1193
        %v1195 = vpop.f32.mrf.mxu0
        %v1196 = vpop.f32.mrf.mxu0
        %v1197 = vadd.f32 0.0, %v1196
        %v1198 = vpop.f32.mrf.mxu0
        %1199 = vmatprep.mubr.bf16.mxu0 0
        %1200 = vmatmul.mubr.bf16.gmra.mxu0 %v1151
        %v1201 = vpop.f32.mrf.mxu0
        %v1202 = vadd.f32 0.0, %v1201
        %v1203 = vpop.f32.mrf.mxu0
        %v1204 = vpop.f32.mrf.mxu0
        %v1205 = vadd.f32 0.0, %v1204
        %v1206 = vpop.f32.mrf.mxu0
        %1207 = vdwg.mxu0
        %v1212 = vunpack.c.l.b16 %v941
        %v1213 = vunpack.c.l.b16 %v942
        %v1214 = vunpack.c.l.b16 %v943
        %v1215 = vunpack.c.l.b16 %v944
        %v1216 = vpack.c.b16 %v1213, %v1212
        %v1217 = vpack.c.b16 %v1215, %v1214
        %v1222 = vunpack.c.l.b16 %v973
        %v1223 = vunpack.c.l.b16 %v974
        %v1224 = vunpack.c.l.b16 %v975
        %v1225 = vunpack.c.l.b16 %v976
        %v1226 = vpack.c.b16 %v1223, %v1222
        %v1227 = vpack.c.b16 %v1225, %v1224
        %v1229 = vsel %vm1065, %v1216, 0
        %v1232 = vsel %vm1065, %v1217, 0
        %v1235 = vsel %vm1065, %v1226, 0
        %v1238 = vsel %vm1065, %v1227, 0
        %1240 = vmatprep.subr.bf16.mxu0 0
        %1241 = vmatpush1.bf16.xpose.msra.mxu0 0
        %1242 = vmatprep.subr.bf16.mxu0 0
        %1243 = vmatpush1.bf16.xpose.msra.mxu0 0
        %1244 = vmatprep.subr.bf16.mxu0 0
        %1245 = vmatpush1.bf16.xpose.msra.mxu0 0
        %1246 = vmatprep.subr.bf16.mxu0 0
        %1247 = vmatpush1.bf16.xpose.msra.mxu0 0
        %1248 = vmatprep.subr.bf16.mxu0 0
        %1249 = vmatpush1.bf16.xpose.msra.mxu0 0
        %1250 = vmatprep.subr.bf16.mxu0 0
        %1251 = vmatpush1.bf16.xpose.msra.mxu0 0
        %1252 = vmatprep.subr.bf16.mxu0 0
        %1253 = vmatpush1.bf16.xpose.msra.mxu0 %v1238
        %1254 = vmatprep.subr.bf16.mxu0 0
        %1255 = vmatpush1.bf16.xpose.msra.mxu0 %v1235
        %1256 = vmatprep.subr.bf16.mxu0 0
        %1257 = vmatpush2.bf16.xpose.msra.mxu0 0
        %1258 = vmatprep.subr.bf16.mxu0 0
        %1259 = vmatpush2.bf16.xpose.msra.mxu0 0
        %1260 = vmatprep.subr.bf16.mxu0 0
        %1261 = vmatpush2.bf16.xpose.msra.mxu0 0
        %1262 = vmatprep.subr.bf16.mxu0 0
        %1263 = vmatpush2.bf16.xpose.msra.mxu0 0
        %1264 = vmatprep.subr.bf16.mxu0 0
        %1265 = vmatpush2.bf16.xpose.msra.mxu0 0
        %1266 = vmatprep.subr.bf16.mxu0 0
        %1267 = vmatpush2.bf16.xpose.msra.mxu0 0
        %1268 = vmatprep.subr.bf16.mxu0 0
        %1269 = vmatpush2.bf16.xpose.msra.mxu0 0
        %1270 = vmatprep.subr.bf16.mxu0 0
        %1271 = vmatpush2.bf16.xpose.msra.mxu0 0
        %1272 = vmatprep.mubr.bf16.mxu0 0
        %1273 = vmatmul.mubr.bf16.gmra.mxu0 %v1229
        %v1274 = vpop.f32.mrf.mxu0
        %v1275 = vadd.f32 0.0, %v1274
        %v1276 = vpop.f32.mrf.mxu0
        %v1277 = vpop.f32.mrf.mxu0
        %v1278 = vadd.f32 0.0, %v1277
        %v1279 = vpop.f32.mrf.mxu0
        %1280 = vmatprep.mubr.bf16.mxu0 0
        %1281 = vmatmul.mubr.bf16.gmra.mxu0 %v1232
        %v1282 = vpop.f32.mrf.mxu0
        %v1283 = vadd.f32 0.0, %v1282
        %v1284 = vpop.f32.mrf.mxu0
        %v1285 = vpop.f32.mrf.mxu0
        %v1286 = vadd.f32 0.0, %v1285
        %v1287 = vpop.f32.mrf.mxu0
        %1288 = vdwg.mxu0
        %v1293 = vunpack.c.l.b16 %v945
        %v1294 = vunpack.c.l.b16 %v946
        %v1295 = vunpack.c.l.b16 %v947
        %v1296 = vunpack.c.l.b16 %v948
        %v1297 = vpack.c.b16 %v1294, %v1293
        %v1298 = vpack.c.b16 %v1296, %v1295
        %v1303 = vunpack.c.l.b16 %v977
        %v1304 = vunpack.c.l.b16 %v978
        %v1305 = vunpack.c.l.b16 %v979
        %v1306 = vunpack.c.l.b16 %v980
        %v1307 = vpack.c.b16 %v1304, %v1303
        %v1308 = vpack.c.b16 %v1306, %v1305
        %v1310 = vsel %vm1065, %v1297, 0
        %v1313 = vsel %vm1065, %v1298, 0
        %v1316 = vsel %vm1065, %v1307, 0
        %v1319 = vsel %vm1065, %v1308, 0
        %1321 = vmatprep.subr.bf16.mxu0 0
        %1322 = vmatpush1.bf16.xpose.msra.mxu0 0
        %1323 = vmatprep.subr.bf16.mxu0 0
        %1324 = vmatpush1.bf16.xpose.msra.mxu0 0
        %1325 = vmatprep.subr.bf16.mxu0 0
        %1326 = vmatpush1.bf16.xpose.msra.mxu0 0
        %1327 = vmatprep.subr.bf16.mxu0 0
        %1328 = vmatpush1.bf16.xpose.msra.mxu0 0
        %1329 = vmatprep.subr.bf16.mxu0 0
        %1330 = vmatpush1.bf16.xpose.msra.mxu0 0
        %1331 = vmatprep.subr.bf16.mxu0 0
        %1332 = vmatpush1.bf16.xpose.msra.mxu0 0
        %1333 = vmatprep.subr.bf16.mxu0 0
        %1334 = vmatpush1.bf16.xpose.msra.mxu0 %v1319
        %1335 = vmatprep.subr.bf16.mxu0 0
        %1336 = vmatpush1.bf16.xpose.msra.mxu0 %v1316
        %1337 = vmatprep.subr.bf16.mxu0 0
        %1338 = vmatpush2.bf16.xpose.msra.mxu0 0
        %1339 = vmatprep.subr.bf16.mxu0 0
        %1340 = vmatpush2.bf16.xpose.msra.mxu0 0
        %1341 = vmatprep.subr.bf16.mxu0 0
        %1342 = vmatpush2.bf16.xpose.msra.mxu0 0
        %1343 = vmatprep.subr.bf16.mxu0 0
        %1344 = vmatpush2.bf16.xpose.msra.mxu0 0
        %1345 = vmatprep.subr.bf16.mxu0 0
        %1346 = vmatpush2.bf16.xpose.msra.mxu0 0
        %1347 = vmatprep.subr.bf16.mxu0 0
        %1348 = vmatpush2.bf16.xpose.msra.mxu0 0
        %1349 = vmatprep.subr.bf16.mxu0 0
        %1350 = vmatpush2.bf16.xpose.msra.mxu0 0
        %1351 = vmatprep.subr.bf16.mxu0 0
        %1352 = vmatpush2.bf16.xpose.msra.mxu0 0
        %1353 = vmatprep.mubr.bf16.mxu0 0
        %1354 = vmatmul.mubr.bf16.gmra.mxu0 %v1310
        %v1355 = vpop.f32.mrf.mxu0
        %v1356 = vadd.f32 0.0, %v1355
        %v1357 = vpop.f32.mrf.mxu0
        %v1358 = vpop.f32.mrf.mxu0
        %v1359 = vadd.f32 0.0, %v1358
        %v1360 = vpop.f32.mrf.mxu0
        %1361 = vmatprep.mubr.bf16.mxu0 0
        %1362 = vmatmul.mubr.bf16.gmra.mxu0 %v1313
        %v1363 = vpop.f32.mrf.mxu0
        %v1364 = vadd.f32 0.0, %v1363
        %v1365 = vpop.f32.mrf.mxu0
        %v1366 = vpop.f32.mrf.mxu0
        %v1367 = vadd.f32 0.0, %v1366
        %v1368 = vpop.f32.mrf.mxu0
        %1369 = vdwg.mxu0
        %v1374 = vunpack.c.l.b16 %v949
        %v1375 = vunpack.c.l.b16 %v950
        %v1376 = vunpack.c.l.b16 %v951
        %v1377 = vunpack.c.l.b16 %v952
        %v1378 = vpack.c.b16 %v1375, %v1374
        %v1379 = vpack.c.b16 %v1377, %v1376
        %v1384 = vunpack.c.l.b16 %v981
        %v1385 = vunpack.c.l.b16 %v982
        %v1386 = vunpack.c.l.b16 %v983
        %v1387 = vunpack.c.l.b16 %v984
        %v1388 = vpack.c.b16 %v1385, %v1384
        %v1389 = vpack.c.b16 %v1387, %v1386
        %v1391 = vsel %vm1065, %v1378, 0
        %v1394 = vsel %vm1065, %v1379, 0
        %v1397 = vsel %vm1065, %v1388, 0
        %v1400 = vsel %vm1065, %v1389, 0
        %1402 = vmatprep.subr.bf16.mxu0 0
        %1403 = vmatpush1.bf16.xpose.msra.mxu0 0
        %1404 = vmatprep.subr.bf16.mxu0 0
        %1405 = vmatpush1.bf16.xpose.msra.mxu0 0
        %1406 = vmatprep.subr.bf16.mxu0 0
        %1407 = vmatpush1.bf16.xpose.msra.mxu0 0
        %1408 = vmatprep.subr.bf16.mxu0 0
        %1409 = vmatpush1.bf16.xpose.msra.mxu0 0
        %1410 = vmatprep.subr.bf16.mxu0 0
        %1411 = vmatpush1.bf16.xpose.msra.mxu0 0
        %1412 = vmatprep.subr.bf16.mxu0 0
        %1413 = vmatpush1.bf16.xpose.msra.mxu0 0
        %1414 = vmatprep.subr.bf16.mxu0 0
        %1415 = vmatpush1.bf16.xpose.msra.mxu0 %v1400
        %1416 = vmatprep.subr.bf16.mxu0 0
        %1417 = vmatpush1.bf16.xpose.msra.mxu0 %v1397
        %1418 = vmatprep.subr.bf16.mxu0 0
        %1419 = vmatpush2.bf16.xpose.msra.mxu0 0
        %1420 = vmatprep.subr.bf16.mxu0 0
        %1421 = vmatpush2.bf16.xpose.msra.mxu0 0
        %1422 = vmatprep.subr.bf16.mxu0 0
        %1423 = vmatpush2.bf16.xpose.msra.mxu0 0
        %1424 = vmatprep.subr.bf16.mxu0 0
        %1425 = vmatpush2.bf16.xpose.msra.mxu0 0
        %1426 = vmatprep.subr.bf16.mxu0 0
        %1427 = vmatpush2.bf16.xpose.msra.mxu0 0
        %1428 = vmatprep.subr.bf16.mxu0 0
        %1429 = vmatpush2.bf16.xpose.msra.mxu0 0
        %1430 = vmatprep.subr.bf16.mxu0 0
        %1431 = vmatpush2.bf16.xpose.msra.mxu0 0
        %1432 = vmatprep.subr.bf16.mxu0 0
        %1433 = vmatpush2.bf16.xpose.msra.mxu0 0
        %1434 = vmatprep.mubr.bf16.mxu0 0
        %1435 = vmatmul.mubr.bf16.gmra.mxu0 %v1391
        %v1436 = vpop.f32.mrf.mxu0
        %v1437 = vadd.f32 0.0, %v1436
        %v1438 = vpop.f32.mrf.mxu0
        %v1439 = vpop.f32.mrf.mxu0
        %v1440 = vadd.f32 0.0, %v1439
        %v1441 = vpop.f32.mrf.mxu0
        %1442 = vmatprep.mubr.bf16.mxu0 0
        %1443 = vmatmul.mubr.bf16.gmra.mxu0 %v1394
        %v1444 = vpop.f32.mrf.mxu0
        %v1445 = vadd.f32 0.0, %v1444
        %v1446 = vpop.f32.mrf.mxu0
        %v1447 = vpop.f32.mrf.mxu0
        %v1448 = vadd.f32 0.0, %v1447
        %v1449 = vpop.f32.mrf.mxu0
        %1450 = vdwg.mxu0
        %v1455 = vunpack.c.l.b16 %v953
        %v1456 = vunpack.c.l.b16 %v954
        %v1457 = vunpack.c.l.b16 %v955
        %v1458 = vunpack.c.l.b16 %v956
        %v1459 = vpack.c.b16 %v1456, %v1455
        %v1460 = vpack.c.b16 %v1458, %v1457
        %v1465 = vunpack.c.l.b16 %v985
        %v1466 = vunpack.c.l.b16 %v986
        %v1467 = vunpack.c.l.b16 %v987
        %v1468 = vunpack.c.l.b16 %v988
        %v1469 = vpack.c.b16 %v1466, %v1465
        %v1470 = vpack.c.b16 %v1468, %v1467
        %v1472 = vsel %vm1065, %v1459, 0
        %v1475 = vsel %vm1065, %v1460, 0
        %v1478 = vsel %vm1065, %v1469, 0
        %v1481 = vsel %vm1065, %v1470, 0
        %1483 = vmatprep.subr.bf16.mxu0 0
        %1484 = vmatpush1.bf16.xpose.msra.mxu0 0
        %1485 = vmatprep.subr.bf16.mxu0 0
        %1486 = vmatpush1.bf16.xpose.msra.mxu0 0
        %1487 = vmatprep.subr.bf16.mxu0 0
        %1488 = vmatpush1.bf16.xpose.msra.mxu0 0
        %1489 = vmatprep.subr.bf16.mxu0 0
        %1490 = vmatpush1.bf16.xpose.msra.mxu0 0
        %1491 = vmatprep.subr.bf16.mxu0 0
        %1492 = vmatpush1.bf16.xpose.msra.mxu0 0
        %1493 = vmatprep.subr.bf16.mxu0 0
        %1494 = vmatpush1.bf16.xpose.msra.mxu0 0
        %1495 = vmatprep.subr.bf16.mxu0 0
        %1496 = vmatpush1.bf16.xpose.msra.mxu0 %v1481
        %1497 = vmatprep.subr.bf16.mxu0 0
        %1498 = vmatpush1.bf16.xpose.msra.mxu0 %v1478
        %1499 = vmatprep.subr.bf16.mxu0 0
        %1500 = vmatpush2.bf16.xpose.msra.mxu0 0
        %1501 = vmatprep.subr.bf16.mxu0 0
        %1502 = vmatpush2.bf16.xpose.msra.mxu0 0
        %1503 = vmatprep.subr.bf16.mxu0 0
        %1504 = vmatpush2.bf16.xpose.msra.mxu0 0
        %1505 = vmatprep.subr.bf16.mxu0 0
        %1506 = vmatpush2.bf16.xpose.msra.mxu0 0
        %1507 = vmatprep.subr.bf16.mxu0 0
        %1508 = vmatpush2.bf16.xpose.msra.mxu0 0
        %1509 = vmatprep.subr.bf16.mxu0 0
        %1510 = vmatpush2.bf16.xpose.msra.mxu0 0
        %1511 = vmatprep.subr.bf16.mxu0 0
        %1512 = vmatpush2.bf16.xpose.msra.mxu0 0
        %1513 = vmatprep.subr.bf16.mxu0 0
        %1514 = vmatpush2.bf16.xpose.msra.mxu0 0
        %1515 = vmatprep.mubr.bf16.mxu0 0
        %1516 = vmatmul.mubr.bf16.gmra.mxu0 %v1472
        %v1517 = vpop.f32.mrf.mxu0
        %v1518 = vadd.f32 0.0, %v1517
        %v1519 = vpop.f32.mrf.mxu0
        %v1520 = vpop.f32.mrf.mxu0
        %v1521 = vadd.f32 0.0, %v1520
        %v1522 = vpop.f32.mrf.mxu0
        %1523 = vmatprep.mubr.bf16.mxu0 0
        %1524 = vmatmul.mubr.bf16.gmra.mxu0 %v1475
        %v1525 = vpop.f32.mrf.mxu0
        %v1526 = vadd.f32 0.0, %v1525
        %v1527 = vpop.f32.mrf.mxu0
        %v1528 = vpop.f32.mrf.mxu0
        %v1529 = vadd.f32 0.0, %v1528
        %v1530 = vpop.f32.mrf.mxu0
        %1531 = vdwg.mxu0
        %v1536 = vunpack.c.l.b16 %v957
        %v1537 = vunpack.c.l.b16 %v958
        %v1538 = vunpack.c.l.b16 %v959
        %v1539 = vunpack.c.l.b16 %v960
        %v1540 = vpack.c.b16 %v1537, %v1536
        %v1541 = vpack.c.b16 %v1539, %v1538
        %v1546 = vunpack.c.l.b16 %v989
        %v1547 = vunpack.c.l.b16 %v990
        %v1548 = vunpack.c.l.b16 %v991
        %v1549 = vunpack.c.l.b16 %v992
        %v1550 = vpack.c.b16 %v1547, %v1546
        %v1551 = vpack.c.b16 %v1549, %v1548
        %v1553 = vsel %vm1065, %v1540, 0
        %v1556 = vsel %vm1065, %v1541, 0
        %v1559 = vsel %vm1065, %v1550, 0
        %v1562 = vsel %vm1065, %v1551, 0
        %1564 = vmatprep.subr.bf16.mxu0 0
        %1565 = vmatpush1.bf16.xpose.msra.mxu0 0
        %1566 = vmatprep.subr.bf16.mxu0 0
        %1567 = vmatpush1.bf16.xpose.msra.mxu0 0
        %1568 = vmatprep.subr.bf16.mxu0 0
        %1569 = vmatpush1.bf16.xpose.msra.mxu0 0
        %1570 = vmatprep.subr.bf16.mxu0 0
        %1571 = vmatpush1.bf16.xpose.msra.mxu0 0
        %1572 = vmatprep.subr.bf16.mxu0 0
        %1573 = vmatpush1.bf16.xpose.msra.mxu0 0
        %1574 = vmatprep.subr.bf16.mxu0 0
        %1575 = vmatpush1.bf16.xpose.msra.mxu0 0
        %1576 = vmatprep.subr.bf16.mxu0 0
        %1577 = vmatpush1.bf16.xpose.msra.mxu0 %v1562
        %1578 = vmatprep.subr.bf16.mxu0 0
        %1579 = vmatpush1.bf16.xpose.msra.mxu0 %v1559
        %1580 = vmatprep.subr.bf16.mxu0 0
        %1581 = vmatpush2.bf16.xpose.msra.mxu0 0
        %1582 = vmatprep.subr.bf16.mxu0 0
        %1583 = vmatpush2.bf16.xpose.msra.mxu0 0
        %1584 = vmatprep.subr.bf16.mxu0 0
        %1585 = vmatpush2.bf16.xpose.msra.mxu0 0
        %1586 = vmatprep.subr.bf16.mxu0 0
        %1587 = vmatpush2.bf16.xpose.msra.mxu0 0
        %1588 = vmatprep.subr.bf16.mxu0 0
        %1589 = vmatpush2.bf16.xpose.msra.mxu0 0
        %1590 = vmatprep.subr.bf16.mxu0 0
        %1591 = vmatpush2.bf16.xpose.msra.mxu0 0
        %1592 = vmatprep.subr.bf16.mxu0 0
        %1593 = vmatpush2.bf16.xpose.msra.mxu0 0
        %1594 = vmatprep.subr.bf16.mxu0 0
        %1595 = vmatpush2.bf16.xpose.msra.mxu0 0
        %1596 = vmatprep.mubr.bf16.mxu0 0
        %1597 = vmatmul.mubr.bf16.gmra.mxu0 %v1553
        %v1598 = vpop.f32.mrf.mxu0
        %v1599 = vadd.f32 0.0, %v1598
        %v1600 = vpop.f32.mrf.mxu0
        %v1601 = vpop.f32.mrf.mxu0
        %v1602 = vadd.f32 0.0, %v1601
        %v1603 = vpop.f32.mrf.mxu0
        %1604 = vmatprep.mubr.bf16.mxu0 0
        %1605 = vmatmul.mubr.bf16.gmra.mxu0 %v1556
        %v1606 = vpop.f32.mrf.mxu0
        %v1607 = vadd.f32 0.0, %v1606
        %v1608 = vpop.f32.mrf.mxu0
        %v1609 = vpop.f32.mrf.mxu0
        %v1610 = vadd.f32 0.0, %v1609
        %v1611 = vpop.f32.mrf.mxu0
        %1612 = vdwg.mxu0
        %v1617 = vunpack.c.l.b16 %v961
        %v1618 = vunpack.c.l.b16 %v962
        %v1619 = vunpack.c.l.b16 %v963
        %v1620 = vunpack.c.l.b16 %v964
        %v1621 = vpack.c.b16 %v1618, %v1617
        %v1622 = vpack.c.b16 %v1620, %v1619
        %v1627 = vunpack.c.l.b16 %v993
        %v1628 = vunpack.c.l.b16 %v994
        %v1629 = vunpack.c.l.b16 %v995
        %v1630 = vunpack.c.l.b16 %v996
        %v1631 = vpack.c.b16 %v1628, %v1627
        %v1632 = vpack.c.b16 %v1630, %v1629
        %v1634 = vsel %vm1065, %v1621, 0
        %v1637 = vsel %vm1065, %v1622, 0
        %v1640 = vsel %vm1065, %v1631, 0
        %v1643 = vsel %vm1065, %v1632, 0
        %1645 = vmatprep.subr.bf16.mxu0 0
        %1646 = vmatpush1.bf16.xpose.msra.mxu0 0
        %1647 = vmatprep.subr.bf16.mxu0 0
        %1648 = vmatpush1.bf16.xpose.msra.mxu0 0
        %1649 = vmatprep.subr.bf16.mxu0 0
        %1650 = vmatpush1.bf16.xpose.msra.mxu0 0
        %1651 = vmatprep.subr.bf16.mxu0 0
        %1652 = vmatpush1.bf16.xpose.msra.mxu0 0
        %1653 = vmatprep.subr.bf16.mxu0 0
        %1654 = vmatpush1.bf16.xpose.msra.mxu0 0
        %1655 = vmatprep.subr.bf16.mxu0 0
        %1656 = vmatpush1.bf16.xpose.msra.mxu0 0
        %1657 = vmatprep.subr.bf16.mxu0 0
        %1658 = vmatpush1.bf16.xpose.msra.mxu0 %v1643
        %1659 = vmatprep.subr.bf16.mxu0 0
        %1660 = vmatpush1.bf16.xpose.msra.mxu0 %v1640
        %1661 = vmatprep.subr.bf16.mxu0 0
        %1662 = vmatpush2.bf16.xpose.msra.mxu0 0
        %1663 = vmatprep.subr.bf16.mxu0 0
        %1664 = vmatpush2.bf16.xpose.msra.mxu0 0
        %1665 = vmatprep.subr.bf16.mxu0 0
        %1666 = vmatpush2.bf16.xpose.msra.mxu0 0
        %1667 = vmatprep.subr.bf16.mxu0 0
        %1668 = vmatpush2.bf16.xpose.msra.mxu0 0
        %1669 = vmatprep.subr.bf16.mxu0 0
        %1670 = vmatpush2.bf16.xpose.msra.mxu0 0
        %1671 = vmatprep.subr.bf16.mxu0 0
        %1672 = vmatpush2.bf16.xpose.msra.mxu0 0
        %1673 = vmatprep.subr.bf16.mxu0 0
        %1674 = vmatpush2.bf16.xpose.msra.mxu0 0
        %1675 = vmatprep.subr.bf16.mxu0 0
        %1676 = vmatpush2.bf16.xpose.msra.mxu0 0
        %1677 = vmatprep.mubr.bf16.mxu0 0
        %1678 = vmatmul.mubr.bf16.gmra.mxu0 %v1634
        %v1679 = vpop.f32.mrf.mxu0
        %v1680 = vadd.f32 0.0, %v1679
        %v1681 = vpop.f32.mrf.mxu0
        %v1682 = vpop.f32.mrf.mxu0
        %v1683 = vadd.f32 0.0, %v1682
        %v1684 = vpop.f32.mrf.mxu0
        %1685 = vmatprep.mubr.bf16.mxu0 0
        %1686 = vmatmul.mubr.bf16.gmra.mxu0 %v1637
        %v1687 = vpop.f32.mrf.mxu0
        %v1688 = vadd.f32 0.0, %v1687
        %v1689 = vpop.f32.mrf.mxu0
        %v1690 = vpop.f32.mrf.mxu0
        %v1691 = vadd.f32 0.0, %v1690
        %v1692 = vpop.f32.mrf.mxu0
        %1693 = vdwg.mxu0
        %v1694 = vstv %s932
        %v1695 = vmul.f32 %v1113, %v1694
        %v1696 = vmul.f32 %v1116, %v1694
        %v1697 = vmul.f32 %v1121, %v1694
        %v1698 = vmul.f32 %v1124, %v1694
        %v1699 = vmul.f32 %v1194, %v1694
        %v1700 = vmul.f32 %v1197, %v1694
        %v1701 = vmul.f32 %v1202, %v1694
        %v1702 = vmul.f32 %v1205, %v1694
        %v1703 = vmul.f32 %v1275, %v1694
        %v1704 = vmul.f32 %v1278, %v1694
        %v1705 = vmul.f32 %v1283, %v1694
        %v1706 = vmul.f32 %v1286, %v1694
        %v1707 = vmul.f32 %v1356, %v1694
        %v1708 = vmul.f32 %v1359, %v1694
        %v1709 = vmul.f32 %v1364, %v1694
        %v1710 = vmul.f32 %v1367, %v1694
        %v1711 = vmul.f32 %v1437, %v1694
        %v1712 = vmul.f32 %v1440, %v1694
        %v1713 = vmul.f32 %v1445, %v1694
        %v1714 = vmul.f32 %v1448, %v1694
        %v1715 = vmul.f32 %v1518, %v1694
        %v1716 = vmul.f32 %v1521, %v1694
        %v1717 = vmul.f32 %v1526, %v1694
        %v1718 = vmul.f32 %v1529, %v1694
        %v1719 = vmul.f32 %v1599, %v1694
        %v1720 = vmul.f32 %v1602, %v1694
        %v1721 = vmul.f32 %v1607, %v1694
        %v1722 = vmul.f32 %v1610, %v1694
        %v1723 = vmul.f32 %v1680, %v1694
        %v1724 = vmul.f32 %v1683, %v1694
        %v1725 = vmul.f32 %v1688, %v1694
        %v1726 = vmul.f32 %v1691, %v1694
        %v1727 = vld [vmem:[%s926] sm:$0xff]
        %v1728 = vld [vmem:[%s926 + $0x8] sm:$0xff]
        %v1729 = vld [vmem:[%s926 + $0x10] sm:$0xff]
        %v1730 = vld [vmem:[%s926 + $0x18] sm:$0xff]
        %v1731 = vld [vmem:[%s929] sm:$0x1]
        %1733 = vset.pattern.permute.xlu0 0
        %1734 = vperm.xlu0 %1733, %v1727
        %v1735 = vpop.permute.xlu0 %1734
        %1738 = vset.pattern.permute.xlu0 0
        %1739 = vperm.xlu0 %1738, %v1728
        %v1740 = vpop.permute.xlu0 %1739
        %1743 = vset.pattern.permute.xlu0 0
        %1744 = vperm.xlu0 %1743, %v1729
        %v1745 = vpop.permute.xlu0 %1744
        %1748 = vset.pattern.permute.xlu0 0
        %1749 = vperm.xlu0 %1748, %v1730
        %v1750 = vpop.permute.xlu0 %1749
        %v1753 = vlaneseq
        %v1754 = vshrl.u32 %v1753, 7
        %v1755 = vsub.s32 0, %v1754
        %v1756 = vrot.slane %v1731, %v1755
        %vm1758 = vcmp.ne.f32.partialorder %v1735, %v1756
        %vm1759 = vcmp.ne.f32.partialorder %v1740, %v1756
        %vm1760 = vcmp.ne.f32.partialorder %v1745, %v1756
        %vm1761 = vcmp.ne.f32.partialorder %v1750, %v1756
        %v1762 = vsel %vm1758, -100.0, 0.0
        %v1763 = vsel %vm1759, -100.0, 0.0
        %v1764 = vsel %vm1760, -100.0, 0.0
        %v1765 = vsel %vm1761, -100.0, 0.0
        %v1766 = vadd.f32 %v1695, %v1762
        %v1767 = vadd.f32 %v1696, %v1763
        %v1768 = vadd.f32 %v1697, %v1764
        %v1769 = vadd.f32 %v1698, %v1765
        %v1770 = vadd.f32 %v1699, %v1762
        %v1771 = vadd.f32 %v1700, %v1763
        %v1772 = vadd.f32 %v1701, %v1764
        %v1773 = vadd.f32 %v1702, %v1765
        %v1774 = vadd.f32 %v1703, %v1762
        %v1775 = vadd.f32 %v1704, %v1763
        %v1776 = vadd.f32 %v1705, %v1764
        %v1777 = vadd.f32 %v1706, %v1765
        %v1778 = vadd.f32 %v1707, %v1762
        %v1779 = vadd.f32 %v1708, %v1763
        %v1780 = vadd.f32 %v1709, %v1764
        %v1781 = vadd.f32 %v1710, %v1765
        %v1782 = vadd.f32 %v1711, %v1762
        %v1783 = vadd.f32 %v1712, %v1763
        %v1784 = vadd.f32 %v1713, %v1764
        %v1785 = vadd.f32 %v1714, %v1765
        %v1786 = vadd.f32 %v1715, %v1762
        %v1787 = vadd.f32 %v1716, %v1763
        %v1788 = vadd.f32 %v1717, %v1764
        %v1789 = vadd.f32 %v1718, %v1765
        %v1790 = vadd.f32 %v1719, %v1762
        %v1791 = vadd.f32 %v1720, %v1763
        %v1792 = vadd.f32 %v1721, %v1764
        %v1793 = vadd.f32 %v1722, %v1765
        %v1794 = vadd.f32 %v1723, %v1762
        %v1795 = vadd.f32 %v1724, %v1763
        %v1796 = vadd.f32 %v1725, %v1764
        %v1797 = vadd.f32 %v1726, %v1765
        %vm1798 = vcmask 261120
        %v1799 = vsel %vm1798, %v1766, -inf
        %1800 = vmax.xlane.f32.xlu0 %v1799
        %v1801 = vpop.xlane.xlu0 %1800
        %v1802 = vsel %vm1798, %v1767, -inf
        %1803 = vmax.xlane.f32.xlu0 %v1802
        %v1804 = vpop.xlane.xlu0 %1803
        %v1805 = vsel %vm1798, %v1768, -inf
        %1806 = vmax.xlane.f32.xlu0 %v1805
        %v1807 = vpop.xlane.xlu0 %1806
        %v1808 = vsel %vm1798, %v1769, -inf
        %1809 = vmax.xlane.f32.xlu0 %v1808
        %v1810 = vpop.xlane.xlu0 %1809
        %v1811 = vsel %vm1798, %v1770, -inf
        %1812 = vmax.xlane.f32.xlu0 %v1811
        %v1813 = vpop.xlane.xlu0 %1812
        %v1814 = vsel %vm1798, %v1771, -inf
        %1815 = vmax.xlane.f32.xlu0 %v1814
        %v1816 = vpop.xlane.xlu0 %1815
        %v1817 = vsel %vm1798, %v1772, -inf
        %1818 = vmax.xlane.f32.xlu0 %v1817
        %v1819 = vpop.xlane.xlu0 %1818
        %v1820 = vsel %vm1798, %v1773, -inf
        %1821 = vmax.xlane.f32.xlu0 %v1820
        %v1822 = vpop.xlane.xlu0 %1821
        %v1823 = vsel %vm1798, %v1774, -inf
        %1824 = vmax.xlane.f32.xlu0 %v1823
        %v1825 = vpop.xlane.xlu0 %1824
        %v1826 = vsel %vm1798, %v1775, -inf
        %1827 = vmax.xlane.f32.xlu0 %v1826
        %v1828 = vpop.xlane.xlu0 %1827
        %v1829 = vsel %vm1798, %v1776, -inf
        %1830 = vmax.xlane.f32.xlu0 %v1829
        %v1831 = vpop.xlane.xlu0 %1830
        %v1832 = vsel %vm1798, %v1777, -inf
        %1833 = vmax.xlane.f32.xlu0 %v1832
        %v1834 = vpop.xlane.xlu0 %1833
        %v1835 = vsel %vm1798, %v1778, -inf
        %1836 = vmax.xlane.f32.xlu0 %v1835
        %v1837 = vpop.xlane.xlu0 %1836
        %v1838 = vsel %vm1798, %v1779, -inf
        %1839 = vmax.xlane.f32.xlu0 %v1838
        %v1840 = vpop.xlane.xlu0 %1839
        %v1841 = vsel %vm1798, %v1780, -inf
        %1842 = vmax.xlane.f32.xlu0 %v1841
        %v1843 = vpop.xlane.xlu0 %1842
        %v1844 = vsel %vm1798, %v1781, -inf
        %1845 = vmax.xlane.f32.xlu0 %v1844
        %v1846 = vpop.xlane.xlu0 %1845
        %v1847 = vsel %vm1798, %v1782, -inf
        %1848 = vmax.xlane.f32.xlu0 %v1847
        %v1849 = vpop.xlane.xlu0 %1848
        %v1850 = vsel %vm1798, %v1783, -inf
        %1851 = vmax.xlane.f32.xlu0 %v1850
        %v1852 = vpop.xlane.xlu0 %1851
        %v1853 = vsel %vm1798, %v1784, -inf
        %1854 = vmax.xlane.f32.xlu0 %v1853
        %v1855 = vpop.xlane.xlu0 %1854
        %v1856 = vsel %vm1798, %v1785, -inf
        %1857 = vmax.xlane.f32.xlu0 %v1856
        %v1858 = vpop.xlane.xlu0 %1857
        %v1859 = vsel %vm1798, %v1786, -inf
        %1860 = vmax.xlane.f32.xlu0 %v1859
        %v1861 = vpop.xlane.xlu0 %1860
        %v1862 = vsel %vm1798, %v1787, -inf
        %1863 = vmax.xlane.f32.xlu0 %v1862
        %v1864 = vpop.xlane.xlu0 %1863
        %v1865 = vsel %vm1798, %v1788, -inf
        %1866 = vmax.xlane.f32.xlu0 %v1865
        %v1867 = vpop.xlane.xlu0 %1866
        %v1868 = vsel %vm1798, %v1789, -inf
        %1869 = vmax.xlane.f32.xlu0 %v1868
        %v1870 = vpop.xlane.xlu0 %1869
        %v1871 = vsel %vm1798, %v1790, -inf
        %1872 = vmax.xlane.f32.xlu0 %v1871
        %v1873 = vpop.xlane.xlu0 %1872
        %v1874 = vsel %vm1798, %v1791, -inf
        %1875 = vmax.xlane.f32.xlu0 %v1874
        %v1876 = vpop.xlane.xlu0 %1875
        %v1877 = vsel %vm1798, %v1792, -inf
        %1878 = vmax.xlane.f32.xlu0 %v1877
        %v1879 = vpop.xlane.xlu0 %1878
        %v1880 = vsel %vm1798, %v1793, -inf
        %1881 = vmax.xlane.f32.xlu0 %v1880
        %v1882 = vpop.xlane.xlu0 %1881
        %v1883 = vsel %vm1798, %v1794, -inf
        %1884 = vmax.xlane.f32.xlu0 %v1883
        %v1885 = vpop.xlane.xlu0 %1884
        %v1886 = vsel %vm1798, %v1795, -inf
        %1887 = vmax.xlane.f32.xlu0 %v1886
        %v1888 = vpop.xlane.xlu0 %1887
        %v1889 = vsel %vm1798, %v1796, -inf
        %1890 = vmax.xlane.f32.xlu0 %v1889
        %v1891 = vpop.xlane.xlu0 %1890
        %v1892 = vsel %vm1798, %v1797, -inf
        %1893 = vmax.xlane.f32.xlu0 %v1892
        %v1894 = vpop.xlane.xlu0 %1893
        %v1895 = vsub.f32 %v1766, %v1801
        %v1896 = vsub.f32 %v1767, %v1804
        %v1897 = vsub.f32 %v1768, %v1807
        %v1898 = vsub.f32 %v1769, %v1810
        %v1899 = vsub.f32 %v1770, %v1813
        %v1900 = vsub.f32 %v1771, %v1816
        %v1901 = vsub.f32 %v1772, %v1819
        %v1902 = vsub.f32 %v1773, %v1822
        %v1903 = vsub.f32 %v1774, %v1825
        %v1904 = vsub.f32 %v1775, %v1828
        %v1905 = vsub.f32 %v1776, %v1831
        %v1906 = vsub.f32 %v1777, %v1834
        %v1907 = vsub.f32 %v1778, %v1837
        %v1908 = vsub.f32 %v1779, %v1840
        %v1909 = vsub.f32 %v1780, %v1843
        %v1910 = vsub.f32 %v1781, %v1846
        %v1911 = vsub.f32 %v1782, %v1849
        %v1912 = vsub.f32 %v1783, %v1852
        %v1913 = vsub.f32 %v1784, %v1855
        %v1914 = vsub.f32 %v1785, %v1858
        %v1915 = vsub.f32 %v1786, %v1861
        %v1916 = vsub.f32 %v1787, %v1864
        %v1917 = vsub.f32 %v1788, %v1867
        %v1918 = vsub.f32 %v1789, %v1870
        %v1919 = vsub.f32 %v1790, %v1873
        %v1920 = vsub.f32 %v1791, %v1876
        %v1921 = vsub.f32 %v1792, %v1879
        %v1922 = vsub.f32 %v1793, %v1882
        %v1923 = vsub.f32 %v1794, %v1885
        %v1924 = vsub.f32 %v1795, %v1888
        %v1925 = vsub.f32 %v1796, %v1891
        %v1926 = vsub.f32 %v1797, %v1894
        %v1927 = vmul.f32 %v1895, 1.442695
        %v1928 = vpow.pop %v1927
        %v1929 = vmul.f32 %v1896, 1.442695
        %v1930 = vpow.pop %v1929
        %v1931 = vmul.f32 %v1897, 1.442695
        %v1932 = vpow.pop %v1931
        %v1933 = vmul.f32 %v1898, 1.442695
        %v1934 = vpow.pop %v1933
        %v1935 = vmul.f32 %v1899, 1.442695
        %v1936 = vpow.pop %v1935
        %v1937 = vmul.f32 %v1900, 1.442695
        %v1938 = vpow.pop %v1937
        %v1939 = vmul.f32 %v1901, 1.442695
        %v1940 = vpow.pop %v1939
        %v1941 = vmul.f32 %v1902, 1.442695
        %v1942 = vpow.pop %v1941
        %v1943 = vmul.f32 %v1903, 1.442695
        %v1944 = vpow.pop %v1943
        %v1945 = vmul.f32 %v1904, 1.442695
        %v1946 = vpow.pop %v1945
        %v1947 = vmul.f32 %v1905, 1.442695
        %v1948 = vpow.pop %v1947
        %v1949 = vmul.f32 %v1906, 1.442695
        %v1950 = vpow.pop %v1949
        %v1951 = vmul.f32 %v1907, 1.442695
        %v1952 = vpow.pop %v1951
        %v1953 = vmul.f32 %v1908, 1.442695
        %v1954 = vpow.pop %v1953
        %v1955 = vmul.f32 %v1909, 1.442695
        %v1956 = vpow.pop %v1955
        %v1957 = vmul.f32 %v1910, 1.442695
        %v1958 = vpow.pop %v1957
        %v1959 = vmul.f32 %v1911, 1.442695
        %v1960 = vpow.pop %v1959
        %v1961 = vmul.f32 %v1912, 1.442695
        %v1962 = vpow.pop %v1961
        %v1963 = vmul.f32 %v1913, 1.442695
        %v1964 = vpow.pop %v1963
        %v1965 = vmul.f32 %v1914, 1.442695
        %v1966 = vpow.pop %v1965
        %v1967 = vmul.f32 %v1915, 1.442695
        %v1968 = vpow.pop %v1967
        %v1969 = vmul.f32 %v1916, 1.442695
        %v1970 = vpow.pop %v1969
        %v1971 = vmul.f32 %v1917, 1.442695
        %v1972 = vpow.pop %v1971
        %v1973 = vmul.f32 %v1918, 1.442695
        %v1974 = vpow.pop %v1973
        %v1975 = vmul.f32 %v1919, 1.442695
        %v1976 = vpow.pop %v1975
        %v1977 = vmul.f32 %v1920, 1.442695
        %v1978 = vpow.pop %v1977
        %v1979 = vmul.f32 %v1921, 1.442695
        %v1980 = vpow.pop %v1979
        %v1981 = vmul.f32 %v1922, 1.442695
        %v1982 = vpow.pop %v1981
        %v1983 = vmul.f32 %v1923, 1.442695
        %v1984 = vpow.pop %v1983
        %v1985 = vmul.f32 %v1924, 1.442695
        %v1986 = vpow.pop %v1985
        %v1987 = vmul.f32 %v1925, 1.442695
        %v1988 = vpow.pop %v1987
        %v1989 = vmul.f32 %v1926, 1.442695
        %v1990 = vpow.pop %v1989
        %v1991 = vsel %vm1798, %v1928, 0.0
        %1992 = vadd.xlane.f32.xlu0 %v1991
        %v1993 = vpop.xlane.xlu0 %1992
        %v1994 = vsel %vm1798, %v1930, 0.0
        %1995 = vadd.xlane.f32.xlu0 %v1994
        %v1996 = vpop.xlane.xlu0 %1995
        %v1997 = vsel %vm1798, %v1932, 0.0
        %1998 = vadd.xlane.f32.xlu0 %v1997
        %v1999 = vpop.xlane.xlu0 %1998
        %v2000 = vsel %vm1798, %v1934, 0.0
        %2001 = vadd.xlane.f32.xlu0 %v2000
        %v2002 = vpop.xlane.xlu0 %2001
        %v2003 = vsel %vm1798, %v1936, 0.0
        %2004 = vadd.xlane.f32.xlu0 %v2003
        %v2005 = vpop.xlane.xlu0 %2004
        %v2006 = vsel %vm1798, %v1938, 0.0
        %2007 = vadd.xlane.f32.xlu0 %v2006
        %v2008 = vpop.xlane.xlu0 %2007
        %v2009 = vsel %vm1798, %v1940, 0.0
        %2010 = vadd.xlane.f32.xlu0 %v2009
        %v2011 = vpop.xlane.xlu0 %2010
        %v2012 = vsel %vm1798, %v1942, 0.0
        %2013 = vadd.xlane.f32.xlu0 %v2012
        %v2014 = vpop.xlane.xlu0 %2013
        %v2015 = vsel %vm1798, %v1944, 0.0
        %2016 = vadd.xlane.f32.xlu0 %v2015
        %v2017 = vpop.xlane.xlu0 %2016
        %v2018 = vsel %vm1798, %v1946, 0.0
        %2019 = vadd.xlane.f32.xlu0 %v2018
        %v2020 = vpop.xlane.xlu0 %2019
        %v2021 = vsel %vm1798, %v1948, 0.0
        %2022 = vadd.xlane.f32.xlu0 %v2021
        %v2023 = vpop.xlane.xlu0 %2022
        %v2024 = vsel %vm1798, %v1950, 0.0
        %2025 = vadd.xlane.f32.xlu0 %v2024
        %v2026 = vpop.xlane.xlu0 %2025
        %v2027 = vsel %vm1798, %v1952, 0.0
        %2028 = vadd.xlane.f32.xlu0 %v2027
        %v2029 = vpop.xlane.xlu0 %2028
        %v2030 = vsel %vm1798, %v1954, 0.0
        %2031 = vadd.xlane.f32.xlu0 %v2030
        %v2032 = vpop.xlane.xlu0 %2031
        %v2033 = vsel %vm1798, %v1956, 0.0
        %2034 = vadd.xlane.f32.xlu0 %v2033
        %v2035 = vpop.xlane.xlu0 %2034
        %v2036 = vsel %vm1798, %v1958, 0.0
        %2037 = vadd.xlane.f32.xlu0 %v2036
        %v2038 = vpop.xlane.xlu0 %2037
        %v2039 = vsel %vm1798, %v1960, 0.0
        %2040 = vadd.xlane.f32.xlu0 %v2039
        %v2041 = vpop.xlane.xlu0 %2040
        %v2042 = vsel %vm1798, %v1962, 0.0
        %2043 = vadd.xlane.f32.xlu0 %v2042
        %v2044 = vpop.xlane.xlu0 %2043
        %v2045 = vsel %vm1798, %v1964, 0.0
        %2046 = vadd.xlane.f32.xlu0 %v2045
        %v2047 = vpop.xlane.xlu0 %2046
        %v2048 = vsel %vm1798, %v1966, 0.0
        %2049 = vadd.xlane.f32.xlu0 %v2048
        %v2050 = vpop.xlane.xlu0 %2049
        %v2051 = vsel %vm1798, %v1968, 0.0
        %2052 = vadd.xlane.f32.xlu0 %v2051
        %v2053 = vpop.xlane.xlu0 %2052
        %v2054 = vsel %vm1798, %v1970, 0.0
        %2055 = vadd.xlane.f32.xlu0 %v2054
        %v2056 = vpop.xlane.xlu0 %2055
        %v2057 = vsel %vm1798, %v1972, 0.0
        %2058 = vadd.xlane.f32.xlu0 %v2057
        %v2059 = vpop.xlane.xlu0 %2058
        %v2060 = vsel %vm1798, %v1974, 0.0
        %2061 = vadd.xlane.f32.xlu0 %v2060
        %v2062 = vpop.xlane.xlu0 %2061
        %v2063 = vsel %vm1798, %v1976, 0.0
        %2064 = vadd.xlane.f32.xlu0 %v2063
        %v2065 = vpop.xlane.xlu0 %2064
        %v2066 = vsel %vm1798, %v1978, 0.0
        %2067 = vadd.xlane.f32.xlu0 %v2066
        %v2068 = vpop.xlane.xlu0 %2067
        %v2069 = vsel %vm1798, %v1980, 0.0
        %2070 = vadd.xlane.f32.xlu0 %v2069
        %v2071 = vpop.xlane.xlu0 %2070
        %v2072 = vsel %vm1798, %v1982, 0.0
        %2073 = vadd.xlane.f32.xlu0 %v2072
        %v2074 = vpop.xlane.xlu0 %2073
        %v2075 = vsel %vm1798, %v1984, 0.0
        %2076 = vadd.xlane.f32.xlu0 %v2075
        %v2077 = vpop.xlane.xlu0 %2076
        %v2078 = vsel %vm1798, %v1986, 0.0
        %2079 = vadd.xlane.f32.xlu0 %v2078
        %v2080 = vpop.xlane.xlu0 %2079
        %v2081 = vsel %vm1798, %v1988, 0.0
        %2082 = vadd.xlane.f32.xlu0 %v2081
        %v2083 = vpop.xlane.xlu0 %2082
        %v2084 = vsel %vm1798, %v1990, 0.0
        %2085 = vadd.xlane.f32.xlu0 %v2084
        %v2086 = vpop.xlane.xlu0 %2085
        %v2087 = vrcp.pop %v1993
        %v2088 = vrcp.pop %v1996
        %v2089 = vrcp.pop %v1999
        %v2090 = vrcp.pop %v2002
        %v2091 = vrcp.pop %v2005
        %v2092 = vrcp.pop %v2008
        %v2093 = vrcp.pop %v2011
        %v2094 = vrcp.pop %v2014
        %v2095 = vrcp.pop %v2017
        %v2096 = vrcp.pop %v2020
        %v2097 = vrcp.pop %v2023
        %v2098 = vrcp.pop %v2026
        %v2099 = vrcp.pop %v2029
        %v2100 = vrcp.pop %v2032
        %v2101 = vrcp.pop %v2035
        %v2102 = vrcp.pop %v2038
        %v2103 = vrcp.pop %v2041
        %v2104 = vrcp.pop %v2044
        %v2105 = vrcp.pop %v2047
        %v2106 = vrcp.pop %v2050
        %v2107 = vrcp.pop %v2053
        %v2108 = vrcp.pop %v2056
        %v2109 = vrcp.pop %v2059
        %v2110 = vrcp.pop %v2062
        %v2111 = vrcp.pop %v2065
        %v2112 = vrcp.pop %v2068
        %v2113 = vrcp.pop %v2071
        %v2114 = vrcp.pop %v2074
        %v2115 = vrcp.pop %v2077
        %v2116 = vrcp.pop %v2080
        %v2117 = vrcp.pop %v2083
        %v2118 = vrcp.pop %v2086
        %v2119 = vmul.f32 %v1928, %v2087
        %v2120 = vmul.f32 %v1930, %v2088
        %v2121 = vmul.f32 %v1932, %v2089
        %v2122 = vmul.f32 %v1934, %v2090
        %v2123 = vmul.f32 %v1936, %v2091
        %v2124 = vmul.f32 %v1938, %v2092
        %v2125 = vmul.f32 %v1940, %v2093
        %v2126 = vmul.f32 %v1942, %v2094
        %v2127 = vmul.f32 %v1944, %v2095
        %v2128 = vmul.f32 %v1946, %v2096
        %v2129 = vmul.f32 %v1948, %v2097
        %v2130 = vmul.f32 %v1950, %v2098
        %v2131 = vmul.f32 %v1952, %v2099
        %v2132 = vmul.f32 %v1954, %v2100
        %v2133 = vmul.f32 %v1956, %v2101
        %v2134 = vmul.f32 %v1958, %v2102
        %v2135 = vmul.f32 %v1960, %v2103
        %v2136 = vmul.f32 %v1962, %v2104
        %v2137 = vmul.f32 %v1964, %v2105
        %v2138 = vmul.f32 %v1966, %v2106
        %v2139 = vmul.f32 %v1968, %v2107
        %v2140 = vmul.f32 %v1970, %v2108
        %v2141 = vmul.f32 %v1972, %v2109
        %v2142 = vmul.f32 %v1974, %v2110
        %v2143 = vmul.f32 %v1976, %v2111
        %v2144 = vmul.f32 %v1978, %v2112
        %v2145 = vmul.f32 %v1980, %v2113
        %v2146 = vmul.f32 %v1982, %v2114
        %v2147 = vmul.f32 %v1984, %v2115
        %v2148 = vmul.f32 %v1986, %v2116
        %v2149 = vmul.f32 %v1988, %v2117
        %v2150 = vmul.f32 %v1990, %v2118
        %v2151 = vpack.c.bf16 %v2120, %v2119
        %v2152 = vpack.c.bf16 %v2122, %v2121
        %v2153 = vpack.c.bf16 %v2124, %v2123
        %v2154 = vpack.c.bf16 %v2126, %v2125
        %v2155 = vpack.c.bf16 %v2128, %v2127
        %v2156 = vpack.c.bf16 %v2130, %v2129
        %v2157 = vpack.c.bf16 %v2132, %v2131
        %v2158 = vpack.c.bf16 %v2134, %v2133
        %v2159 = vpack.c.bf16 %v2136, %v2135
        %v2160 = vpack.c.bf16 %v2138, %v2137
        %v2161 = vpack.c.bf16 %v2140, %v2139
        %v2162 = vpack.c.bf16 %v2142, %v2141
        %v2163 = vpack.c.bf16 %v2144, %v2143
        %v2164 = vpack.c.bf16 %v2146, %v2145
        %v2165 = vpack.c.bf16 %v2148, %v2147
        %v2166 = vpack.c.bf16 %v2150, %v2149
        %v2168 = vsel %vm1798, %v2151, 0
        %v2171 = vsel %vm1798, %v2152, 0
        %2173 = vmatprep.subr.bf16.mxu0 0
        %2174 = vmatpush1.bf16.msra.mxu0 0
        %2175 = vmatprep.subr.bf16.mxu0 0
        %2176 = vmatpush1.bf16.msra.mxu0 0
        %2177 = vmatprep.subr.bf16.mxu0 0
        %2178 = vmatpush1.bf16.msra.mxu0 0
        %2179 = vmatprep.subr.bf16.mxu0 0
        %2180 = vmatpush1.bf16.msra.mxu0 0
        %2181 = vmatprep.subr.bf16.mxu0 0
        %2182 = vmatpush1.bf16.msra.mxu0 0
        %2183 = vmatprep.subr.bf16.mxu0 0
        %2184 = vmatpush1.bf16.msra.mxu0 0
        %2185 = vmatprep.subr.bf16.mxu0 0
        %2186 = vmatpush1.bf16.msra.mxu0 %v1030
        %2187 = vmatprep.subr.bf16.mxu0 0
        %2188 = vmatpush1.bf16.msra.mxu0 %v1029
        %2189 = vmatprep.subr.bf16.mxu0 0
        %2190 = vmatpush2.bf16.msra.mxu0 0
        %2191 = vmatprep.subr.bf16.mxu0 0
        %2192 = vmatpush2.bf16.msra.mxu0 0
        %2193 = vmatprep.subr.bf16.mxu0 0
        %2194 = vmatpush2.bf16.msra.mxu0 0
        %2195 = vmatprep.subr.bf16.mxu0 0
        %2196 = vmatpush2.bf16.msra.mxu0 0
        %2197 = vmatprep.subr.bf16.mxu0 0
        %2198 = vmatpush2.bf16.msra.mxu0 0
        %2199 = vmatprep.subr.bf16.mxu0 0
        %2200 = vmatpush2.bf16.msra.mxu0 0
        %2201 = vmatprep.subr.bf16.mxu0 0
        %2202 = vmatpush2.bf16.msra.mxu0 0
        %2203 = vmatprep.subr.bf16.mxu0 0
        %2204 = vmatpush2.bf16.msra.mxu0 0
        %2205 = vmatprep.mubr.bf16.mxu0 0
        %2206 = vmatmul.mubr.bf16.gmra.mxu0 %v2168
        %v2207 = vpop.f32.mrf.mxu0
        %v2208 = vadd.f32 0.0, %v2207
        %v2209 = vpop.f32.mrf.mxu0
        %v2210 = vpop.f32.mrf.mxu0
        %v2211 = vadd.f32 0.0, %v2210
        %v2212 = vpop.f32.mrf.mxu0
        %2213 = vmatprep.mubr.bf16.mxu0 0
        %2214 = vmatmul.mubr.bf16.gmra.mxu0 %v2171
        %v2215 = vpop.f32.mrf.mxu0
        %v2216 = vadd.f32 0.0, %v2215
        %v2217 = vpop.f32.mrf.mxu0
        %v2218 = vpop.f32.mrf.mxu0
        %v2219 = vadd.f32 0.0, %v2218
        %v2220 = vpop.f32.mrf.mxu0
        %2221 = vdwg.mxu0
        %v2223 = vsel %vm1798, %v2153, 0
        %v2226 = vsel %vm1798, %v2154, 0
        %2228 = vmatprep.subr.bf16.mxu0 0
        %2229 = vmatpush1.bf16.msra.mxu0 0
        %2230 = vmatprep.subr.bf16.mxu0 0
        %2231 = vmatpush1.bf16.msra.mxu0 0
        %2232 = vmatprep.subr.bf16.mxu0 0
        %2233 = vmatpush1.bf16.msra.mxu0 0
        %2234 = vmatprep.subr.bf16.mxu0 0
        %2235 = vmatpush1.bf16.msra.mxu0 0
        %2236 = vmatprep.subr.bf16.mxu0 0
        %2237 = vmatpush1.bf16.msra.mxu0 0
        %2238 = vmatprep.subr.bf16.mxu0 0
        %2239 = vmatpush1.bf16.msra.mxu0 0
        %2240 = vmatprep.subr.bf16.mxu0 0
        %2241 = vmatpush1.bf16.msra.mxu0 %v1032
        %2242 = vmatprep.subr.bf16.mxu0 0
        %2243 = vmatpush1.bf16.msra.mxu0 %v1031
        %2244 = vmatprep.subr.bf16.mxu0 0
        %2245 = vmatpush2.bf16.msra.mxu0 0
        %2246 = vmatprep.subr.bf16.mxu0 0
        %2247 = vmatpush2.bf16.msra.mxu0 0
        %2248 = vmatprep.subr.bf16.mxu0 0
        %2249 = vmatpush2.bf16.msra.mxu0 0
        %2250 = vmatprep.subr.bf16.mxu0 0
        %2251 = vmatpush2.bf16.msra.mxu0 0
        %2252 = vmatprep.subr.bf16.mxu0 0
        %2253 = vmatpush2.bf16.msra.mxu0 0
        %2254 = vmatprep.subr.bf16.mxu0 0
        %2255 = vmatpush2.bf16.msra.mxu0 0
        %2256 = vmatprep.subr.bf16.mxu0 0
        %2257 = vmatpush2.bf16.msra.mxu0 0
        %2258 = vmatprep.subr.bf16.mxu0 0
        %2259 = vmatpush2.bf16.msra.mxu0 0
        %2260 = vmatprep.mubr.bf16.mxu0 0
        %2261 = vmatmul.mubr.bf16.gmra.mxu0 %v2223
        %v2262 = vpop.f32.mrf.mxu0
        %v2263 = vadd.f32 0.0, %v2262
        %v2264 = vpop.f32.mrf.mxu0
        %v2265 = vpop.f32.mrf.mxu0
        %v2266 = vadd.f32 0.0, %v2265
        %v2267 = vpop.f32.mrf.mxu0
        %2268 = vmatprep.mubr.bf16.mxu0 0
        %2269 = vmatmul.mubr.bf16.gmra.mxu0 %v2226
        %v2270 = vpop.f32.mrf.mxu0
        %v2271 = vadd.f32 0.0, %v2270
        %v2272 = vpop.f32.mrf.mxu0
        %v2273 = vpop.f32.mrf.mxu0
        %v2274 = vadd.f32 0.0, %v2273
        %v2275 = vpop.f32.mrf.mxu0
        %2276 = vdwg.mxu0
        %v2278 = vsel %vm1798, %v2155, 0
        %v2281 = vsel %vm1798, %v2156, 0
        %2283 = vmatprep.subr.bf16.mxu0 0
        %2284 = vmatpush1.bf16.msra.mxu0 0
        %2285 = vmatprep.subr.bf16.mxu0 0
        %2286 = vmatpush1.bf16.msra.mxu0 0
        %2287 = vmatprep.subr.bf16.mxu0 0
        %2288 = vmatpush1.bf16.msra.mxu0 0
        %2289 = vmatprep.subr.bf16.mxu0 0
        %2290 = vmatpush1.bf16.msra.mxu0 0
        %2291 = vmatprep.subr.bf16.mxu0 0
        %2292 = vmatpush1.bf16.msra.mxu0 0
        %2293 = vmatprep.subr.bf16.mxu0 0
        %2294 = vmatpush1.bf16.msra.mxu0 0
        %2295 = vmatprep.subr.bf16.mxu0 0
        %2296 = vmatpush1.bf16.msra.mxu0 %v1034
        %2297 = vmatprep.subr.bf16.mxu0 0
        %2298 = vmatpush1.bf16.msra.mxu0 %v1033
        %2299 = vmatprep.subr.bf16.mxu0 0
        %2300 = vmatpush2.bf16.msra.mxu0 0
        %2301 = vmatprep.subr.bf16.mxu0 0
        %2302 = vmatpush2.bf16.msra.mxu0 0
        %2303 = vmatprep.subr.bf16.mxu0 0
        %2304 = vmatpush2.bf16.msra.mxu0 0
        %2305 = vmatprep.subr.bf16.mxu0 0
        %2306 = vmatpush2.bf16.msra.mxu0 0
        %2307 = vmatprep.subr.bf16.mxu0 0
        %2308 = vmatpush2.bf16.msra.mxu0 0
        %2309 = vmatprep.subr.bf16.mxu0 0
        %2310 = vmatpush2.bf16.msra.mxu0 0
        %2311 = vmatprep.subr.bf16.mxu0 0
        %2312 = vmatpush2.bf16.msra.mxu0 0
        %2313 = vmatprep.subr.bf16.mxu0 0
        %2314 = vmatpush2.bf16.msra.mxu0 0
        %2315 = vmatprep.mubr.bf16.mxu0 0
        %2316 = vmatmul.mubr.bf16.gmra.mxu0 %v2278
        %v2317 = vpop.f32.mrf.mxu0
        %v2318 = vadd.f32 0.0, %v2317
        %v2319 = vpop.f32.mrf.mxu0
        %v2320 = vpop.f32.mrf.mxu0
        %v2321 = vadd.f32 0.0, %v2320
        %v2322 = vpop.f32.mrf.mxu0
        %2323 = vmatprep.mubr.bf16.mxu0 0
        %2324 = vmatmul.mubr.bf16.gmra.mxu0 %v2281
        %v2325 = vpop.f32.mrf.mxu0
        %v2326 = vadd.f32 0.0, %v2325
        %v2327 = vpop.f32.mrf.mxu0
        %v2328 = vpop.f32.mrf.mxu0
        %v2329 = vadd.f32 0.0, %v2328
        %v2330 = vpop.f32.mrf.mxu0
        %2331 = vdwg.mxu0
        %v2333 = vsel %vm1798, %v2157, 0
        %v2336 = vsel %vm1798, %v2158, 0
        %2338 = vmatprep.subr.bf16.mxu0 0
        %2339 = vmatpush1.bf16.msra.mxu0 0
        %2340 = vmatprep.subr.bf16.mxu0 0
        %2341 = vmatpush1.bf16.msra.mxu0 0
        %2342 = vmatprep.subr.bf16.mxu0 0
        %2343 = vmatpush1.bf16.msra.mxu0 0
        %2344 = vmatprep.subr.bf16.mxu0 0
        %2345 = vmatpush1.bf16.msra.mxu0 0
        %2346 = vmatprep.subr.bf16.mxu0 0
        %2347 = vmatpush1.bf16.msra.mxu0 0
        %2348 = vmatprep.subr.bf16.mxu0 0
        %2349 = vmatpush1.bf16.msra.mxu0 0
        %2350 = vmatprep.subr.bf16.mxu0 0
        %2351 = vmatpush1.bf16.msra.mxu0 %v1036
        %2352 = vmatprep.subr.bf16.mxu0 0
        %2353 = vmatpush1.bf16.msra.mxu0 %v1035
        %2354 = vmatprep.subr.bf16.mxu0 0
        %2355 = vmatpush2.bf16.msra.mxu0 0
        %2356 = vmatprep.subr.bf16.mxu0 0
        %2357 = vmatpush2.bf16.msra.mxu0 0
        %2358 = vmatprep.subr.bf16.mxu0 0
        %2359 = vmatpush2.bf16.msra.mxu0 0
        %2360 = vmatprep.subr.bf16.mxu0 0
        %2361 = vmatpush2.bf16.msra.mxu0 0
        %2362 = vmatprep.subr.bf16.mxu0 0
        %2363 = vmatpush2.bf16.msra.mxu0 0
        %2364 = vmatprep.subr.bf16.mxu0 0
        %2365 = vmatpush2.bf16.msra.mxu0 0
        %2366 = vmatprep.subr.bf16.mxu0 0
        %2367 = vmatpush2.bf16.msra.mxu0 0
        %2368 = vmatprep.subr.bf16.mxu0 0
        %2369 = vmatpush2.bf16.msra.mxu0 0
        %2370 = vmatprep.mubr.bf16.mxu0 0
        %2371 = vmatmul.mubr.bf16.gmra.mxu0 %v2333
        %v2372 = vpop.f32.mrf.mxu0
        %v2373 = vadd.f32 0.0, %v2372
        %v2374 = vpop.f32.mrf.mxu0
        %v2375 = vpop.f32.mrf.mxu0
        %v2376 = vadd.f32 0.0, %v2375
        %v2377 = vpop.f32.mrf.mxu0
        %2378 = vmatprep.mubr.bf16.mxu0 0
        %2379 = vmatmul.mubr.bf16.gmra.mxu0 %v2336
        %v2380 = vpop.f32.mrf.mxu0
        %v2381 = vadd.f32 0.0, %v2380
        %v2382 = vpop.f32.mrf.mxu0
        %v2383 = vpop.f32.mrf.mxu0
        %v2384 = vadd.f32 0.0, %v2383
        %v2385 = vpop.f32.mrf.mxu0
        %2386 = vdwg.mxu0
        %v2388 = vsel %vm1798, %v2159, 0
        %v2391 = vsel %vm1798, %v2160, 0
        %2393 = vmatprep.subr.bf16.mxu0 0
        %2394 = vmatpush1.bf16.msra.mxu0 0
        %2395 = vmatprep.subr.bf16.mxu0 0
        %2396 = vmatpush1.bf16.msra.mxu0 0
        %2397 = vmatprep.subr.bf16.mxu0 0
        %2398 = vmatpush1.bf16.msra.mxu0 0
        %2399 = vmatprep.subr.bf16.mxu0 0
        %2400 = vmatpush1.bf16.msra.mxu0 0
        %2401 = vmatprep.subr.bf16.mxu0 0
        %2402 = vmatpush1.bf16.msra.mxu0 0
        %2403 = vmatprep.subr.bf16.mxu0 0
        %2404 = vmatpush1.bf16.msra.mxu0 0
        %2405 = vmatprep.subr.bf16.mxu0 0
        %2406 = vmatpush1.bf16.msra.mxu0 %v1038
        %2407 = vmatprep.subr.bf16.mxu0 0
        %2408 = vmatpush1.bf16.msra.mxu0 %v1037
        %2409 = vmatprep.subr.bf16.mxu0 0
        %2410 = vmatpush2.bf16.msra.mxu0 0
        %2411 = vmatprep.subr.bf16.mxu0 0
        %2412 = vmatpush2.bf16.msra.mxu0 0
        %2413 = vmatprep.subr.bf16.mxu0 0
        %2414 = vmatpush2.bf16.msra.mxu0 0
        %2415 = vmatprep.subr.bf16.mxu0 0
        %2416 = vmatpush2.bf16.msra.mxu0 0
        %2417 = vmatprep.subr.bf16.mxu0 0
        %2418 = vmatpush2.bf16.msra.mxu0 0
        %2419 = vmatprep.subr.bf16.mxu0 0
        %2420 = vmatpush2.bf16.msra.mxu0 0
        %2421 = vmatprep.subr.bf16.mxu0 0
        %2422 = vmatpush2.bf16.msra.mxu0 0
        %2423 = vmatprep.subr.bf16.mxu0 0
        %2424 = vmatpush2.bf16.msra.mxu0 0
        %2425 = vmatprep.mubr.bf16.mxu0 0
        %2426 = vmatmul.mubr.bf16.gmra.mxu0 %v2388
        %v2427 = vpop.f32.mrf.mxu0
        %v2428 = vadd.f32 0.0, %v2427
        %v2429 = vpop.f32.mrf.mxu0
        %v2430 = vpop.f32.mrf.mxu0
        %v2431 = vadd.f32 0.0, %v2430
        %v2432 = vpop.f32.mrf.mxu0
        %2433 = vmatprep.mubr.bf16.mxu0 0
        %2434 = vmatmul.mubr.bf16.gmra.mxu0 %v2391
        %v2435 = vpop.f32.mrf.mxu0
        %v2436 = vadd.f32 0.0, %v2435
        %v2437 = vpop.f32.mrf.mxu0
        %v2438 = vpop.f32.mrf.mxu0
        %v2439 = vadd.f32 0.0, %v2438
        %v2440 = vpop.f32.mrf.mxu0
        %2441 = vdwg.mxu0
        %v2443 = vsel %vm1798, %v2161, 0
        %v2446 = vsel %vm1798, %v2162, 0
        %2448 = vmatprep.subr.bf16.mxu0 0
        %2449 = vmatpush1.bf16.msra.mxu0 0
        %2450 = vmatprep.subr.bf16.mxu0 0
        %2451 = vmatpush1.bf16.msra.mxu0 0
        %2452 = vmatprep.subr.bf16.mxu0 0
        %2453 = vmatpush1.bf16.msra.mxu0 0
        %2454 = vmatprep.subr.bf16.mxu0 0
        %2455 = vmatpush1.bf16.msra.mxu0 0
        %2456 = vmatprep.subr.bf16.mxu0 0
        %2457 = vmatpush1.bf16.msra.mxu0 0
        %2458 = vmatprep.subr.bf16.mxu0 0
        %2459 = vmatpush1.bf16.msra.mxu0 0
        %2460 = vmatprep.subr.bf16.mxu0 0
        %2461 = vmatpush1.bf16.msra.mxu0 %v1040
        %2462 = vmatprep.subr.bf16.mxu0 0
        %2463 = vmatpush1.bf16.msra.mxu0 %v1039
        %2464 = vmatprep.subr.bf16.mxu0 0
        %2465 = vmatpush2.bf16.msra.mxu0 0
        %2466 = vmatprep.subr.bf16.mxu0 0
        %2467 = vmatpush2.bf16.msra.mxu0 0
        %2468 = vmatprep.subr.bf16.mxu0 0
        %2469 = vmatpush2.bf16.msra.mxu0 0
        %2470 = vmatprep.subr.bf16.mxu0 0
        %2471 = vmatpush2.bf16.msra.mxu0 0
        %2472 = vmatprep.subr.bf16.mxu0 0
        %2473 = vmatpush2.bf16.msra.mxu0 0
        %2474 = vmatprep.subr.bf16.mxu0 0
        %2475 = vmatpush2.bf16.msra.mxu0 0
        %2476 = vmatprep.subr.bf16.mxu0 0
        %2477 = vmatpush2.bf16.msra.mxu0 0
        %2478 = vmatprep.subr.bf16.mxu0 0
        %2479 = vmatpush2.bf16.msra.mxu0 0
        %2480 = vmatprep.mubr.bf16.mxu0 0
        %2481 = vmatmul.mubr.bf16.gmra.mxu0 %v2443
        %v2482 = vpop.f32.mrf.mxu0
        %v2483 = vadd.f32 0.0, %v2482
        %v2484 = vpop.f32.mrf.mxu0
        %v2485 = vpop.f32.mrf.mxu0
        %v2486 = vadd.f32 0.0, %v2485
        %v2487 = vpop.f32.mrf.mxu0
        %2488 = vmatprep.mubr.bf16.mxu0 0
        %2489 = vmatmul.mubr.bf16.gmra.mxu0 %v2446
        %v2490 = vpop.f32.mrf.mxu0
        %v2491 = vadd.f32 0.0, %v2490
        %v2492 = vpop.f32.mrf.mxu0
        %v2493 = vpop.f32.mrf.mxu0
        %v2494 = vadd.f32 0.0, %v2493
        %v2495 = vpop.f32.mrf.mxu0
        %2496 = vdwg.mxu0
        %v2498 = vsel %vm1798, %v2163, 0
        %v2501 = vsel %vm1798, %v2164, 0
        %2503 = vmatprep.subr.bf16.mxu0 0
        %2504 = vmatpush1.bf16.msra.mxu0 0
        %2505 = vmatprep.subr.bf16.mxu0 0
        %2506 = vmatpush1.bf16.msra.mxu0 0
        %2507 = vmatprep.subr.bf16.mxu0 0
        %2508 = vmatpush1.bf16.msra.mxu0 0
        %2509 = vmatprep.subr.bf16.mxu0 0
        %2510 = vmatpush1.bf16.msra.mxu0 0
        %2511 = vmatprep.subr.bf16.mxu0 0
        %2512 = vmatpush1.bf16.msra.mxu0 0
        %2513 = vmatprep.subr.bf16.mxu0 0
        %2514 = vmatpush1.bf16.msra.mxu0 0
        %2515 = vmatprep.subr.bf16.mxu0 0
        %2516 = vmatpush1.bf16.msra.mxu0 %v1042
        %2517 = vmatprep.subr.bf16.mxu0 0
        %2518 = vmatpush1.bf16.msra.mxu0 %v1041
        %2519 = vmatprep.subr.bf16.mxu0 0
        %2520 = vmatpush2.bf16.msra.mxu0 0
        %2521 = vmatprep.subr.bf16.mxu0 0
        %2522 = vmatpush2.bf16.msra.mxu0 0
        %2523 = vmatprep.subr.bf16.mxu0 0
        %2524 = vmatpush2.bf16.msra.mxu0 0
        %2525 = vmatprep.subr.bf16.mxu0 0
        %2526 = vmatpush2.bf16.msra.mxu0 0
        %2527 = vmatprep.subr.bf16.mxu0 0
        %2528 = vmatpush2.bf16.msra.mxu0 0
        %2529 = vmatprep.subr.bf16.mxu0 0
        %2530 = vmatpush2.bf16.msra.mxu0 0
        %2531 = vmatprep.subr.bf16.mxu0 0
        %2532 = vmatpush2.bf16.msra.mxu0 0
        %2533 = vmatprep.subr.bf16.mxu0 0
        %2534 = vmatpush2.bf16.msra.mxu0 0
        %2535 = vmatprep.mubr.bf16.mxu0 0
        %2536 = vmatmul.mubr.bf16.gmra.mxu0 %v2498
        %v2537 = vpop.f32.mrf.mxu0
        %v2538 = vadd.f32 0.0, %v2537
        %v2539 = vpop.f32.mrf.mxu0
        %v2540 = vpop.f32.mrf.mxu0
        %v2541 = vadd.f32 0.0, %v2540
        %v2542 = vpop.f32.mrf.mxu0
        %2543 = vmatprep.mubr.bf16.mxu0 0
        %2544 = vmatmul.mubr.bf16.gmra.mxu0 %v2501
        %v2545 = vpop.f32.mrf.mxu0
        %v2546 = vadd.f32 0.0, %v2545
        %v2547 = vpop.f32.mrf.mxu0
        %v2548 = vpop.f32.mrf.mxu0
        %v2549 = vadd.f32 0.0, %v2548
        %v2550 = vpop.f32.mrf.mxu0
        %2551 = vdwg.mxu0
        %v2553 = vsel %vm1798, %v2165, 0
        %v2556 = vsel %vm1798, %v2166, 0
        %2558 = vmatprep.subr.bf16.mxu0 0
        %2559 = vmatpush1.bf16.msra.mxu0 0
        %2560 = vmatprep.subr.bf16.mxu0 0
        %2561 = vmatpush1.bf16.msra.mxu0 0
        %2562 = vmatprep.subr.bf16.mxu0 0
        %2563 = vmatpush1.bf16.msra.mxu0 0
        %2564 = vmatprep.subr.bf16.mxu0 0
        %2565 = vmatpush1.bf16.msra.mxu0 0
        %2566 = vmatprep.subr.bf16.mxu0 0
        %2567 = vmatpush1.bf16.msra.mxu0 0
        %2568 = vmatprep.subr.bf16.mxu0 0
        %2569 = vmatpush1.bf16.msra.mxu0 0
        %2570 = vmatprep.subr.bf16.mxu0 0
        %2571 = vmatpush1.bf16.msra.mxu0 %v1044
        %2572 = vmatprep.subr.bf16.mxu0 0
        %2573 = vmatpush1.bf16.msra.mxu0 %v1043
        %2574 = vmatprep.subr.bf16.mxu0 0
        %2575 = vmatpush2.bf16.msra.mxu0 0
        %2576 = vmatprep.subr.bf16.mxu0 0
        %2577 = vmatpush2.bf16.msra.mxu0 0
        %2578 = vmatprep.subr.bf16.mxu0 0
        %2579 = vmatpush2.bf16.msra.mxu0 0
        %2580 = vmatprep.subr.bf16.mxu0 0
        %2581 = vmatpush2.bf16.msra.mxu0 0
        %2582 = vmatprep.subr.bf16.mxu0 0
        %2583 = vmatpush2.bf16.msra.mxu0 0
        %2584 = vmatprep.subr.bf16.mxu0 0
        %2585 = vmatpush2.bf16.msra.mxu0 0
        %2586 = vmatprep.subr.bf16.mxu0 0
        %2587 = vmatpush2.bf16.msra.mxu0 0
        %2588 = vmatprep.subr.bf16.mxu0 0
        %2589 = vmatpush2.bf16.msra.mxu0 0
        %2590 = vmatprep.mubr.bf16.mxu0 0
        %2591 = vmatmul.mubr.bf16.gmra.mxu0 %v2553
        %v2592 = vpop.f32.mrf.mxu0
        %v2593 = vadd.f32 0.0, %v2592
        %v2594 = vpop.f32.mrf.mxu0
        %v2595 = vpop.f32.mrf.mxu0
        %v2596 = vadd.f32 0.0, %v2595
        %v2597 = vpop.f32.mrf.mxu0
        %2598 = vmatprep.mubr.bf16.mxu0 0
        %2599 = vmatmul.mubr.bf16.gmra.mxu0 %v2556
        %v2600 = vpop.f32.mrf.mxu0
        %v2601 = vadd.f32 0.0, %v2600
        %v2602 = vpop.f32.mrf.mxu0
        %v2603 = vpop.f32.mrf.mxu0
        %v2604 = vadd.f32 0.0, %v2603
        %v2605 = vpop.f32.mrf.mxu0
        %2606 = vdwg.mxu0
        %v2607 = vld [vmem:[%s6] sm:$0xff]
        %v2608 = vld [vmem:[%s6 + $0x8] sm:$0xff]
        %v2609 = vld [vmem:[%s6 + $0x10] sm:$0xff]
        %v2610 = vld [vmem:[%s6 + $0x18] sm:$0xff]
        %v2611 = vld [vmem:[%s6 + $0x20] sm:$0xff]
        %v2612 = vld [vmem:[%s6 + $0x28] sm:$0xff]
        %v2613 = vld [vmem:[%s6 + $0x30] sm:$0xff]
        %v2614 = vld [vmem:[%s6 + $0x38] sm:$0xff]
        %v2615 = vld [vmem:[%s6 + $0x40] sm:$0xff]
        %v2616 = vld [vmem:[%s6 + $0x48] sm:$0xff]
        %v2617 = vld [vmem:[%s6 + $0x50] sm:$0xff]
        %v2618 = vld [vmem:[%s6 + $0x58] sm:$0xff]
        %v2619 = vld [vmem:[%s6 + $0x60] sm:$0xff]
        %v2620 = vld [vmem:[%s6 + $0x68] sm:$0xff]
        %v2621 = vld [vmem:[%s6 + $0x70] sm:$0xff]
        %v2622 = vld [vmem:[%s6 + $0x78] sm:$0xff]
        %v2623 = vld [vmem:[%s6 + $0x80] sm:$0xff]
        %v2624 = vld [vmem:[%s6 + $0x88] sm:$0xff]
        %v2625 = vld [vmem:[%s6 + $0x90] sm:$0xff]
        %v2626 = vld [vmem:[%s6 + $0x98] sm:$0xff]
        %v2627 = vld [vmem:[%s6 + $0xa0] sm:$0xff]
        %v2628 = vld [vmem:[%s6 + $0xa8] sm:$0xff]
        %v2629 = vld [vmem:[%s6 + $0xb0] sm:$0xff]
        %v2630 = vld [vmem:[%s6 + $0xb8] sm:$0xff]
        %v2631 = vld [vmem:[%s6 + $0xc0] sm:$0xff]
        %v2632 = vld [vmem:[%s6 + $0xc8] sm:$0xff]
        %v2633 = vld [vmem:[%s6 + $0xd0] sm:$0xff]
        %v2634 = vld [vmem:[%s6 + $0xd8] sm:$0xff]
        %v2635 = vld [vmem:[%s6 + $0xe0] sm:$0xff]
        %v2636 = vld [vmem:[%s6 + $0xe8] sm:$0xff]
        %v2637 = vld [vmem:[%s6 + $0xf0] sm:$0xff]
        %v2638 = vld [vmem:[%s6 + $0xf8] sm:$0xff]
        %v2639 = vld [vmem:[%s6 + $0x100] sm:$0xff]
        %v2640 = vld [vmem:[%s6 + $0x108] sm:$0xff]
        %v2641 = vld [vmem:[%s6 + $0x110] sm:$0xff]
        %v2642 = vld [vmem:[%s6 + $0x118] sm:$0xff]
        %v2643 = vld [vmem:[%s6 + $0x120] sm:$0xff]
        %v2644 = vld [vmem:[%s6 + $0x128] sm:$0xff]
        %v2645 = vld [vmem:[%s6 + $0x130] sm:$0xff]
        %v2646 = vld [vmem:[%s6 + $0x138] sm:$0xff]
        %v2647 = vld [vmem:[%s6 + $0x140] sm:$0xff]
        %v2648 = vld [vmem:[%s6 + $0x148] sm:$0xff]
        %v2649 = vld [vmem:[%s6 + $0x150] sm:$0xff]
        %v2650 = vld [vmem:[%s6 + $0x158] sm:$0xff]
        %v2651 = vld [vmem:[%s6 + $0x160] sm:$0xff]
        %v2652 = vld [vmem:[%s6 + $0x168] sm:$0xff]
        %v2653 = vld [vmem:[%s6 + $0x170] sm:$0xff]
        %v2654 = vld [vmem:[%s6 + $0x178] sm:$0xff]
        %v2655 = vld [vmem:[%s6 + $0x180] sm:$0xff]
        %v2656 = vld [vmem:[%s6 + $0x188] sm:$0xff]
        %v2657 = vld [vmem:[%s6 + $0x190] sm:$0xff]
        %v2658 = vld [vmem:[%s6 + $0x198] sm:$0xff]
        %v2659 = vld [vmem:[%s6 + $0x1a0] sm:$0xff]
        %v2660 = vld [vmem:[%s6 + $0x1a8] sm:$0xff]
        %v2661 = vld [vmem:[%s6 + $0x1b0] sm:$0xff]
        %v2662 = vld [vmem:[%s6 + $0x1b8] sm:$0xff]
        %v2663 = vld [vmem:[%s6 + $0x1c0] sm:$0xff]
        %v2664 = vld [vmem:[%s6 + $0x1c8] sm:$0xff]
        %v2665 = vld [vmem:[%s6 + $0x1d0] sm:$0xff]
        %v2666 = vld [vmem:[%s6 + $0x1d8] sm:$0xff]
        %v2667 = vld [vmem:[%s6 + $0x1e0] sm:$0xff]
        %v2668 = vld [vmem:[%s6 + $0x1e8] sm:$0xff]
        %v2669 = vld [vmem:[%s6 + $0x1f0] sm:$0xff]
        %v2670 = vld [vmem:[%s6 + $0x1f8] sm:$0xff]
        %v2671 = vld [vmem:[%s6 + $0x200] sm:$0xff]
        %v2672 = vld [vmem:[%s6 + $0x208] sm:$0xff]
        %v2673 = vld [vmem:[%s6 + $0x210] sm:$0xff]
        %v2674 = vld [vmem:[%s6 + $0x218] sm:$0xff]
        %v2675 = vld [vmem:[%s6 + $0x220] sm:$0xff]
        %v2676 = vld [vmem:[%s6 + $0x228] sm:$0xff]
        %v2677 = vld [vmem:[%s6 + $0x230] sm:$0xff]
        %v2678 = vld [vmem:[%s6 + $0x238] sm:$0xff]
        %v2679 = vld [vmem:[%s6 + $0x240] sm:$0xff]
        %v2680 = vld [vmem:[%s6 + $0x248] sm:$0xff]
        %v2681 = vld [vmem:[%s6 + $0x250] sm:$0xff]
        %v2682 = vld [vmem:[%s6 + $0x258] sm:$0xff]
        %v2683 = vld [vmem:[%s6 + $0x260] sm:$0xff]
        %v2684 = vld [vmem:[%s6 + $0x268] sm:$0xff]
        %v2685 = vld [vmem:[%s6 + $0x270] sm:$0xff]
        %v2686 = vld [vmem:[%s6 + $0x278] sm:$0xff]
        %v2687 = vld [vmem:[%s6 + $0x280] sm:$0xff]
        %v2688 = vld [vmem:[%s6 + $0x288] sm:$0xff]
        %v2689 = vld [vmem:[%s6 + $0x290] sm:$0xff]
        %v2690 = vld [vmem:[%s6 + $0x298] sm:$0xff]
        %v2691 = vld [vmem:[%s6 + $0x2a0] sm:$0xff]
        %v2692 = vld [vmem:[%s6 + $0x2a8] sm:$0xff]
        %v2693 = vld [vmem:[%s6 + $0x2b0] sm:$0xff]
        %v2694 = vld [vmem:[%s6 + $0x2b8] sm:$0xff]
        %v2695 = vld [vmem:[%s6 + $0x2c0] sm:$0xff]
        %v2696 = vld [vmem:[%s6 + $0x2c8] sm:$0xff]
        %v2697 = vld [vmem:[%s6 + $0x2d0] sm:$0xff]
        %v2698 = vld [vmem:[%s6 + $0x2d8] sm:$0xff]
        %v2699 = vld [vmem:[%s6 + $0x2e0] sm:$0xff]
        %v2700 = vld [vmem:[%s6 + $0x2e8] sm:$0xff]
        %v2701 = vld [vmem:[%s6 + $0x2f0] sm:$0xff]
        %v2702 = vld [vmem:[%s6 + $0x2f8] sm:$0xff]
        %v2703 = vld [vmem:[%s6 + $0x300] sm:$0xff]
        %v2704 = vld [vmem:[%s6 + $0x308] sm:$0xff]
        %v2705 = vld [vmem:[%s6 + $0x310] sm:$0xff]
        %v2706 = vld [vmem:[%s6 + $0x318] sm:$0xff]
        %v2707 = vld [vmem:[%s6 + $0x320] sm:$0xff]
        %v2708 = vld [vmem:[%s6 + $0x328] sm:$0xff]
        %v2709 = vld [vmem:[%s6 + $0x330] sm:$0xff]
        %v2710 = vld [vmem:[%s6 + $0x338] sm:$0xff]
        %v2711 = vld [vmem:[%s6 + $0x340] sm:$0xff]
        %v2712 = vld [vmem:[%s6 + $0x348] sm:$0xff]
        %v2713 = vld [vmem:[%s6 + $0x350] sm:$0xff]
        %v2714 = vld [vmem:[%s6 + $0x358] sm:$0xff]
        %v2715 = vld [vmem:[%s6 + $0x360] sm:$0xff]
        %v2716 = vld [vmem:[%s6 + $0x368] sm:$0xff]
        %v2717 = vld [vmem:[%s6 + $0x370] sm:$0xff]
        %v2718 = vld [vmem:[%s6 + $0x378] sm:$0xff]
        %v2719 = vld [vmem:[%s6 + $0x380] sm:$0xff]
        %v2720 = vld [vmem:[%s6 + $0x388] sm:$0xff]
        %v2721 = vld [vmem:[%s6 + $0x390] sm:$0xff]
        %v2722 = vld [vmem:[%s6 + $0x398] sm:$0xff]
        %v2723 = vld [vmem:[%s6 + $0x3a0] sm:$0xff]
        %v2724 = vld [vmem:[%s6 + $0x3a8] sm:$0xff]
        %v2725 = vld [vmem:[%s6 + $0x3b0] sm:$0xff]
        %v2726 = vld [vmem:[%s6 + $0x3b8] sm:$0xff]
        %v2727 = vld [vmem:[%s6 + $0x3c0] sm:$0xff]
        %v2728 = vld [vmem:[%s6 + $0x3c8] sm:$0xff]
        %v2729 = vld [vmem:[%s6 + $0x3d0] sm:$0xff]
        %v2730 = vld [vmem:[%s6 + $0x3d8] sm:$0xff]
        %v2731 = vld [vmem:[%s6 + $0x3e0] sm:$0xff]
        %v2732 = vld [vmem:[%s6 + $0x3e8] sm:$0xff]
        %v2733 = vld [vmem:[%s6 + $0x3f0] sm:$0xff]
        %v2734 = vld [vmem:[%s6 + $0x3f8] sm:$0xff]
        %v2735 = vld [vmem:[%s6 + $0x400] sm:$0xff]
        %v2736 = vld [vmem:[%s6 + $0x408] sm:$0xff]
        %v2737 = vld [vmem:[%s6 + $0x410] sm:$0xff]
        %v2738 = vld [vmem:[%s6 + $0x418] sm:$0xff]
        %v2739 = vld [vmem:[%s6 + $0x420] sm:$0xff]
        %v2740 = vld [vmem:[%s6 + $0x428] sm:$0xff]
        %v2741 = vld [vmem:[%s6 + $0x430] sm:$0xff]
        %v2742 = vld [vmem:[%s6 + $0x438] sm:$0xff]
        %v2743 = vld [vmem:[%s6 + $0x440] sm:$0xff]
        %v2744 = vld [vmem:[%s6 + $0x448] sm:$0xff]
        %v2745 = vld [vmem:[%s6 + $0x450] sm:$0xff]
        %v2746 = vld [vmem:[%s6 + $0x458] sm:$0xff]
        %v2747 = vld [vmem:[%s6 + $0x460] sm:$0xff]
        %v2748 = vld [vmem:[%s6 + $0x468] sm:$0xff]
        %v2749 = vld [vmem:[%s6 + $0x470] sm:$0xff]
        %v2750 = vld [vmem:[%s6 + $0x478] sm:$0xff]
        %v2751 = vmul.f32 %v997, %v2671
        %v2752 = vmul.f32 %v998, %v2672
        %v2753 = vmul.f32 %v999, %v2673
        %v2754 = vmul.f32 %v1000, %v2674
        %v2755 = vmul.f32 %v1001, %v2675
        %v2756 = vmul.f32 %v1002, %v2676
        %v2757 = vmul.f32 %v1003, %v2677
        %v2758 = vmul.f32 %v1004, %v2678
        %v2759 = vmul.f32 %v1005, %v2679
        %v2760 = vmul.f32 %v1006, %v2680
        %v2761 = vmul.f32 %v1007, %v2681
        %v2762 = vmul.f32 %v1008, %v2682
        %v2763 = vmul.f32 %v1009, %v2683
        %v2764 = vmul.f32 %v1010, %v2684
        %v2765 = vmul.f32 %v1011, %v2685
        %v2766 = vmul.f32 %v1012, %v2686
        %v2767 = vmul.f32 %v1013, %v2671
        %v2768 = vmul.f32 %v1014, %v2672
        %v2769 = vmul.f32 %v1015, %v2673
        %v2770 = vmul.f32 %v1016, %v2674
        %v2771 = vmul.f32 %v1017, %v2675
        %v2772 = vmul.f32 %v1018, %v2676
        %v2773 = vmul.f32 %v1019, %v2677
        %v2774 = vmul.f32 %v1020, %v2678
        %v2775 = vmul.f32 %v1021, %v2679
        %v2776 = vmul.f32 %v1022, %v2680
        %v2777 = vmul.f32 %v1023, %v2681
        %v2778 = vmul.f32 %v1024, %v2682
        %v2779 = vmul.f32 %v1025, %v2683
        %v2780 = vmul.f32 %v1026, %v2684
        %v2781 = vmul.f32 %v1027, %v2685
        %v2782 = vmul.f32 %v1028, %v2686
        %v2783 = vrot.slane %v997, 3
        %v2784 = vrot.slane %v1001, 3
        %v2785 = vrot.slane %v1005, 3
        %v2786 = vrot.slane %v1009, 3
        %v2787 = vrot.slane %v1013, 3
        %v2788 = vrot.slane %v1017, 3
        %v2789 = vrot.slane %v1021, 3
        %v2790 = vrot.slane %v1025, 3
        %v2791 = vrot.slane %v998, 3
        %v2792 = vrot.slane %v1002, 3
        %v2793 = vrot.slane %v1006, 3
        %v2794 = vrot.slane %v1010, 3
        %v2795 = vrot.slane %v1014, 3
        %v2796 = vrot.slane %v1018, 3
        %v2797 = vrot.slane %v1022, 3
        %v2798 = vrot.slane %v1026, 3
        %v2799 = vrot.slane %v999, 3
        %v2800 = vrot.slane %v1003, 3
        %v2801 = vrot.slane %v1007, 3
        %v2802 = vrot.slane %v1011, 3
        %v2803 = vrot.slane %v1015, 3
        %v2804 = vrot.slane %v1019, 3
        %v2805 = vrot.slane %v1023, 3
        %v2806 = vrot.slane %v1027, 3
        %v2807 = vrot.slane %v1000, 3
        %v2808 = vrot.slane %v1004, 3
        %v2809 = vrot.slane %v1008, 3
        %v2810 = vrot.slane %v1012, 3
        %v2811 = vrot.slane %v1016, 3
        %v2812 = vrot.slane %v1020, 3
        %v2813 = vrot.slane %v1024, 3
        %v2814 = vrot.slane %v1028, 3
        %v2815 = vlaneseq
        %v2816 = vshrl.u32 %v2815, 7
        %vm2817 = vcmp.lt.s32.totalorder %v2816, 5
        %v2818 = vsel %vm2817, %v2799, %v2807
        %v2819 = vsel %vm2817, %v2800, %v2808
        %v2820 = vsel %vm2817, %v2801, %v2809
        %v2821 = vsel %vm2817, %v2802, %v2810
        %v2822 = vsel %vm2817, %v2803, %v2811
        %v2823 = vsel %vm2817, %v2804, %v2812
        %v2824 = vsel %vm2817, %v2805, %v2813
        %v2825 = vsel %vm2817, %v2806, %v2814
        %v2826 = vsel %vm2817, %v2791, %v2799
        %v2827 = vsel %vm2817, %v2792, %v2800
        %v2828 = vsel %vm2817, %v2793, %v2801
        %v2829 = vsel %vm2817, %v2794, %v2802
        %v2830 = vsel %vm2817, %v2795, %v2803
        %v2831 = vsel %vm2817, %v2796, %v2804
        %v2832 = vsel %vm2817, %v2797, %v2805
        %v2833 = vsel %vm2817, %v2798, %v2806
        %v2834 = vsel %vm2817, %v2783, %v2791
        %v2835 = vsel %vm2817, %v2784, %v2792
        %v2836 = vsel %vm2817, %v2785, %v2793
        %v2837 = vsel %vm2817, %v2786, %v2794
        %v2838 = vsel %vm2817, %v2787, %v2795
        %v2839 = vsel %vm2817, %v2788, %v2796
        %v2840 = vsel %vm2817, %v2789, %v2797
        %v2841 = vsel %vm2817, %v2790, %v2798
        %v2842 = vsel %vm2817, %v2807, %v2783
        %v2843 = vsel %vm2817, %v2808, %v2784
        %v2844 = vsel %vm2817, %v2809, %v2785
        %v2845 = vsel %vm2817, %v2810, %v2786
        %v2846 = vsel %vm2817, %v2811, %v2787
        %v2847 = vsel %vm2817, %v2812, %v2788
        %v2848 = vsel %vm2817, %v2813, %v2789
        %v2849 = vsel %vm2817, %v2814, %v2790
        %v2850 = vmul.f32 %v2842, %v2607
        %v2851 = vmul.f32 %v2834, %v2608
        %v2852 = vmul.f32 %v2826, %v2609
        %v2853 = vmul.f32 %v2818, %v2610
        %v2854 = vmul.f32 %v2843, %v2611
        %v2855 = vmul.f32 %v2835, %v2612
        %v2856 = vmul.f32 %v2827, %v2613
        %v2857 = vmul.f32 %v2819, %v2614
        %v2858 = vmul.f32 %v2844, %v2615
        %v2859 = vmul.f32 %v2836, %v2616
        %v2860 = vmul.f32 %v2828, %v2617
        %v2861 = vmul.f32 %v2820, %v2618
        %v2862 = vmul.f32 %v2845, %v2619
        %v2863 = vmul.f32 %v2837, %v2620
        %v2864 = vmul.f32 %v2829, %v2621
        %v2865 = vmul.f32 %v2821, %v2622
        %v2866 = vmul.f32 %v2846, %v2607
        %v2867 = vmul.f32 %v2838, %v2608
        %v2868 = vmul.f32 %v2830, %v2609
        %v2869 = vmul.f32 %v2822, %v2610
        %v2870 = vmul.f32 %v2847, %v2611
        %v2871 = vmul.f32 %v2839, %v2612
        %v2872 = vmul.f32 %v2831, %v2613
        %v2873 = vmul.f32 %v2823, %v2614
        %v2874 = vmul.f32 %v2848, %v2615
        %v2875 = vmul.f32 %v2840, %v2616
        %v2876 = vmul.f32 %v2832, %v2617
        %v2877 = vmul.f32 %v2824, %v2618
        %v2878 = vmul.f32 %v2849, %v2619
        %v2879 = vmul.f32 %v2841, %v2620
        %v2880 = vmul.f32 %v2833, %v2621
        %v2881 = vmul.f32 %v2825, %v2622
        %v2882 = vadd.f32 %v2751, %v2850
        %v2883 = vadd.f32 %v2752, %v2851
        %v2884 = vadd.f32 %v2753, %v2852
        %v2885 = vadd.f32 %v2754, %v2853
        %v2886 = vadd.f32 %v2755, %v2854
        %v2887 = vadd.f32 %v2756, %v2855
        %v2888 = vadd.f32 %v2757, %v2856
        %v2889 = vadd.f32 %v2758, %v2857
        %v2890 = vadd.f32 %v2759, %v2858
        %v2891 = vadd.f32 %v2760, %v2859
        %v2892 = vadd.f32 %v2761, %v2860
        %v2893 = vadd.f32 %v2762, %v2861
        %v2894 = vadd.f32 %v2763, %v2862
        %v2895 = vadd.f32 %v2764, %v2863
        %v2896 = vadd.f32 %v2765, %v2864
        %v2897 = vadd.f32 %v2766, %v2865
        %v2898 = vadd.f32 %v2767, %v2866
        %v2899 = vadd.f32 %v2768, %v2867
        %v2900 = vadd.f32 %v2769, %v2868
        %v2901 = vadd.f32 %v2770, %v2869
        %v2902 = vadd.f32 %v2771, %v2870
        %v2903 = vadd.f32 %v2772, %v2871
        %v2904 = vadd.f32 %v2773, %v2872
        %v2905 = vadd.f32 %v2774, %v2873
        %v2906 = vadd.f32 %v2775, %v2874
        %v2907 = vadd.f32 %v2776, %v2875
        %v2908 = vadd.f32 %v2777, %v2876
        %v2909 = vadd.f32 %v2778, %v2877
        %v2910 = vadd.f32 %v2779, %v2878
        %v2911 = vadd.f32 %v2780, %v2879
        %v2912 = vadd.f32 %v2781, %v2880
        %v2913 = vadd.f32 %v2782, %v2881
        %v2914 = vrot.slane %v997, 4
        %v2915 = vrot.slane %v1001, 4
        %v2916 = vrot.slane %v1005, 4
        %v2917 = vrot.slane %v1009, 4
        %v2918 = vrot.slane %v1013, 4
        %v2919 = vrot.slane %v1017, 4
        %v2920 = vrot.slane %v1021, 4
        %v2921 = vrot.slane %v1025, 4
        %v2922 = vrot.slane %v998, 4
        %v2923 = vrot.slane %v1002, 4
        %v2924 = vrot.slane %v1006, 4
        %v2925 = vrot.slane %v1010, 4
        %v2926 = vrot.slane %v1014, 4
        %v2927 = vrot.slane %v1018, 4
        %v2928 = vrot.slane %v1022, 4
        %v2929 = vrot.slane %v1026, 4
        %v2930 = vrot.slane %v999, 4
        %v2931 = vrot.slane %v1003, 4
        %v2932 = vrot.slane %v1007, 4
        %v2933 = vrot.slane %v1011, 4
        %v2934 = vrot.slane %v1015, 4
        %v2935 = vrot.slane %v1019, 4
        %v2936 = vrot.slane %v1023, 4
        %v2937 = vrot.slane %v1027, 4
        %v2938 = vrot.slane %v1000, 4
        %v2939 = vrot.slane %v1004, 4
        %v2940 = vrot.slane %v1008, 4
        %v2941 = vrot.slane %v1012, 4
        %v2942 = vrot.slane %v1016, 4
        %v2943 = vrot.slane %v1020, 4
        %v2944 = vrot.slane %v1024, 4
        %v2945 = vrot.slane %v1028, 4
        %vm2946 = vcmp.lt.s32.totalorder %v2816, 4
        %v2947 = vsel %vm2946, %v2930, %v2938
        %v2948 = vsel %vm2946, %v2931, %v2939
        %v2949 = vsel %vm2946, %v2932, %v2940
        %v2950 = vsel %vm2946, %v2933, %v2941
        %v2951 = vsel %vm2946, %v2934, %v2942
        %v2952 = vsel %vm2946, %v2935, %v2943
        %v2953 = vsel %vm2946, %v2936, %v2944
        %v2954 = vsel %vm2946, %v2937, %v2945
        %v2955 = vsel %vm2946, %v2922, %v2930
        %v2956 = vsel %vm2946, %v2923, %v2931
        %v2957 = vsel %vm2946, %v2924, %v2932
        %v2958 = vsel %vm2946, %v2925, %v2933
        %v2959 = vsel %vm2946, %v2926, %v2934
        %v2960 = vsel %vm2946, %v2927, %v2935
        %v2961 = vsel %vm2946, %v2928, %v2936
        %v2962 = vsel %vm2946, %v2929, %v2937
        %v2963 = vsel %vm2946, %v2914, %v2922
        %v2964 = vsel %vm2946, %v2915, %v2923
        %v2965 = vsel %vm2946, %v2916, %v2924
        %v2966 = vsel %vm2946, %v2917, %v2925
        %v2967 = vsel %vm2946, %v2918, %v2926
        %v2968 = vsel %vm2946, %v2919, %v2927
        %v2969 = vsel %vm2946, %v2920, %v2928
        %v2970 = vsel %vm2946, %v2921, %v2929
        %v2971 = vsel %vm2946, %v2938, %v2914
        %v2972 = vsel %vm2946, %v2939, %v2915
        %v2973 = vsel %vm2946, %v2940, %v2916
        %v2974 = vsel %vm2946, %v2941, %v2917
        %v2975 = vsel %vm2946, %v2942, %v2918
        %v2976 = vsel %vm2946, %v2943, %v2919
        %v2977 = vsel %vm2946, %v2944, %v2920
        %v2978 = vsel %vm2946, %v2945, %v2921
        %v2979 = vmul.f32 %v2971, %v2623
        %v2980 = vmul.f32 %v2963, %v2624
        %v2981 = vmul.f32 %v2955, %v2625
        %v2982 = vmul.f32 %v2947, %v2626
        %v2983 = vmul.f32 %v2972, %v2627
        %v2984 = vmul.f32 %v2964, %v2628
        %v2985 = vmul.f32 %v2956, %v2629
        %v2986 = vmul.f32 %v2948, %v2630
        %v2987 = vmul.f32 %v2973, %v2631
        %v2988 = vmul.f32 %v2965, %v2632
        %v2989 = vmul.f32 %v2957, %v2633
        %v2990 = vmul.f32 %v2949, %v2634
        %v2991 = vmul.f32 %v2974, %v2635
        %v2992 = vmul.f32 %v2966, %v2636
        %v2993 = vmul.f32 %v2958, %v2637
        %v2994 = vmul.f32 %v2950, %v2638
        %v2995 = vmul.f32 %v2975, %v2623
        %v2996 = vmul.f32 %v2967, %v2624
        %v2997 = vmul.f32 %v2959, %v2625
        %v2998 = vmul.f32 %v2951, %v2626
        %v2999 = vmul.f32 %v2976, %v2627
        %v3000 = vmul.f32 %v2968, %v2628
        %v3001 = vmul.f32 %v2960, %v2629
        %v3002 = vmul.f32 %v2952, %v2630
        %v3003 = vmul.f32 %v2977, %v2631
        %v3004 = vmul.f32 %v2969, %v2632
        %v3005 = vmul.f32 %v2961, %v2633
        %v3006 = vmul.f32 %v2953, %v2634
        %v3007 = vmul.f32 %v2978, %v2635
        %v3008 = vmul.f32 %v2970, %v2636
        %v3009 = vmul.f32 %v2962, %v2637
        %v3010 = vmul.f32 %v2954, %v2638
        %v3011 = vadd.f32 %v2882, %v2979
        %v3012 = vadd.f32 %v2883, %v2980
        %v3013 = vadd.f32 %v2884, %v2981
        %v3014 = vadd.f32 %v2885, %v2982
        %v3015 = vadd.f32 %v2886, %v2983
        %v3016 = vadd.f32 %v2887, %v2984
        %v3017 = vadd.f32 %v2888, %v2985
        %v3018 = vadd.f32 %v2889, %v2986
        %v3019 = vadd.f32 %v2890, %v2987
        %v3020 = vadd.f32 %v2891, %v2988
        %v3021 = vadd.f32 %v2892, %v2989
        %v3022 = vadd.f32 %v2893, %v2990
        %v3023 = vadd.f32 %v2894, %v2991
        %v3024 = vadd.f32 %v2895, %v2992
        %v3025 = vadd.f32 %v2896, %v2993
        %v3026 = vadd.f32 %v2897, %v2994
        %v3027 = vadd.f32 %v2898, %v2995
        %v3028 = vadd.f32 %v2899, %v2996
        %v3029 = vadd.f32 %v2900, %v2997
        %v3030 = vadd.f32 %v2901, %v2998
        %v3031 = vadd.f32 %v2902, %v2999
        %v3032 = vadd.f32 %v2903, %v3000
        %v3033 = vadd.f32 %v2904, %v3001
        %v3034 = vadd.f32 %v2905, %v3002
        %v3035 = vadd.f32 %v2906, %v3003
        %v3036 = vadd.f32 %v2907, %v3004
        %v3037 = vadd.f32 %v2908, %v3005
        %v3038 = vadd.f32 %v2909, %v3006
        %v3039 = vadd.f32 %v2910, %v3007
        %v3040 = vadd.f32 %v2911, %v3008
        %v3041 = vadd.f32 %v2912, %v3009
        %v3042 = vadd.f32 %v2913, %v3010
        %v3043 = vrot.slane %v997, 5
        %v3044 = vrot.slane %v1001, 5
        %v3045 = vrot.slane %v1005, 5
        %v3046 = vrot.slane %v1009, 5
        %v3047 = vrot.slane %v1013, 5
        %v3048 = vrot.slane %v1017, 5
        %v3049 = vrot.slane %v1021, 5
        %v3050 = vrot.slane %v1025, 5
        %v3051 = vrot.slane %v998, 5
        %v3052 = vrot.slane %v1002, 5
        %v3053 = vrot.slane %v1006, 5
        %v3054 = vrot.slane %v1010, 5
        %v3055 = vrot.slane %v1014, 5
        %v3056 = vrot.slane %v1018, 5
        %v3057 = vrot.slane %v1022, 5
        %v3058 = vrot.slane %v1026, 5
        %v3059 = vrot.slane %v999, 5
        %v3060 = vrot.slane %v1003, 5
        %v3061 = vrot.slane %v1007, 5
        %v3062 = vrot.slane %v1011, 5
        %v3063 = vrot.slane %v1015, 5
        %v3064 = vrot.slane %v1019, 5
        %v3065 = vrot.slane %v1023, 5
        %v3066 = vrot.slane %v1027, 5
        %v3067 = vrot.slane %v1000, 5
        %v3068 = vrot.slane %v1004, 5
        %v3069 = vrot.slane %v1008, 5
        %v3070 = vrot.slane %v1012, 5
        %v3071 = vrot.slane %v1016, 5
        %v3072 = vrot.slane %v1020, 5
        %v3073 = vrot.slane %v1024, 5
        %v3074 = vrot.slane %v1028, 5
        %vm3075 = vcmp.lt.s32.totalorder %v2816, 3
        %v3076 = vsel %vm3075, %v3059, %v3067
        %v3077 = vsel %vm3075, %v3060, %v3068
        %v3078 = vsel %vm3075, %v3061, %v3069
        %v3079 = vsel %vm3075, %v3062, %v3070
        %v3080 = vsel %vm3075, %v3063, %v3071
        %v3081 = vsel %vm3075, %v3064, %v3072
        %v3082 = vsel %vm3075, %v3065, %v3073
        %v3083 = vsel %vm3075, %v3066, %v3074
        %v3084 = vsel %vm3075, %v3051, %v3059
        %v3085 = vsel %vm3075, %v3052, %v3060
        %v3086 = vsel %vm3075, %v3053, %v3061
        %v3087 = vsel %vm3075, %v3054, %v3062
        %v3088 = vsel %vm3075, %v3055, %v3063
        %v3089 = vsel %vm3075, %v3056, %v3064
        %v3090 = vsel %vm3075, %v3057, %v3065
        %v3091 = vsel %vm3075, %v3058, %v3066
        %v3092 = vsel %vm3075, %v3043, %v3051
        %v3093 = vsel %vm3075, %v3044, %v3052
        %v3094 = vsel %vm3075, %v3045, %v3053
        %v3095 = vsel %vm3075, %v3046, %v3054
        %v3096 = vsel %vm3075, %v3047, %v3055
        %v3097 = vsel %vm3075, %v3048, %v3056
        %v3098 = vsel %vm3075, %v3049, %v3057
        %v3099 = vsel %vm3075, %v3050, %v3058
        %v3100 = vsel %vm3075, %v3067, %v3043
        %v3101 = vsel %vm3075, %v3068, %v3044
        %v3102 = vsel %vm3075, %v3069, %v3045
        %v3103 = vsel %vm3075, %v3070, %v3046
        %v3104 = vsel %vm3075, %v3071, %v3047
        %v3105 = vsel %vm3075, %v3072, %v3048
        %v3106 = vsel %vm3075, %v3073, %v3049
        %v3107 = vsel %vm3075, %v3074, %v3050
        %v3108 = vmul.f32 %v3100, %v2639
        %v3109 = vmul.f32 %v3092, %v2640
        %v3110 = vmul.f32 %v3084, %v2641
        %v3111 = vmul.f32 %v3076, %v2642
        %v3112 = vmul.f32 %v3101, %v2643
        %v3113 = vmul.f32 %v3093, %v2644
        %v3114 = vmul.f32 %v3085, %v2645
        %v3115 = vmul.f32 %v3077, %v2646
        %v3116 = vmul.f32 %v3102, %v2647
        %v3117 = vmul.f32 %v3094, %v2648
        %v3118 = vmul.f32 %v3086, %v2649
        %v3119 = vmul.f32 %v3078, %v2650
        %v3120 = vmul.f32 %v3103, %v2651
        %v3121 = vmul.f32 %v3095, %v2652
        %v3122 = vmul.f32 %v3087, %v2653
        %v3123 = vmul.f32 %v3079, %v2654
        %v3124 = vmul.f32 %v3104, %v2639
        %v3125 = vmul.f32 %v3096, %v2640
        %v3126 = vmul.f32 %v3088, %v2641
        %v3127 = vmul.f32 %v3080, %v2642
        %v3128 = vmul.f32 %v3105, %v2643
        %v3129 = vmul.f32 %v3097, %v2644
        %v3130 = vmul.f32 %v3089, %v2645
        %v3131 = vmul.f32 %v3081, %v2646
        %v3132 = vmul.f32 %v3106, %v2647
        %v3133 = vmul.f32 %v3098, %v2648
        %v3134 = vmul.f32 %v3090, %v2649
        %v3135 = vmul.f32 %v3082, %v2650
        %v3136 = vmul.f32 %v3107, %v2651
        %v3137 = vmul.f32 %v3099, %v2652
        %v3138 = vmul.f32 %v3091, %v2653
        %v3139 = vmul.f32 %v3083, %v2654
        %v3140 = vadd.f32 %v3011, %v3108
        %v3141 = vadd.f32 %v3012, %v3109
        %v3142 = vadd.f32 %v3013, %v3110
        %v3143 = vadd.f32 %v3014, %v3111
        %v3144 = vadd.f32 %v3015, %v3112
        %v3145 = vadd.f32 %v3016, %v3113
        %v3146 = vadd.f32 %v3017, %v3114
        %v3147 = vadd.f32 %v3018, %v3115
        %v3148 = vadd.f32 %v3019, %v3116
        %v3149 = vadd.f32 %v3020, %v3117
        %v3150 = vadd.f32 %v3021, %v3118
        %v3151 = vadd.f32 %v3022, %v3119
        %v3152 = vadd.f32 %v3023, %v3120
        %v3153 = vadd.f32 %v3024, %v3121
        %v3154 = vadd.f32 %v3025, %v3122
        %v3155 = vadd.f32 %v3026, %v3123
        %v3156 = vadd.f32 %v3027, %v3124
        %v3157 = vadd.f32 %v3028, %v3125
        %v3158 = vadd.f32 %v3029, %v3126
        %v3159 = vadd.f32 %v3030, %v3127
        %v3160 = vadd.f32 %v3031, %v3128
        %v3161 = vadd.f32 %v3032, %v3129
        %v3162 = vadd.f32 %v3033, %v3130
        %v3163 = vadd.f32 %v3034, %v3131
        %v3164 = vadd.f32 %v3035, %v3132
        %v3165 = vadd.f32 %v3036, %v3133
        %v3166 = vadd.f32 %v3037, %v3134
        %v3167 = vadd.f32 %v3038, %v3135
        %v3168 = vadd.f32 %v3039, %v3136
        %v3169 = vadd.f32 %v3040, %v3137
        %v3170 = vadd.f32 %v3041, %v3138
        %v3171 = vadd.f32 %v3042, %v3139
        %v3172 = vrot.slane %v997, 7
        %v3173 = vrot.slane %v1001, 7
        %v3174 = vrot.slane %v1005, 7
        %v3175 = vrot.slane %v1009, 7
        %v3176 = vrot.slane %v1013, 7
        %v3177 = vrot.slane %v1017, 7
        %v3178 = vrot.slane %v1021, 7
        %v3179 = vrot.slane %v1025, 7
        %v3180 = vrot.slane %v998, 7
        %v3181 = vrot.slane %v1002, 7
        %v3182 = vrot.slane %v1006, 7
        %v3183 = vrot.slane %v1010, 7
        %v3184 = vrot.slane %v1014, 7
        %v3185 = vrot.slane %v1018, 7
        %v3186 = vrot.slane %v1022, 7
        %v3187 = vrot.slane %v1026, 7
        %v3188 = vrot.slane %v999, 7
        %v3189 = vrot.slane %v1003, 7
        %v3190 = vrot.slane %v1007, 7
        %v3191 = vrot.slane %v1011, 7
        %v3192 = vrot.slane %v1015, 7
        %v3193 = vrot.slane %v1019, 7
        %v3194 = vrot.slane %v1023, 7
        %v3195 = vrot.slane %v1027, 7
        %v3196 = vrot.slane %v1000, 7
        %v3197 = vrot.slane %v1004, 7
        %v3198 = vrot.slane %v1008, 7
        %v3199 = vrot.slane %v1012, 7
        %v3200 = vrot.slane %v1016, 7
        %v3201 = vrot.slane %v1020, 7
        %v3202 = vrot.slane %v1024, 7
        %v3203 = vrot.slane %v1028, 7
        %vm3204 = vcmp.lt.s32.totalorder %v2816, 1
        %v3205 = vsel %vm3204, %v3188, %v3196
        %v3206 = vsel %vm3204, %v3189, %v3197
        %v3207 = vsel %vm3204, %v3190, %v3198
        %v3208 = vsel %vm3204, %v3191, %v3199
        %v3209 = vsel %vm3204, %v3192, %v3200
        %v3210 = vsel %vm3204, %v3193, %v3201
        %v3211 = vsel %vm3204, %v3194, %v3202
        %v3212 = vsel %vm3204, %v3195, %v3203
        %v3213 = vsel %vm3204, %v3180, %v3188
        %v3214 = vsel %vm3204, %v3181, %v3189
        %v3215 = vsel %vm3204, %v3182, %v3190
        %v3216 = vsel %vm3204, %v3183, %v3191
        %v3217 = vsel %vm3204, %v3184, %v3192
        %v3218 = vsel %vm3204, %v3185, %v3193
        %v3219 = vsel %vm3204, %v3186, %v3194
        %v3220 = vsel %vm3204, %v3187, %v3195
        %v3221 = vsel %vm3204, %v3172, %v3180
        %v3222 = vsel %vm3204, %v3173, %v3181
        %v3223 = vsel %vm3204, %v3174, %v3182
        %v3224 = vsel %vm3204, %v3175, %v3183
        %v3225 = vsel %vm3204, %v3176, %v3184
        %v3226 = vsel %vm3204, %v3177, %v3185
        %v3227 = vsel %vm3204, %v3178, %v3186
        %v3228 = vsel %vm3204, %v3179, %v3187
        %v3229 = vsel %vm3204, %v3196, %v3172
        %v3230 = vsel %vm3204, %v3197, %v3173
        %v3231 = vsel %vm3204, %v3198, %v3174
        %v3232 = vsel %vm3204, %v3199, %v3175
        %v3233 = vsel %vm3204, %v3200, %v3176
        %v3234 = vsel %vm3204, %v3201, %v3177
        %v3235 = vsel %vm3204, %v3202, %v3178
        %v3236 = vsel %vm3204, %v3203, %v3179
        %v3237 = vmul.f32 %v3229, %v2655
        %v3238 = vmul.f32 %v3221, %v2656
        %v3239 = vmul.f32 %v3213, %v2657
        %v3240 = vmul.f32 %v3205, %v2658
        %v3241 = vmul.f32 %v3230, %v2659
        %v3242 = vmul.f32 %v3222, %v2660
        %v3243 = vmul.f32 %v3214, %v2661
        %v3244 = vmul.f32 %v3206, %v2662
        %v3245 = vmul.f32 %v3231, %v2663
        %v3246 = vmul.f32 %v3223, %v2664
        %v3247 = vmul.f32 %v3215, %v2665
        %v3248 = vmul.f32 %v3207, %v2666
        %v3249 = vmul.f32 %v3232, %v2667
        %v3250 = vmul.f32 %v3224, %v2668
        %v3251 = vmul.f32 %v3216, %v2669
        %v3252 = vmul.f32 %v3208, %v2670
        %v3253 = vmul.f32 %v3233, %v2655
        %v3254 = vmul.f32 %v3225, %v2656
        %v3255 = vmul.f32 %v3217, %v2657
        %v3256 = vmul.f32 %v3209, %v2658
        %v3257 = vmul.f32 %v3234, %v2659
        %v3258 = vmul.f32 %v3226, %v2660
        %v3259 = vmul.f32 %v3218, %v2661
        %v3260 = vmul.f32 %v3210, %v2662
        %v3261 = vmul.f32 %v3235, %v2663
        %v3262 = vmul.f32 %v3227, %v2664
        %v3263 = vmul.f32 %v3219, %v2665
        %v3264 = vmul.f32 %v3211, %v2666
        %v3265 = vmul.f32 %v3236, %v2667
        %v3266 = vmul.f32 %v3228, %v2668
        %v3267 = vmul.f32 %v3220, %v2669
        %v3268 = vmul.f32 %v3212, %v2670
        %v3269 = vadd.f32 %v3140, %v3237
        %v3270 = vadd.f32 %v3141, %v3238
        %v3271 = vadd.f32 %v3142, %v3239
        %v3272 = vadd.f32 %v3143, %v3240
        %v3273 = vadd.f32 %v3144, %v3241
        %v3274 = vadd.f32 %v3145, %v3242
        %v3275 = vadd.f32 %v3146, %v3243
        %v3276 = vadd.f32 %v3147, %v3244
        %v3277 = vadd.f32 %v3148, %v3245
        %v3278 = vadd.f32 %v3149, %v3246
        %v3279 = vadd.f32 %v3150, %v3247
        %v3280 = vadd.f32 %v3151, %v3248
        %v3281 = vadd.f32 %v3152, %v3249
        %v3282 = vadd.f32 %v3153, %v3250
        %v3283 = vadd.f32 %v3154, %v3251
        %v3284 = vadd.f32 %v3155, %v3252
        %v3285 = vadd.f32 %v3156, %v3253
        %v3286 = vadd.f32 %v3157, %v3254
        %v3287 = vadd.f32 %v3158, %v3255
        %v3288 = vadd.f32 %v3159, %v3256
        %v3289 = vadd.f32 %v3160, %v3257
        %v3290 = vadd.f32 %v3161, %v3258
        %v3291 = vadd.f32 %v3162, %v3259
        %v3292 = vadd.f32 %v3163, %v3260
        %v3293 = vadd.f32 %v3164, %v3261
        %v3294 = vadd.f32 %v3165, %v3262
        %v3295 = vadd.f32 %v3166, %v3263
        %v3296 = vadd.f32 %v3167, %v3264
        %v3297 = vadd.f32 %v3168, %v3265
        %v3298 = vadd.f32 %v3169, %v3266
        %v3299 = vadd.f32 %v3170, %v3267
        %v3300 = vadd.f32 %v3171, %v3268
        %v3301 = vrot.slane %v997, 1
        %v3302 = vrot.slane %v1001, 1
        %v3303 = vrot.slane %v1005, 1
        %v3304 = vrot.slane %v1009, 1
        %v3305 = vrot.slane %v1013, 1
        %v3306 = vrot.slane %v1017, 1
        %v3307 = vrot.slane %v1021, 1
        %v3308 = vrot.slane %v1025, 1
        %v3309 = vrot.slane %v998, 1
        %v3310 = vrot.slane %v1002, 1
        %v3311 = vrot.slane %v1006, 1
        %v3312 = vrot.slane %v1010, 1
        %v3313 = vrot.slane %v1014, 1
        %v3314 = vrot.slane %v1018, 1
        %v3315 = vrot.slane %v1022, 1
        %v3316 = vrot.slane %v1026, 1
        %v3317 = vrot.slane %v999, 1
        %v3318 = vrot.slane %v1003, 1
        %v3319 = vrot.slane %v1007, 1
        %v3320 = vrot.slane %v1011, 1
        %v3321 = vrot.slane %v1015, 1
        %v3322 = vrot.slane %v1019, 1
        %v3323 = vrot.slane %v1023, 1
        %v3324 = vrot.slane %v1027, 1
        %v3325 = vrot.slane %v1000, 1
        %v3326 = vrot.slane %v1004, 1
        %v3327 = vrot.slane %v1008, 1
        %v3328 = vrot.slane %v1012, 1
        %v3329 = vrot.slane %v1016, 1
        %v3330 = vrot.slane %v1020, 1
        %v3331 = vrot.slane %v1024, 1
        %v3332 = vrot.slane %v1028, 1
        %vm3333 = vcmp.lt.s32.totalorder %v2816, 7
        %v3334 = vsel %vm3333, %v3317, %v3325
        %v3335 = vsel %vm3333, %v3318, %v3326
        %v3336 = vsel %vm3333, %v3319, %v3327
        %v3337 = vsel %vm3333, %v3320, %v3328
        %v3338 = vsel %vm3333, %v3321, %v3329
        %v3339 = vsel %vm3333, %v3322, %v3330
        %v3340 = vsel %vm3333, %v3323, %v3331
        %v3341 = vsel %vm3333, %v3324, %v3332
        %v3342 = vsel %vm3333, %v3309, %v3317
        %v3343 = vsel %vm3333, %v3310, %v3318
        %v3344 = vsel %vm3333, %v3311, %v3319
        %v3345 = vsel %vm3333, %v3312, %v3320
        %v3346 = vsel %vm3333, %v3313, %v3321
        %v3347 = vsel %vm3333, %v3314, %v3322
        %v3348 = vsel %vm3333, %v3315, %v3323
        %v3349 = vsel %vm3333, %v3316, %v3324
        %v3350 = vsel %vm3333, %v3301, %v3309
        %v3351 = vsel %vm3333, %v3302, %v3310
        %v3352 = vsel %vm3333, %v3303, %v3311
        %v3353 = vsel %vm3333, %v3304, %v3312
        %v3354 = vsel %vm3333, %v3305, %v3313
        %v3355 = vsel %vm3333, %v3306, %v3314
        %v3356 = vsel %vm3333, %v3307, %v3315
        %v3357 = vsel %vm3333, %v3308, %v3316
        %v3358 = vsel %vm3333, %v3325, %v3301
        %v3359 = vsel %vm3333, %v3326, %v3302
        %v3360 = vsel %vm3333, %v3327, %v3303
        %v3361 = vsel %vm3333, %v3328, %v3304
        %v3362 = vsel %vm3333, %v3329, %v3305
        %v3363 = vsel %vm3333, %v3330, %v3306
        %v3364 = vsel %vm3333, %v3331, %v3307
        %v3365 = vsel %vm3333, %v3332, %v3308
        %v3366 = vmul.f32 %v3350, %v2687
        %v3367 = vmul.f32 %v3342, %v2688
        %v3368 = vmul.f32 %v3334, %v2689
        %v3369 = vmul.f32 %v3358, %v2690
        %v3370 = vmul.f32 %v3351, %v2691
        %v3371 = vmul.f32 %v3343, %v2692
        %v3372 = vmul.f32 %v3335, %v2693
        %v3373 = vmul.f32 %v3359, %v2694
        %v3374 = vmul.f32 %v3352, %v2695
        %v3375 = vmul.f32 %v3344, %v2696
        %v3376 = vmul.f32 %v3336, %v2697
        %v3377 = vmul.f32 %v3360, %v2698
        %v3378 = vmul.f32 %v3353, %v2699
        %v3379 = vmul.f32 %v3345, %v2700
        %v3380 = vmul.f32 %v3337, %v2701
        %v3381 = vmul.f32 %v3361, %v2702
        %v3382 = vmul.f32 %v3354, %v2687
        %v3383 = vmul.f32 %v3346, %v2688
        %v3384 = vmul.f32 %v3338, %v2689
        %v3385 = vmul.f32 %v3362, %v2690
        %v3386 = vmul.f32 %v3355, %v2691
        %v3387 = vmul.f32 %v3347, %v2692
        %v3388 = vmul.f32 %v3339, %v2693
        %v3389 = vmul.f32 %v3363, %v2694
        %v3390 = vmul.f32 %v3356, %v2695
        %v3391 = vmul.f32 %v3348, %v2696
        %v3392 = vmul.f32 %v3340, %v2697
        %v3393 = vmul.f32 %v3364, %v2698
        %v3394 = vmul.f32 %v3357, %v2699
        %v3395 = vmul.f32 %v3349, %v2700
        %v3396 = vmul.f32 %v3341, %v2701
        %v3397 = vmul.f32 %v3365, %v2702
        %v3398 = vadd.f32 %v3269, %v3366
        %v3399 = vadd.f32 %v3270, %v3367
        %v3400 = vadd.f32 %v3271, %v3368
        %v3401 = vadd.f32 %v3272, %v3369
        %v3402 = vadd.f32 %v3273, %v3370
        %v3403 = vadd.f32 %v3274, %v3371
        %v3404 = vadd.f32 %v3275, %v3372
        %v3405 = vadd.f32 %v3276, %v3373
        %v3406 = vadd.f32 %v3277, %v3374
        %v3407 = vadd.f32 %v3278, %v3375
        %v3408 = vadd.f32 %v3279, %v3376
        %v3409 = vadd.f32 %v3280, %v3377
        %v3410 = vadd.f32 %v3281, %v3378
        %v3411 = vadd.f32 %v3282, %v3379
        %v3412 = vadd.f32 %v3283, %v3380
        %v3413 = vadd.f32 %v3284, %v3381
        %v3414 = vadd.f32 %v3285, %v3382
        %v3415 = vadd.f32 %v3286, %v3383
        %v3416 = vadd.f32 %v3287, %v3384
        %v3417 = vadd.f32 %v3288, %v3385
        %v3418 = vadd.f32 %v3289, %v3386
        %v3419 = vadd.f32 %v3290, %v3387
        %v3420 = vadd.f32 %v3291, %v3388
        %v3421 = vadd.f32 %v3292, %v3389
        %v3422 = vadd.f32 %v3293, %v3390
        %v3423 = vadd.f32 %v3294, %v3391
        %v3424 = vadd.f32 %v3295, %v3392
        %v3425 = vadd.f32 %v3296, %v3393
        %v3426 = vadd.f32 %v3297, %v3394
        %v3427 = vadd.f32 %v3298, %v3395
        %v3428 = vadd.f32 %v3299, %v3396
        %v3429 = vadd.f32 %v3300, %v3397
        %v3430 = vmul.f32 %v2834, %v2703
        %v3431 = vmul.f32 %v2826, %v2704
        %v3432 = vmul.f32 %v2818, %v2705
        %v3433 = vmul.f32 %v2842, %v2706
        %v3434 = vmul.f32 %v2835, %v2707
        %v3435 = vmul.f32 %v2827, %v2708
        %v3436 = vmul.f32 %v2819, %v2709
        %v3437 = vmul.f32 %v2843, %v2710
        %v3438 = vmul.f32 %v2836, %v2711
        %v3439 = vmul.f32 %v2828, %v2712
        %v3440 = vmul.f32 %v2820, %v2713
        %v3441 = vmul.f32 %v2844, %v2714
        %v3442 = vmul.f32 %v2837, %v2715
        %v3443 = vmul.f32 %v2829, %v2716
        %v3444 = vmul.f32 %v2821, %v2717
        %v3445 = vmul.f32 %v2845, %v2718
        %v3446 = vmul.f32 %v2838, %v2703
        %v3447 = vmul.f32 %v2830, %v2704
        %v3448 = vmul.f32 %v2822, %v2705
        %v3449 = vmul.f32 %v2846, %v2706
        %v3450 = vmul.f32 %v2839, %v2707
        %v3451 = vmul.f32 %v2831, %v2708
        %v3452 = vmul.f32 %v2823, %v2709
        %v3453 = vmul.f32 %v2847, %v2710
        %v3454 = vmul.f32 %v2840, %v2711
        %v3455 = vmul.f32 %v2832, %v2712
        %v3456 = vmul.f32 %v2824, %v2713
        %v3457 = vmul.f32 %v2848, %v2714
        %v3458 = vmul.f32 %v2841, %v2715
        %v3459 = vmul.f32 %v2833, %v2716
        %v3460 = vmul.f32 %v2825, %v2717
        %v3461 = vmul.f32 %v2849, %v2718
        %v3462 = vadd.f32 %v3398, %v3430
        %v3463 = vadd.f32 %v3399, %v3431
        %v3464 = vadd.f32 %v3400, %v3432
        %v3465 = vadd.f32 %v3401, %v3433
        %v3466 = vadd.f32 %v3402, %v3434
        %v3467 = vadd.f32 %v3403, %v3435
        %v3468 = vadd.f32 %v3404, %v3436
        %v3469 = vadd.f32 %v3405, %v3437
        %v3470 = vadd.f32 %v3406, %v3438
        %v3471 = vadd.f32 %v3407, %v3439
        %v3472 = vadd.f32 %v3408, %v3440
        %v3473 = vadd.f32 %v3409, %v3441
        %v3474 = vadd.f32 %v3410, %v3442
        %v3475 = vadd.f32 %v3411, %v3443
        %v3476 = vadd.f32 %v3412, %v3444
        %v3477 = vadd.f32 %v3413, %v3445
        %v3478 = vadd.f32 %v3414, %v3446
        %v3479 = vadd.f32 %v3415, %v3447
        %v3480 = vadd.f32 %v3416, %v3448
        %v3481 = vadd.f32 %v3417, %v3449
        %v3482 = vadd.f32 %v3418, %v3450
        %v3483 = vadd.f32 %v3419, %v3451
        %v3484 = vadd.f32 %v3420, %v3452
        %v3485 = vadd.f32 %v3421, %v3453
        %v3486 = vadd.f32 %v3422, %v3454
        %v3487 = vadd.f32 %v3423, %v3455
        %v3488 = vadd.f32 %v3424, %v3456
        %v3489 = vadd.f32 %v3425, %v3457
        %v3490 = vadd.f32 %v3426, %v3458
        %v3491 = vadd.f32 %v3427, %v3459
        %v3492 = vadd.f32 %v3428, %v3460
        %v3493 = vadd.f32 %v3429, %v3461
        %v3494 = vmul.f32 %v2963, %v2719
        %v3495 = vmul.f32 %v2955, %v2720
        %v3496 = vmul.f32 %v2947, %v2721
        %v3497 = vmul.f32 %v2971, %v2722
        %v3498 = vmul.f32 %v2964, %v2723
        %v3499 = vmul.f32 %v2956, %v2724
        %v3500 = vmul.f32 %v2948, %v2725
        %v3501 = vmul.f32 %v2972, %v2726
        %v3502 = vmul.f32 %v2965, %v2727
        %v3503 = vmul.f32 %v2957, %v2728
        %v3504 = vmul.f32 %v2949, %v2729
        %v3505 = vmul.f32 %v2973, %v2730
        %v3506 = vmul.f32 %v2966, %v2731
        %v3507 = vmul.f32 %v2958, %v2732
        %v3508 = vmul.f32 %v2950, %v2733
        %v3509 = vmul.f32 %v2974, %v2734
        %v3510 = vmul.f32 %v2967, %v2719
        %v3511 = vmul.f32 %v2959, %v2720
        %v3512 = vmul.f32 %v2951, %v2721
        %v3513 = vmul.f32 %v2975, %v2722
        %v3514 = vmul.f32 %v2968, %v2723
        %v3515 = vmul.f32 %v2960, %v2724
        %v3516 = vmul.f32 %v2952, %v2725
        %v3517 = vmul.f32 %v2976, %v2726
        %v3518 = vmul.f32 %v2969, %v2727
        %v3519 = vmul.f32 %v2961, %v2728
        %v3520 = vmul.f32 %v2953, %v2729
        %v3521 = vmul.f32 %v2977, %v2730
        %v3522 = vmul.f32 %v2970, %v2731
        %v3523 = vmul.f32 %v2962, %v2732
        %v3524 = vmul.f32 %v2954, %v2733
        %v3525 = vmul.f32 %v2978, %v2734
        %v3526 = vadd.f32 %v3462, %v3494
        %v3527 = vadd.f32 %v3463, %v3495
        %v3528 = vadd.f32 %v3464, %v3496
        %v3529 = vadd.f32 %v3465, %v3497
        %v3530 = vadd.f32 %v3466, %v3498
        %v3531 = vadd.f32 %v3467, %v3499
        %v3532 = vadd.f32 %v3468, %v3500
        %v3533 = vadd.f32 %v3469, %v3501
        %v3534 = vadd.f32 %v3470, %v3502
        %v3535 = vadd.f32 %v3471, %v3503
        %v3536 = vadd.f32 %v3472, %v3504
        %v3537 = vadd.f32 %v3473, %v3505
        %v3538 = vadd.f32 %v3474, %v3506
        %v3539 = vadd.f32 %v3475, %v3507
        %v3540 = vadd.f32 %v3476, %v3508
        %v3541 = vadd.f32 %v3477, %v3509
        %v3542 = vadd.f32 %v3478, %v3510
        %v3543 = vadd.f32 %v3479, %v3511
        %v3544 = vadd.f32 %v3480, %v3512
        %v3545 = vadd.f32 %v3481, %v3513
        %v3546 = vadd.f32 %v3482, %v3514
        %v3547 = vadd.f32 %v3483, %v3515
        %v3548 = vadd.f32 %v3484, %v3516
        %v3549 = vadd.f32 %v3485, %v3517
        %v3550 = vadd.f32 %v3486, %v3518
        %v3551 = vadd.f32 %v3487, %v3519
        %v3552 = vadd.f32 %v3488, %v3520
        %v3553 = vadd.f32 %v3489, %v3521
        %v3554 = vadd.f32 %v3490, %v3522
        %v3555 = vadd.f32 %v3491, %v3523
        %v3556 = vadd.f32 %v3492, %v3524
        %v3557 = vadd.f32 %v3493, %v3525
        %v3558 = vmul.f32 %v3092, %v2735
        %v3559 = vmul.f32 %v3084, %v2736
        %v3560 = vmul.f32 %v3076, %v2737
        %v3561 = vmul.f32 %v3100, %v2738
        %v3562 = vmul.f32 %v3093, %v2739
        %v3563 = vmul.f32 %v3085, %v2740
        %v3564 = vmul.f32 %v3077, %v2741
        %v3565 = vmul.f32 %v3101, %v2742
        %v3566 = vmul.f32 %v3094, %v2743
        %v3567 = vmul.f32 %v3086, %v2744
        %v3568 = vmul.f32 %v3078, %v2745
        %v3569 = vmul.f32 %v3102, %v2746
        %v3570 = vmul.f32 %v3095, %v2747
        %v3571 = vmul.f32 %v3087, %v2748
        %v3572 = vmul.f32 %v3079, %v2749
        %v3573 = vmul.f32 %v3103, %v2750
        %v3574 = vmul.f32 %v3096, %v2735
        %v3575 = vmul.f32 %v3088, %v2736
        %v3576 = vmul.f32 %v3080, %v2737
        %v3577 = vmul.f32 %v3104, %v2738
        %v3578 = vmul.f32 %v3097, %v2739
        %v3579 = vmul.f32 %v3089, %v2740
        %v3580 = vmul.f32 %v3081, %v2741
        %v3581 = vmul.f32 %v3105, %v2742
        %v3582 = vmul.f32 %v3098, %v2743
        %v3583 = vmul.f32 %v3090, %v2744
        %v3584 = vmul.f32 %v3082, %v2745
        %v3585 = vmul.f32 %v3106, %v2746
        %v3586 = vmul.f32 %v3099, %v2747
        %v3587 = vmul.f32 %v3091, %v2748
        %v3588 = vmul.f32 %v3083, %v2749
        %v3589 = vmul.f32 %v3107, %v2750
        %v3590 = vadd.f32 %v3526, %v3558
        %v3591 = vadd.f32 %v3527, %v3559
        %v3592 = vadd.f32 %v3528, %v3560
        %v3593 = vadd.f32 %v3529, %v3561
        %v3594 = vadd.f32 %v3530, %v3562
        %v3595 = vadd.f32 %v3531, %v3563
        %v3596 = vadd.f32 %v3532, %v3564
        %v3597 = vadd.f32 %v3533, %v3565
        %v3598 = vadd.f32 %v3534, %v3566
        %v3599 = vadd.f32 %v3535, %v3567
        %v3600 = vadd.f32 %v3536, %v3568
        %v3601 = vadd.f32 %v3537, %v3569
        %v3602 = vadd.f32 %v3538, %v3570
        %v3603 = vadd.f32 %v3539, %v3571
        %v3604 = vadd.f32 %v3540, %v3572
        %v3605 = vadd.f32 %v3541, %v3573
        %v3606 = vadd.f32 %v3542, %v3574
        %v3607 = vadd.f32 %v3543, %v3575
        %v3608 = vadd.f32 %v3544, %v3576
        %v3609 = vadd.f32 %v3545, %v3577
        %v3610 = vadd.f32 %v3546, %v3578
        %v3611 = vadd.f32 %v3547, %v3579
        %v3612 = vadd.f32 %v3548, %v3580
        %v3613 = vadd.f32 %v3549, %v3581
        %v3614 = vadd.f32 %v3550, %v3582
        %v3615 = vadd.f32 %v3551, %v3583
        %v3616 = vadd.f32 %v3552, %v3584
        %v3617 = vadd.f32 %v3553, %v3585
        %v3618 = vadd.f32 %v3554, %v3586
        %v3619 = vadd.f32 %v3555, %v3587
        %v3620 = vadd.f32 %v3556, %v3588
        %v3621 = vadd.f32 %v3557, %v3589
        %v3622 = vadd.f32 %v2208, %v3590
        %v3623 = vadd.f32 %v2211, %v3591
        %v3624 = vadd.f32 %v2216, %v3592
        %v3625 = vadd.f32 %v2219, %v3593
        %v3626 = vadd.f32 %v2263, %v3594
        %v3627 = vadd.f32 %v2266, %v3595
        %v3628 = vadd.f32 %v2271, %v3596
        %v3629 = vadd.f32 %v2274, %v3597
        %v3630 = vadd.f32 %v2318, %v3598
        %v3631 = vadd.f32 %v2321, %v3599
        %v3632 = vadd.f32 %v2326, %v3600
        %v3633 = vadd.f32 %v2329, %v3601
        %v3634 = vadd.f32 %v2373, %v3602
        %v3635 = vadd.f32 %v2376, %v3603
        %v3636 = vadd.f32 %v2381, %v3604
        %v3637 = vadd.f32 %v2384, %v3605
        %v3638 = vadd.f32 %v2428, %v3606
        %v3639 = vadd.f32 %v2431, %v3607
        %v3640 = vadd.f32 %v2436, %v3608
        %v3641 = vadd.f32 %v2439, %v3609
        %v3642 = vadd.f32 %v2483, %v3610
        %v3643 = vadd.f32 %v2486, %v3611
        %v3644 = vadd.f32 %v2491, %v3612
        %v3645 = vadd.f32 %v2494, %v3613
        %v3646 = vadd.f32 %v2538, %v3614
        %v3647 = vadd.f32 %v2541, %v3615
        %v3648 = vadd.f32 %v2546, %v3616
        %v3649 = vadd.f32 %v2549, %v3617
        %v3650 = vadd.f32 %v2593, %v3618
        %v3651 = vadd.f32 %v2596, %v3619
        %v3652 = vadd.f32 %v2601, %v3620
        %v3653 = vadd.f32 %v2604, %v3621
        %v3654 = vld [vmem:[%s7] sm:$0x3]
        %v3655 = vld [vmem:[%s7 + $0x2] sm:$0x3]
        %v3656 = vld [vmem:[%s7 + $0x4] sm:$0x3]
        %v3657 = vld [vmem:[%s7 + $0x6] sm:$0x3]
        %v3658 = vpack.c.bf16 %v3623, %v3622
        %v3659 = vpack.c.bf16 %v3625, %v3624
        %v3660 = vpack.c.bf16 %v3639, %v3638
        %v3661 = vpack.c.bf16 %v3641, %v3640
        %v3662 = vpack.c.bf16 %v3627, %v3626
        %v3663 = vpack.c.bf16 %v3629, %v3628
        %v3664 = vpack.c.bf16 %v3643, %v3642
        %v3665 = vpack.c.bf16 %v3645, %v3644
        %v3667 = vsel %vm1065, %v3662, 0
        %v3670 = vsel %vm1065, %v3663, 0
        %v3673 = vsel %vm1065, %v3664, 0
        %v3676 = vsel %vm1065, %v3665, 0
        %vm3678 = vcmask 1041408
        %v3680 = vsel %vm3678, %v3655, 0
        %3682 = vmatprep.subr.bf16.mxu0 0
        %3683 = vmatpush1.bf16.msra.mxu0 0
        %3684 = vmatprep.subr.bf16.mxu0 0
        %3685 = vmatpush1.bf16.msra.mxu0 0
        %3686 = vmatprep.subr.bf16.mxu0 0
        %3687 = vmatpush1.bf16.msra.mxu0 0
        %3688 = vmatprep.subr.bf16.mxu0 0
        %3689 = vmatpush1.bf16.msra.mxu0 0
        %3690 = vmatprep.subr.bf16.mxu0 0
        %3691 = vmatpush1.bf16.msra.mxu0 0
        %3692 = vmatprep.subr.bf16.mxu0 0
        %3693 = vmatpush1.bf16.msra.mxu0 0
        %3694 = vmatprep.subr.bf16.mxu0 0
        %3695 = vmatpush1.bf16.msra.mxu0 0
        %3696 = vmatprep.subr.bf16.mxu0 0
        %3697 = vmatpush1.bf16.msra.mxu0 %v3680
        %3698 = vmatprep.subr.bf16.mxu0 0
        %3699 = vmatpush2.bf16.msra.mxu0 0
        %3700 = vmatprep.subr.bf16.mxu0 0
        %3701 = vmatpush2.bf16.msra.mxu0 0
        %3702 = vmatprep.subr.bf16.mxu0 0
        %3703 = vmatpush2.bf16.msra.mxu0 0
        %3704 = vmatprep.subr.bf16.mxu0 0
        %3705 = vmatpush2.bf16.msra.mxu0 0
        %3706 = vmatprep.subr.bf16.mxu0 0
        %3707 = vmatpush2.bf16.msra.mxu0 0
        %3708 = vmatprep.subr.bf16.mxu0 0
        %3709 = vmatpush2.bf16.msra.mxu0 0
        %3710 = vmatprep.subr.bf16.mxu0 0
        %3711 = vmatpush2.bf16.msra.mxu0 0
        %3712 = vmatprep.subr.bf16.mxu0 0
        %3713 = vmatpush2.bf16.msra.mxu0 0
        %3714 = vmatprep.mubr.bf16.mxu0 0
        %3715 = vmatmul.mubr.bf16.gmra.mxu0 %v3667
        %v3716 = vpop.f32.mrf.mxu0
        %v3717 = vadd.f32 0.0, %v3716
        %v3718 = vpop.f32.mrf.mxu0
        %v3719 = vpop.f32.mrf.mxu0
        %v3720 = vadd.f32 0.0, %v3719
        %v3721 = vpop.f32.mrf.mxu0
        %3722 = vmatprep.mubr.bf16.mxu0 0
        %3723 = vmatmul.mubr.bf16.gmra.mxu0 %v3670
        %v3724 = vpop.f32.mrf.mxu0
        %v3725 = vadd.f32 0.0, %v3724
        %v3726 = vpop.f32.mrf.mxu0
        %v3727 = vpop.f32.mrf.mxu0
        %v3728 = vadd.f32 0.0, %v3727
        %v3729 = vpop.f32.mrf.mxu0
        %3730 = vmatprep.mubr.bf16.mxu0 0
        %3731 = vmatmul.mubr.bf16.gmra.mxu0 %v3673
        %v3732 = vpop.f32.mrf.mxu0
        %v3733 = vadd.f32 0.0, %v3732
        %v3734 = vpop.f32.mrf.mxu0
        %v3735 = vpop.f32.mrf.mxu0
        %v3736 = vadd.f32 0.0, %v3735
        %v3737 = vpop.f32.mrf.mxu0
        %3738 = vmatprep.mubr.bf16.mxu0 0
        %3739 = vmatmul.mubr.bf16.gmra.mxu0 %v3676
        %v3740 = vpop.f32.mrf.mxu0
        %v3741 = vadd.f32 0.0, %v3740
        %v3742 = vpop.f32.mrf.mxu0
        %v3743 = vpop.f32.mrf.mxu0
        %v3744 = vadd.f32 0.0, %v3743
        %v3745 = vpop.f32.mrf.mxu0
        %3746 = vdwg.mxu0
        %v3748 = vsel %vm1065, %v3658, 0
        %v3751 = vsel %vm1065, %v3659, 0
        %v3754 = vsel %vm1065, %v3660, 0
        %v3757 = vsel %vm1065, %v3661, 0
        %v3760 = vsel %vm3678, %v3654, 0
        %3762 = vmatprep.subr.bf16.mxu0 0
        %3763 = vmatpush1.bf16.msra.mxu0 0
        %3764 = vmatprep.subr.bf16.mxu0 0
        %3765 = vmatpush1.bf16.msra.mxu0 0
        %3766 = vmatprep.subr.bf16.mxu0 0
        %3767 = vmatpush1.bf16.msra.mxu0 0
        %3768 = vmatprep.subr.bf16.mxu0 0
        %3769 = vmatpush1.bf16.msra.mxu0 0
        %3770 = vmatprep.subr.bf16.mxu0 0
        %3771 = vmatpush1.bf16.msra.mxu0 0
        %3772 = vmatprep.subr.bf16.mxu0 0
        %3773 = vmatpush1.bf16.msra.mxu0 0
        %3774 = vmatprep.subr.bf16.mxu0 0
        %3775 = vmatpush1.bf16.msra.mxu0 0
        %3776 = vmatprep.subr.bf16.mxu0 0
        %3777 = vmatpush1.bf16.msra.mxu0 %v3760
        %3778 = vmatprep.subr.bf16.mxu0 0
        %3779 = vmatpush2.bf16.msra.mxu0 0
        %3780 = vmatprep.subr.bf16.mxu0 0
        %3781 = vmatpush2.bf16.msra.mxu0 0
        %3782 = vmatprep.subr.bf16.mxu0 0
        %3783 = vmatpush2.bf16.msra.mxu0 0
        %3784 = vmatprep.subr.bf16.mxu0 0
        %3785 = vmatpush2.bf16.msra.mxu0 0
        %3786 = vmatprep.subr.bf16.mxu0 0
        %3787 = vmatpush2.bf16.msra.mxu0 0
        %3788 = vmatprep.subr.bf16.mxu0 0
        %3789 = vmatpush2.bf16.msra.mxu0 0
        %3790 = vmatprep.subr.bf16.mxu0 0
        %3791 = vmatpush2.bf16.msra.mxu0 0
        %3792 = vmatprep.subr.bf16.mxu0 0
        %3793 = vmatpush2.bf16.msra.mxu0 0
        %3794 = vmatprep.mubr.bf16.mxu0 0
        %3795 = vmatmul.mubr.bf16.gmra.mxu0 %v3748
        %v3796 = vpop.f32.mrf.mxu0
        %v3797 = vadd.f32 %v3717, %v3796
        %v3798 = vpop.f32.mrf.mxu0
        %v3799 = vpop.f32.mrf.mxu0
        %v3800 = vadd.f32 %v3720, %v3799
        %v3801 = vpop.f32.mrf.mxu0
        %3802 = vmatprep.mubr.bf16.mxu0 0
        %3803 = vmatmul.mubr.bf16.gmra.mxu0 %v3751
        %v3804 = vpop.f32.mrf.mxu0
        %v3805 = vadd.f32 %v3725, %v3804
        %v3806 = vpop.f32.mrf.mxu0
        %v3807 = vpop.f32.mrf.mxu0
        %v3808 = vadd.f32 %v3728, %v3807
        %v3809 = vpop.f32.mrf.mxu0
        %3810 = vmatprep.mubr.bf16.mxu0 0
        %3811 = vmatmul.mubr.bf16.gmra.mxu0 %v3754
        %v3812 = vpop.f32.mrf.mxu0
        %v3813 = vadd.f32 %v3733, %v3812
        %v3814 = vpop.f32.mrf.mxu0
        %v3815 = vpop.f32.mrf.mxu0
        %v3816 = vadd.f32 %v3736, %v3815
        %v3817 = vpop.f32.mrf.mxu0
        %3818 = vmatprep.mubr.bf16.mxu0 0
        %3819 = vmatmul.mubr.bf16.gmra.mxu0 %v3757
        %v3820 = vpop.f32.mrf.mxu0
        %v3821 = vadd.f32 %v3741, %v3820
        %v3822 = vpop.f32.mrf.mxu0
        %v3823 = vpop.f32.mrf.mxu0
        %v3824 = vadd.f32 %v3744, %v3823
        %v3825 = vpop.f32.mrf.mxu0
        %3826 = vdwg.mxu0
        %v3827 = vpack.c.bf16 %v3631, %v3630
        %v3828 = vpack.c.bf16 %v3633, %v3632
        %v3829 = vpack.c.bf16 %v3647, %v3646
        %v3830 = vpack.c.bf16 %v3649, %v3648
        %v3832 = vsel %vm1065, %v3827, 0
        %v3835 = vsel %vm1065, %v3828, 0
        %v3838 = vsel %vm1065, %v3829, 0
        %v3841 = vsel %vm1065, %v3830, 0
        %v3844 = vsel %vm3678, %v3656, 0
        %3846 = vmatprep.subr.bf16.mxu0 0
        %3847 = vmatpush1.bf16.msra.mxu0 0
        %3848 = vmatprep.subr.bf16.mxu0 0
        %3849 = vmatpush1.bf16.msra.mxu0 0
        %3850 = vmatprep.subr.bf16.mxu0 0
        %3851 = vmatpush1.bf16.msra.mxu0 0
        %3852 = vmatprep.subr.bf16.mxu0 0
        %3853 = vmatpush1.bf16.msra.mxu0 0
        %3854 = vmatprep.subr.bf16.mxu0 0
        %3855 = vmatpush1.bf16.msra.mxu0 0
        %3856 = vmatprep.subr.bf16.mxu0 0
        %3857 = vmatpush1.bf16.msra.mxu0 0
        %3858 = vmatprep.subr.bf16.mxu0 0
        %3859 = vmatpush1.bf16.msra.mxu0 0
        %3860 = vmatprep.subr.bf16.mxu0 0
        %3861 = vmatpush1.bf16.msra.mxu0 %v3844
        %3862 = vmatprep.subr.bf16.mxu0 0
        %3863 = vmatpush2.bf16.msra.mxu0 0
        %3864 = vmatprep.subr.bf16.mxu0 0
        %3865 = vmatpush2.bf16.msra.mxu0 0
        %3866 = vmatprep.subr.bf16.mxu0 0
        %3867 = vmatpush2.bf16.msra.mxu0 0
        %3868 = vmatprep.subr.bf16.mxu0 0
        %3869 = vmatpush2.bf16.msra.mxu0 0
        %3870 = vmatprep.subr.bf16.mxu0 0
        %3871 = vmatpush2.bf16.msra.mxu0 0
        %3872 = vmatprep.subr.bf16.mxu0 0
        %3873 = vmatpush2.bf16.msra.mxu0 0
        %3874 = vmatprep.subr.bf16.mxu0 0
        %3875 = vmatpush2.bf16.msra.mxu0 0
        %3876 = vmatprep.subr.bf16.mxu0 0
        %3877 = vmatpush2.bf16.msra.mxu0 0
        %3878 = vmatprep.mubr.bf16.mxu0 0
        %3879 = vmatmul.mubr.bf16.gmra.mxu0 %v3832
        %v3880 = vpop.f32.mrf.mxu0
        %v3881 = vadd.f32 0.0, %v3880
        %v3882 = vpop.f32.mrf.mxu0
        %v3883 = vpop.f32.mrf.mxu0
        %v3884 = vadd.f32 0.0, %v3883
        %v3885 = vpop.f32.mrf.mxu0
        %3886 = vmatprep.mubr.bf16.mxu0 0
        %3887 = vmatmul.mubr.bf16.gmra.mxu0 %v3835
        %v3888 = vpop.f32.mrf.mxu0
        %v3889 = vadd.f32 0.0, %v3888
        %v3890 = vpop.f32.mrf.mxu0
        %v3891 = vpop.f32.mrf.mxu0
        %v3892 = vadd.f32 0.0, %v3891
        %v3893 = vpop.f32.mrf.mxu0
        %3894 = vmatprep.mubr.bf16.mxu0 0
        %3895 = vmatmul.mubr.bf16.gmra.mxu0 %v3838
        %v3896 = vpop.f32.mrf.mxu0
        %v3897 = vadd.f32 0.0, %v3896
        %v3898 = vpop.f32.mrf.mxu0
        %v3899 = vpop.f32.mrf.mxu0
        %v3900 = vadd.f32 0.0, %v3899
        %v3901 = vpop.f32.mrf.mxu0
        %3902 = vmatprep.mubr.bf16.mxu0 0
        %3903 = vmatmul.mubr.bf16.gmra.mxu0 %v3841
        %v3904 = vpop.f32.mrf.mxu0
        %v3905 = vadd.f32 0.0, %v3904
        %v3906 = vpop.f32.mrf.mxu0
        %v3907 = vpop.f32.mrf.mxu0
        %v3908 = vadd.f32 0.0, %v3907
        %v3909 = vpop.f32.mrf.mxu0
        %3910 = vdwg.mxu0
        %v3911 = vadd.f32 %v3797, %v3881
        %v3912 = vadd.f32 %v3800, %v3884
        %v3913 = vadd.f32 %v3805, %v3889
        %v3914 = vadd.f32 %v3808, %v3892
        %v3915 = vadd.f32 %v3813, %v3897
        %v3916 = vadd.f32 %v3816, %v3900
        %v3917 = vadd.f32 %v3821, %v3905
        %v3918 = vadd.f32 %v3824, %v3908
        %v3919 = vpack.c.bf16 %v3635, %v3634
        %v3920 = vpack.c.bf16 %v3637, %v3636
        %v3921 = vpack.c.bf16 %v3651, %v3650
        %v3922 = vpack.c.bf16 %v3653, %v3652
        %v3924 = vsel %vm1065, %v3919, 0
        %v3927 = vsel %vm1065, %v3920, 0
        %v3930 = vsel %vm1065, %v3921, 0
        %v3933 = vsel %vm1065, %v3922, 0
        %v3936 = vsel %vm3678, %v3657, 0
        %3938 = vmatprep.subr.bf16.mxu0 0
        %3939 = vmatpush1.bf16.msra.mxu0 0
        %3940 = vmatprep.subr.bf16.mxu0 0
        %3941 = vmatpush1.bf16.msra.mxu0 0
        %3942 = vmatprep.subr.bf16.mxu0 0
        %3943 = vmatpush1.bf16.msra.mxu0 0
        %3944 = vmatprep.subr.bf16.mxu0 0
        %3945 = vmatpush1.bf16.msra.mxu0 0
        %3946 = vmatprep.subr.bf16.mxu0 0
        %3947 = vmatpush1.bf16.msra.mxu0 0
        %3948 = vmatprep.subr.bf16.mxu0 0
        %3949 = vmatpush1.bf16.msra.mxu0 0
        %3950 = vmatprep.subr.bf16.mxu0 0
        %3951 = vmatpush1.bf16.msra.mxu0 0
        %3952 = vmatprep.subr.bf16.mxu0 0
        %3953 = vmatpush1.bf16.msra.mxu0 %v3936
        %3954 = vmatprep.subr.bf16.mxu0 0
        %3955 = vmatpush2.bf16.msra.mxu0 0
        %3956 = vmatprep.subr.bf16.mxu0 0
        %3957 = vmatpush2.bf16.msra.mxu0 0
        %3958 = vmatprep.subr.bf16.mxu0 0
        %3959 = vmatpush2.bf16.msra.mxu0 0
        %3960 = vmatprep.subr.bf16.mxu0 0
        %3961 = vmatpush2.bf16.msra.mxu0 0
        %3962 = vmatprep.subr.bf16.mxu0 0
        %3963 = vmatpush2.bf16.msra.mxu0 0
        %3964 = vmatprep.subr.bf16.mxu0 0
        %3965 = vmatpush2.bf16.msra.mxu0 0
        %3966 = vmatprep.subr.bf16.mxu0 0
        %3967 = vmatpush2.bf16.msra.mxu0 0
        %3968 = vmatprep.subr.bf16.mxu0 0
        %3969 = vmatpush2.bf16.msra.mxu0 0
        %3970 = vmatprep.mubr.bf16.mxu0 0
        %3971 = vmatmul.mubr.bf16.gmra.mxu0 %v3924
        %v3972 = vpop.f32.mrf.mxu0
        %v3973 = vadd.f32 0.0, %v3972
        %v3974 = vpop.f32.mrf.mxu0
        %v3975 = vpop.f32.mrf.mxu0
        %v3976 = vadd.f32 0.0, %v3975
        %v3977 = vpop.f32.mrf.mxu0
        %3978 = vmatprep.mubr.bf16.mxu0 0
        %3979 = vmatmul.mubr.bf16.gmra.mxu0 %v3927
        %v3980 = vpop.f32.mrf.mxu0
        %v3981 = vadd.f32 0.0, %v3980
        %v3982 = vpop.f32.mrf.mxu0
        %v3983 = vpop.f32.mrf.mxu0
        %v3984 = vadd.f32 0.0, %v3983
        %v3985 = vpop.f32.mrf.mxu0
        %3986 = vmatprep.mubr.bf16.mxu0 0
        %3987 = vmatmul.mubr.bf16.gmra.mxu0 %v3930
        %v3988 = vpop.f32.mrf.mxu0
        %v3989 = vadd.f32 0.0, %v3988
        %v3990 = vpop.f32.mrf.mxu0
        %v3991 = vpop.f32.mrf.mxu0
        %v3992 = vadd.f32 0.0, %v3991
        %v3993 = vpop.f32.mrf.mxu0
        %3994 = vmatprep.mubr.bf16.mxu0 0
        %3995 = vmatmul.mubr.bf16.gmra.mxu0 %v3933
        %v3996 = vpop.f32.mrf.mxu0
        %v3997 = vadd.f32 0.0, %v3996
        %v3998 = vpop.f32.mrf.mxu0
        %v3999 = vpop.f32.mrf.mxu0
        %v4000 = vadd.f32 0.0, %v3999
        %v4001 = vpop.f32.mrf.mxu0
        %4002 = vdwg.mxu0
        %v4003 = vadd.f32 %v3911, %v3973
        %v4004 = vadd.f32 %v3912, %v3976
        %v4005 = vadd.f32 %v3913, %v3981
        %v4006 = vadd.f32 %v3914, %v3984
        %v4007 = vadd.f32 %v3915, %v3989
        %v4008 = vadd.f32 %v3916, %v3992
        %v4009 = vadd.f32 %v3917, %v3997
        %v4010 = vadd.f32 %v3918, %v4000
        %v4011 = vld [vmem:[%s8] sm:$0x1]
        %v4013 = vlaneseq
        %v4014 = vshrl.u32 %v4013, 7
        %v4015 = vsub.s32 0, %v4014
        %v4016 = vrot.slane %v4011, %v4015
        %v4018 = vadd.f32 %v4003, %v4016
        %v4019 = vadd.f32 %v4004, %v4016
        %v4020 = vadd.f32 %v4005, %v4016
        %v4021 = vadd.f32 %v4006, %v4016
        %v4022 = vadd.f32 %v4007, %v4016
        %v4023 = vadd.f32 %v4008, %v4016
        %v4024 = vadd.f32 %v4009, %v4016
        %v4025 = vadd.f32 %v4010, %v4016
        %vm4026 = vcmask 130048
        %4027 = vst.msk [vmem:[%s918] sm:$0xff] %vm4026, %v4018
        %4028 = vst.msk [vmem:[%s918 + $0x8] sm:$0xff] %vm4026, %v4019
        %4029 = vst.msk [vmem:[%s918 + $0x10] sm:$0xff] %vm4026, %v4020
        %4030 = vst.msk [vmem:[%s918 + $0x18] sm:$0xff] %vm4026, %v4021
        %4031 = vst.msk [vmem:[%s918 + $0x20] sm:$0xff] %vm4026, %v4022
        %4032 = vst.msk [vmem:[%s918 + $0x28] sm:$0xff] %vm4026, %v4023
        %4033 = vst.msk [vmem:[%s918 + $0x30] sm:$0xff] %vm4026, %v4024
        %4034 = vst.msk [vmem:[%s918 + $0x38] sm:$0xff] %vm4026, %v4025
        %s4035 = sand.u32 %s263, 1
        %s4036 = sand.u32 %s263, 1
        %s4037 = smul.addr %s4036, 64
        %s4038 = scalar_lea.vmem [#allocation6], %s4037
        // Predicated region
        $region177: #{tpu_custom_call.1} parent=163 // pred_check
          %p4039 = pneg %p273
        $region178: #{tpu_custom_call.1} parent=163 // pred_check_branch
          %4041 = sbr.rel (%p4039) target = $region180
        $region179: #{tpu_custom_call.1} parent=163 // pred_region
          %s4042 = smul.u32 2, %s26
          %s4043 = smul.addr %s25, 4
          %s4044 = smul.addr %s4042, 8
          %s4045 = sadd.s32 %s4043, %s4044
          %s4046 = smul.addr %s4045, 8
          %s4047 = scalar_lea.vmem %s9, %s4046
          // Predicated region
          $region181: #{tpu_custom_call.1} parent=179 // pred_check
            _
          $region182: #{tpu_custom_call.1} parent=179 // pred_check_branch
            %4049 = sbr.rel (0) target = $region184
          $region183: #{tpu_custom_call.1} parent=179 // pred_region
            // Predicated region
            $region185: #{tpu_custom_call.1} parent=183 // pred_check
              _
            $region186: #{tpu_custom_call.1} parent=183 // pred_check_branch
              %4051 = sbr.rel (0) target = $region188
            $region187: #{tpu_custom_call.1} parent=183 // pred_region
              // Predicated region
              $region200: #{tpu_custom_call.1} parent=187 // pred_check
                _
              $region201: #{tpu_custom_call.1} parent=187 // pred_check_branch
                %4081 = sbr.rel (0) target = $region203
              $region202: #{tpu_custom_call.1} parent=187 // pred_region
                loop: start=0, step=1, limit=1
                $region204: #{tpu_custom_call.1} parent=202 // loop_pre_header
                  _
                $region205: #{tpu_custom_call.1} parent=202 // loop_header
                  %s4083 = sphi 0, %s4087
                  %p4084 = scmp.ge.s32.totalorder %s4083, 1
                  %s4088 = sphi %s4038, %s4038
                  %s4089 = sphi %s4047, %s4047
                $region206: #{tpu_custom_call.1} parent=202 // loop_header_branch
                  %4086 = sbr.rel (%p4084) target = $region210
                $region207: #{tpu_custom_call.1} parent=202 // loop_body
                  %v4090 = vld [vmem:[%s4088] sm:$0xff]
                  %4091 = vst [vmem:[%s4089] sm:$0xff] %v4090
                  %v4092 = vld [vmem:[%s4088 + $0x8] sm:$0xff]
                  %4093 = vst [vmem:[%s4089 + $0x8] sm:$0xff] %v4092
                  %v4094 = vld [vmem:[%s4088 + $0x10] sm:$0xff]
                  %4095 = vst [vmem:[%s4089 + $0x10] sm:$0xff] %v4094
                  %v4096 = vld [vmem:[%s4088 + $0x18] sm:$0xff]
                  %4097 = vst [vmem:[%s4089 + $0x18] sm:$0xff] %v4096
                  %v4098 = vld [vmem:[%s4088 + $0x20] sm:$0xff]
                  %4099 = vst [vmem:[%s4089 + $0x40] sm:$0xff] %v4098
                  %v4100 = vld [vmem:[%s4088 + $0x28] sm:$0xff]
                  %4101 = vst [vmem:[%s4089 + $0x48] sm:$0xff] %v4100
                  %v4102 = vld [vmem:[%s4088 + $0x30] sm:$0xff]
                  %4103 = vst [vmem:[%s4089 + $0x50] sm:$0xff] %v4102
                  %v4104 = vld [vmem:[%s4088 + $0x38] sm:$0xff]
                  %4105 = vst [vmem:[%s4089 + $0x58] sm:$0xff] %v4104
                $region208: #{tpu_custom_call.1} parent=202 // loop_footer
                  %s4087 = sadd.s32 1, %s4083
                $region209: #{tpu_custom_call.1} parent=202 // loop_footer_branch
                  %4082 = sbr.rel target = $region205
                $region210: #{tpu_custom_call.1} parent=202 // loop_exit
                  _
              $region203: #{tpu_custom_call.1} parent=187 // pred_fallthru
                _
              // Predicated region
              $region211: #{tpu_custom_call.1} parent=187 // pred_check
                _
              $region212: #{tpu_custom_call.1} parent=187 // pred_check_branch
                %4107 = sbr.rel target = $region214
              $region213: #{tpu_custom_call.1} parent=187 // pred_region
                _
              $region214: #{tpu_custom_call.1} parent=187 // pred_fallthru
                _
            $region188: #{tpu_custom_call.1} parent=183 // pred_fallthru
              _
            // Predicated region
            $region189: #{tpu_custom_call.1} parent=183 // pred_check
              _
            $region190: #{tpu_custom_call.1} parent=183 // pred_check_branch
              %4053 = sbr.rel target = $region192
            $region191: #{tpu_custom_call.1} parent=183 // pred_region
              %s4055 = ssub.s32 256, 1
              loop: start=0, step=1, limit=1
              $region193: #{tpu_custom_call.1} parent=191 // loop_pre_header
                _
              $region194: #{tpu_custom_call.1} parent=191 // loop_header
                %s4057 = sphi 0, %s4061
                %p4058 = scmp.ge.s32.totalorder %s4057, 1
                %s4062 = sphi %s4038, %s4038
                %s4063 = sphi %s4047, %s4047
              $region195: #{tpu_custom_call.1} parent=191 // loop_header_branch
                %4060 = sbr.rel (%p4058) target = $region199
              $region196: #{tpu_custom_call.1} parent=191 // loop_body
                %v4064 = vld [vmem:[%s4062] sm:%s4055]
                %4065 = vst [vmem:[%s4063] sm:%s4055] %v4064
                %v4066 = vld [vmem:[%s4062 + $0x8] sm:%s4055]
                %4067 = vst [vmem:[%s4063 + $0x8] sm:%s4055] %v4066
                %v4068 = vld [vmem:[%s4062 + $0x10] sm:%s4055]
                %4069 = vst [vmem:[%s4063 + $0x10] sm:%s4055] %v4068
                %v4070 = vld [vmem:[%s4062 + $0x18] sm:%s4055]
                %4071 = vst [vmem:[%s4063 + $0x18] sm:%s4055] %v4070
                %v4072 = vld [vmem:[%s4062 + $0x20] sm:%s4055]
                %4073 = vst [vmem:[%s4063 + $0x40] sm:%s4055] %v4072
                %v4074 = vld [vmem:[%s4062 + $0x28] sm:%s4055]
                %4075 = vst [vmem:[%s4063 + $0x48] sm:%s4055] %v4074
                %v4076 = vld [vmem:[%s4062 + $0x30] sm:%s4055]
                %4077 = vst [vmem:[%s4063 + $0x50] sm:%s4055] %v4076
                %v4078 = vld [vmem:[%s4062 + $0x38] sm:%s4055]
                %4079 = vst [vmem:[%s4063 + $0x58] sm:%s4055] %v4078
              $region197: #{tpu_custom_call.1} parent=191 // loop_footer
                %s4061 = sadd.s32 1, %s4057
              $region198: #{tpu_custom_call.1} parent=191 // loop_footer_branch
                %4056 = sbr.rel target = $region194
              $region199: #{tpu_custom_call.1} parent=191 // loop_exit
                _
            $region192: #{tpu_custom_call.1} parent=183 // pred_fallthru
              _
          $region184: #{tpu_custom_call.1} parent=179 // pred_fallthru
            _
          %4108 = vnop
        $region180: #{tpu_custom_call.1} parent=163 // pred_fallthru
          _
      $region164: #{tpu_custom_call.1} parent=5 // pred_fallthru
        _
      %p4109 = scmp.le.s32.totalorder 2, %s16
      // Predicated region
      $region215: #{tpu_custom_call.1} parent=5 // pred_check
        %p4110 = pneg %p4109
      $region216: #{tpu_custom_call.1} parent=5 // pred_check_branch
        %4112 = sbr.rel (%p4110) target = $region218
      $region217: #{tpu_custom_call.1} parent=5 // pred_region
        %s4113 = ssub.s32 %s16, 2
        // Predicated region
        $region219: #{tpu_custom_call.1} parent=217 // pred_check
          %p4114 = pneg %p279
        $region220: #{tpu_custom_call.1} parent=217 // pred_check_branch
          %4116 = sbr.rel (%p4114) target = $region222
        $region221: #{tpu_custom_call.1} parent=217 // pred_region
          %s4117 = sand.u32 %s264, 1
          %s4118 = sand.u32 %s264, 1
          %s4119 = smul.addr %s4118, 64
          %s4120 = scalar_lea.vmem [#allocation6], %s4119
        $region222: #{tpu_custom_call.1} parent=217 // pred_fallthru
          _
      $region218: #{tpu_custom_call.1} parent=5 // pred_fallthru
        _
    $region6: #{tpu_custom_call.1} parent=1 // loop_footer
      %s20 = sadd.s32 1, %s16
    $region7: #{tpu_custom_call.1} parent=1 // loop_footer_branch
      %15 = sbr.rel target = $region3
    $region8: #{tpu_custom_call.1} parent=1 // loop_exit
      _

</llo_original>
